<compile_context>
chip_gen: v7x
topology: tpu7x:2x2x1
jax: 0.10.0
libtpu: 0.0.40
codegen_flags: <defaults>
</compile_context>

<pallas_src>
import functools

import jax
import jax.numpy as jnp
from jax import lax
from jax.experimental import pallas as pl
from jax.experimental.pallas import tpu as pltpu


def _round_up(a, m):
    return (a + m - 1) // m * m


def _topk_attn_kernel(x_ref, w_ref, b_ref, mask_ref, idx_ref, wgt_ref, *,
                      scale, top_k, n_obj, proj_dim, tb):
    # x_ref:    (D, N*TB)   activations; lanes = (object major, slab minor)
    # w_ref:    (2P, D)     fused [Wq; Wk]
    # b_ref:    (2P, 1)     fused bias
    # mask_ref: (N, TB)     int32 padding mask (1 = valid)
    # idx_ref:  (k, TB)     flat pair index output
    # wgt_ref:  (k, TB)     softmax weight output
    N, P, TB = n_obj, proj_dim, tb
    n_pairs = N * N
    NEG = -1000000000.0

    # ---- fused Q/K projection: one MXU push, one bias broadcast ------------
    proj = jnp.dot(w_ref[...], x_ref[...],
                   preferred_element_type=jnp.float32) + b_ref[...]   # (2P, N*TB)
    q = proj[:P, :]                                   # (P, N*TB)
    k = proj[P:, :]                                   # (P, N*TB)

    # Re-label K into (N, P, TB): lane-tile-aligned slices stacked on a new
    # leading axis (vreg re-indexing only; no XLU traffic).
    k3d = jnp.stack([k[:, j * TB:(j + 1) * TB] for j in range(N)], axis=0)

    mask = mask_ref[...] > 0                          # (N, TB) bool

    # ---- scores: one full (N, TB) block per query ---------------------------
    s_blocks = []
    for i in range(N):
        q_i = q[:, i * TB:(i + 1) * TB]                          # (P, TB) view
        s_i = jnp.sum(k3d * q_i[None, :, :], axis=1) * scale     # (N, TB)
        valid = mask[i:i + 1, :] & mask                          # (N, TB)
        s_blocks.append(jnp.where(valid, s_i, NEG))

    base_ids = lax.broadcasted_iota(jnp.int32, (N, TB), 0)
    id_blocks = [base_ids + g * N for g in range(N)]             # flat pair ids

    k_rows = lax.broadcasted_iota(jnp.int32, (top_k, TB), 0)
    vals = jnp.zeros((top_k, TB), jnp.float32)
    ids = jnp.zeros((top_k, TB), jnp.int32)

    # ---- iterative top-k ----------------------------------------------------
    for t in range(top_k):
        # VPU tree-fold of (value, index) across the N blocks.  The explicit
        # lowest-index tie-break keeps exact parity with lax.top_k / torch.topk
        # regardless of fold order.
        fv, fi = list(s_blocks), list(id_blocks)
        while len(fv) > 1:
            nv, ni = [], []
            for a in range(0, len(fv) - 1, 2):
                va, vb = fv[a], fv[a + 1]
                ia, ib = fi[a], fi[a + 1]
                take = (va > vb) | ((va == vb) & (ia < ib))
                nv.append(jnp.where(take, va, vb))
                ni.append(jnp.where(take, ia, ib))
            if len(fv) % 2 == 1:
                nv.append(fv[-1])
                ni.append(fi[-1])
            fv, fi = nv, ni
        v1, i1 = fv[0], fi[0]                                    # (N, TB)

        # Only two small 8-sublane XLU reduces finish the argmax.
        m = jnp.max(v1, axis=0, keepdims=True)                   # (1, TB)
        sel = jnp.min(jnp.where(v1 == m, i1, n_pairs),
                      axis=0, keepdims=True)                     # (1, TB)

        vals = jnp.where(k_rows == t, m, vals)
        ids = jnp.where(k_rows == t, sel, ids)

        # Knock the selected entry out of its block (shared sel broadcast).
        selb = jnp.broadcast_to(sel, (N, TB))
        s_blocks = [jnp.where(id_blocks[g] == selb, -jnp.inf, s_blocks[g])
                    for g in range(N)]

    # ---- softmax over the k selected scores (vals[0] is the exact max) -----
    e = jnp.exp(vals - vals[0:1, :])
    denom = jnp.sum(e, axis=0, keepdims=True)
    wgt = e * pl.reciprocal(denom, approx=True)

    idx_ref[...] = ids
    wgt_ref[...] = wgt


def topk_attention(x, wq_t, bq, wk_t, bk, top_k, padding_mask=None):
    """Pallas implementation of TopKAttention.forward.

    Args:
      x: (B, N_stack, N_objects, input_dim) float32.
      wq_t, wk_t: (input_dim, proj_dim)  (PyTorch Linear weight, transposed).
      bq, bk: (proj_dim,).
      top_k: python int.
      padding_mask: optional (B, N_stack, N_objects) bool.
    Returns:
      topk_indices: (B, N_stack, k, 2) int32
      topk_weights: (B, N_stack, k) float32
    """
    B, NS, N, D = x.shape
    P = wq_t.shape[1]
    k = min(top_k, N * N)
    BS = B * NS
    scale = float(P) ** (-0.5)

    # Slab-batch tile: always a full 128-lane block (lane-dense vregs and
    # unmasked output stores); pad the slab batch up to a multiple of 128.
    TB = 128
    BSp = _round_up(max(BS, 1), TB)
    n_steps = BSp // TB

    # Layout plumbing in plain JAX: slab index -> lanes, objects grouped per
    # grid block so the kernel sees x as (D, N*TB) and does one big matmul.
    xf = x.reshape(BS, N, D).astype(jnp.float32)
    xf = jnp.pad(xf, ((0, BSp - BS), (0, 0), (0, 0)))
    x_t = (xf.reshape(n_steps, TB, N, D)
             .transpose(3, 0, 2, 1)                      # (D, n_steps, N, TB)
             .reshape(D, n_steps * N * TB))

    if padding_mask is None:
        mk = jnp.ones((BS, N), jnp.int32)
    else:
        mk = padding_mask.reshape(BS, N).astype(jnp.int32)
    mk = jnp.pad(mk, ((0, BSp - BS), (0, 0)), constant_values=1)
    mk_t = jnp.transpose(mk, (1, 0))                     # (N, BSp)

    # Fused Q/K weight [Wq; Wk] (2P, D) and bias (2P, 1).
    w_fused = jnp.concatenate([wq_t.T, wk_t.T], axis=0).astype(jnp.float32)
    b_fused = jnp.concatenate([bq, bk], axis=0).reshape(2 * P, 1).astype(jnp.float32)

    kernel = functools.partial(_topk_attn_kernel, scale=scale, top_k=k,
                               n_obj=N, proj_dim=P, tb=TB)

    idx_t, w_t = pl.pallas_call(
        kernel,
        out_shape=(
            jax.ShapeDtypeStruct((k, BSp), jnp.int32),
            jax.ShapeDtypeStruct((k, BSp), jnp.float32),
        ),
        grid_spec=pltpu.PrefetchScalarGridSpec(
            num_scalar_prefetch=0,
            grid=(n_steps,),
            in_specs=[
                pl.BlockSpec((D, N * TB), lambda i: (0, i)),     # activations
                pl.BlockSpec((2 * P, D), lambda i: (0, 0)),      # fused W
                pl.BlockSpec((2 * P, 1), lambda i: (0, 0)),      # fused bias
                pl.BlockSpec((N, TB), lambda i: (0, i)),         # padding mask
            ],
            out_specs=[
                pl.BlockSpec((k, TB), lambda i: (0, i)),
                pl.BlockSpec((k, TB), lambda i: (0, i)),
            ],
        ),
        compiler_params=pltpu.CompilerParams(
            dimension_semantics=("parallel",)),
    )(x_t, w_fused, b_fused, mk_t)

    idx_flat = jnp.transpose(idx_t[:, :BS], (1, 0)).reshape(B, NS, k)
    weights = jnp.transpose(w_t[:, :BS], (1, 0)).reshape(B, NS, k)
    row_idx = idx_flat // N
    col_idx = idx_flat % N
    topk_indices = jnp.stack([row_idx, col_idx], axis=-1)
    # TODO(synk): the PyTorch module's `verbose` printing/counter is host-side logging only; omitted.
    return topk_indices, weights


def _reference(x, wq_t, bq, wk_t, bk, top_k, padding_mask=None):
    B, NS, N, D = x.shape
    P = wq_t.shape[1]
    k = min(top_k, N * N)
    scale = float(P) ** (-0.5)
    Q = jnp.einsum("bsnd,dp->bsnp", x, wq_t) + bq
    K = jnp.einsum("bsnd,dp->bsnp", x, wk_t) + bk
    scores = jnp.einsum("bsnp,bsmp->bsnm", Q, K) * scale
    if padding_mask is not None:
        m2d = padding_mask[..., :, None] & padding_mask[..., None, :]
        scores = jnp.where(m2d, scores, -1000000000.0)
    flat = scores.reshape(B, NS, N * N)
    vals, idx = lax.top_k(flat, k)
    w = jax.nn.softmax(vals, axis=-1)
    indices = jnp.stack([idx // N, idx % N], axis=-1)
    return indices, w


if __name__ == "__main__":
    # Small shapes consistent with the module's forward.
    B, N_stack, N_objects, input_dim, proj_dim, TOP_K = 2, 3, 8, 32, 16, 10
    K_EFF = min(TOP_K, N_objects ** 2)

    key = jax.random.PRNGKey(0)
    kx, kwq, kbq, kwk, kbk = jax.random.split(key, 5)

    x = jax.random.normal(kx, (B, N_stack, N_objects, input_dim), dtype=jnp.float32)

    # Deterministic "nn.Linear"-style init: U(-1/sqrt(fan_in), 1/sqrt(fan_in)).
    bound = 1.0 / (input_dim ** 0.5)
    Wq = jax.random.uniform(kwq, (proj_dim, input_dim), minval=-bound, maxval=bound)
    bq = jax.random.uniform(kbq, (proj_dim,), minval=-bound, maxval=bound)
    Wk = jax.random.uniform(kwk, (proj_dim, input_dim), minval=-bound, maxval=bound)
    bk = jax.random.uniform(kbk, (proj_dim,), minval=-bound, maxval=bound)

    # --- no padding mask ---
    topk_indices, topk_weights = topk_attention(x, Wq.T, bq, Wk.T, bk, TOP_K)
    jax.block_until_ready((topk_indices, topk_weights))
    ref_indices, ref_weights = _reference(x, Wq.T, bq, Wk.T, bk, TOP_K)

    assert topk_indices.shape == (B, N_stack, K_EFF, 2)
    assert topk_weights.shape == (B, N_stack, K_EFF)
    assert jnp.allclose(topk_weights, ref_weights, atol=1e-3), "weights mismatch"
    assert bool(jnp.all(topk_indices == ref_indices)), "indices mismatch"

    # --- with padding mask ---
    lengths = jnp.array([[8, 6, 5], [7, 8, 6]], dtype=jnp.int32)         # (B, N_stack)
    padding_mask = jnp.arange(N_objects)[None, None, :] < lengths[:, :, None]  # bool
    m_indices, m_weights = topk_attention(x, Wq.T, bq, Wk.T, bk, TOP_K,
                                          padding_mask=padding_mask)
    jax.block_until_ready((m_indices, m_weights))
    ref_m_indices, ref_m_weights = _reference(x, Wq.T, bq, Wk.T, bk, TOP_K,
                                              padding_mask=padding_mask)

    assert jnp.allclose(m_weights, ref_m_weights, atol=1e-3), "masked weights mismatch"
    assert bool(jnp.all(m_indices == ref_m_indices)), "masked indices mismatch"

    print("KERNEL_OK")
</pallas_src>

<mosaic_0001>
module attributes {stable_mosaic.version = 11 : i64} {
  func.func @_topk_attn_kernel(%arg0: i32, %arg1: memref<32x1024xf32, #tpu.memory_space<vmem>>, %arg2: memref<32x32xf32, #tpu.memory_space<vmem>>, %arg3: memref<32x1xf32, #tpu.memory_space<vmem>>, %arg4: memref<8x128xi32, #tpu.memory_space<vmem>>, %arg5: memref<10x128xi32, #tpu.memory_space<vmem>>, %arg6: memref<10x128xf32, #tpu.memory_space<vmem>>) attributes {dimension_semantics = [#tpu.dimension_semantics<parallel>], iteration_bounds = array<i64: 1>, scalar_prefetch = 0 : i64, scratch_operands = 0 : i64, tpu.core_type = #tpu.core_type<tc>, window_params = [{transform_indices = @transform_0, window_bounds = array<i64: 32, 1024>}, {pipeline_mode = #tpu.pipeline_mode<synchronous>, transform_indices = @transform_1, window_bounds = array<i64: 32, 32>}, {pipeline_mode = #tpu.pipeline_mode<synchronous>, transform_indices = @transform_2, window_bounds = array<i64: 32, 1>}, {transform_indices = @transform_3, window_bounds = array<i64: 8, 128>}, {transform_indices = @transform_4, window_bounds = array<i64: 10, 128>}, {transform_indices = @transform_5, window_bounds = array<i64: 10, 128>}]} {
    %c0 = arith.constant 0 : index
    %c0_0 = arith.constant 0 : index
    %0 = vector.load %arg2[%c0, %c0_0] : memref<32x32xf32, #tpu.memory_space<vmem>>, vector<32x32xf32>
    %c0_1 = arith.constant 0 : index
    %c0_2 = arith.constant 0 : index
    %1 = vector.load %arg1[%c0_1, %c0_2] : memref<32x1024xf32, #tpu.memory_space<vmem>>, vector<32x1024xf32>
    %cst = arith.constant dense<0.000000e+00> : vector<32x1024xf32>
    %2 = tpu.matmul %0, %1, %cst {dimension_numbers = #tpu.dot_dimension_numbers<[1], [0], [0], [1], [0, 0, 1, 1], [], []>} : vector<32x32xf32>, vector<32x1024xf32>, vector<32x1024xf32> -> vector<32x1024xf32>
    %c0_3 = arith.constant 0 : index
    %c0_4 = arith.constant 0 : index
    %3 = vector.load %arg3[%c0_3, %c0_4] : memref<32x1xf32, #tpu.memory_space<vmem>>, vector<32x1xf32>
    %4 = vector.broadcast %3 : vector<32x1xf32> to vector<32x1024xf32>
    %5 = arith.addf %2, %4 : vector<32x1024xf32>
    %6 = vector.extract_strided_slice %5 {offsets = [0, 0], sizes = [16, 1024], strides = [1, 1]} : vector<32x1024xf32> to vector<16x1024xf32>
    %7 = vector.extract_strided_slice %5 {offsets = [16, 0], sizes = [16, 1024], strides = [1, 1]} : vector<32x1024xf32> to vector<16x1024xf32>
    %8 = vector.extract_strided_slice %7 {offsets = [0, 0], sizes = [16, 128], strides = [1, 1]} : vector<16x1024xf32> to vector<16x128xf32>
    %9 = vector.extract_strided_slice %7 {offsets = [0, 128], sizes = [16, 128], strides = [1, 1]} : vector<16x1024xf32> to vector<16x128xf32>
    %10 = vector.extract_strided_slice %7 {offsets = [0, 256], sizes = [16, 128], strides = [1, 1]} : vector<16x1024xf32> to vector<16x128xf32>
    %11 = vector.extract_strided_slice %7 {offsets = [0, 384], sizes = [16, 128], strides = [1, 1]} : vector<16x1024xf32> to vector<16x128xf32>
    %12 = vector.extract_strided_slice %7 {offsets = [0, 512], sizes = [16, 128], strides = [1, 1]} : vector<16x1024xf32> to vector<16x128xf32>
    %13 = vector.extract_strided_slice %7 {offsets = [0, 640], sizes = [16, 128], strides = [1, 1]} : vector<16x1024xf32> to vector<16x128xf32>
    %14 = vector.extract_strided_slice %7 {offsets = [0, 768], sizes = [16, 128], strides = [1, 1]} : vector<16x1024xf32> to vector<16x128xf32>
    %15 = vector.extract_strided_slice %7 {offsets = [0, 896], sizes = [16, 128], strides = [1, 1]} : vector<16x1024xf32> to vector<16x128xf32>
    %16 = vector.shape_cast %8 : vector<16x128xf32> to vector<1x16x128xf32>
    %17 = vector.shape_cast %9 : vector<16x128xf32> to vector<1x16x128xf32>
    %18 = vector.shape_cast %10 : vector<16x128xf32> to vector<1x16x128xf32>
    %19 = vector.shape_cast %11 : vector<16x128xf32> to vector<1x16x128xf32>
    %20 = vector.shape_cast %12 : vector<16x128xf32> to vector<1x16x128xf32>
    %21 = vector.shape_cast %13 : vector<16x128xf32> to vector<1x16x128xf32>
    %22 = vector.shape_cast %14 : vector<16x128xf32> to vector<1x16x128xf32>
    %23 = vector.shape_cast %15 : vector<16x128xf32> to vector<1x16x128xf32>
    %24 = tpu.concatenate %16, %17, %18, %19, %20, %21, %22, %23 in 0 : vector<1x16x128xf32>, vector<1x16x128xf32>, vector<1x16x128xf32>, vector<1x16x128xf32>, vector<1x16x128xf32>, vector<1x16x128xf32>, vector<1x16x128xf32>, vector<1x16x128xf32> -> vector<8x16x128xf32>
    %c0_5 = arith.constant 0 : index
    %c0_6 = arith.constant 0 : index
    %25 = vector.load %arg4[%c0_5, %c0_6] : memref<8x128xi32, #tpu.memory_space<vmem>>, vector<8x128xi32>
    %c0_i32 = arith.constant 0 : i32
    %26 = vector.broadcast %c0_i32 : i32 to vector<8x128xi32>
    %27 = arith.cmpi sgt, %25, %26 : vector<8x128xi32>
    %28 = vector.extract_strided_slice %6 {offsets = [0, 0], sizes = [16, 128], strides = [1, 1]} : vector<16x1024xf32> to vector<16x128xf32>
    %29 = vector.shape_cast %28 : vector<16x128xf32> to vector<1x16x128xf32>
    %30 = vector.broadcast %29 : vector<1x16x128xf32> to vector<8x16x128xf32>
    %31 = arith.mulf %24, %30 : vector<8x16x128xf32>
    %cst_7 = arith.constant dense<0.000000e+00> : vector<8x128xf32>
    %32 = vector.multi_reduction <add>, %31, %cst_7 [1] : vector<8x16x128xf32> to vector<8x128xf32>
    %cst_8 = arith.constant 2.500000e-01 : f32
    %33 = vector.broadcast %cst_8 : f32 to vector<8x128xf32>
    %34 = arith.mulf %32, %33 : vector<8x128xf32>
    %35 = vector.extract_strided_slice %27 {offsets = [0, 0], sizes = [1, 128], strides = [1, 1]} : vector<8x128xi1> to vector<1x128xi1>
    %36 = vector.broadcast %35 : vector<1x128xi1> to vector<8x128xi1>
    %37 = arith.andi %36, %27 : vector<8x128xi1>
    %cst_9 = arith.constant -1.000000e+09 : f32
    %38 = vector.broadcast %cst_9 : f32 to vector<8x128xf32>
    %39 = arith.select %37, %34, %38 : vector<8x128xi1>, vector<8x128xf32>
    %40 = vector.extract_strided_slice %6 {offsets = [0, 128], sizes = [16, 128], strides = [1, 1]} : vector<16x1024xf32> to vector<16x128xf32>
    %41 = vector.shape_cast %40 : vector<16x128xf32> to vector<1x16x128xf32>
    %42 = vector.broadcast %41 : vector<1x16x128xf32> to vector<8x16x128xf32>
    %43 = arith.mulf %24, %42 : vector<8x16x128xf32>
    %cst_10 = arith.constant dense<0.000000e+00> : vector<8x128xf32>
    %44 = vector.multi_reduction <add>, %43, %cst_10 [1] : vector<8x16x128xf32> to vector<8x128xf32>
    %cst_11 = arith.constant 2.500000e-01 : f32
    %45 = vector.broadcast %cst_11 : f32 to vector<8x128xf32>
    %46 = arith.mulf %44, %45 : vector<8x128xf32>
    %47 = vector.extract_strided_slice %27 {offsets = [1, 0], sizes = [1, 128], strides = [1, 1]} : vector<8x128xi1> to vector<1x128xi1>
    %48 = vector.broadcast %47 : vector<1x128xi1> to vector<8x128xi1>
    %49 = arith.andi %48, %27 : vector<8x128xi1>
    %cst_12 = arith.constant -1.000000e+09 : f32
    %50 = vector.broadcast %cst_12 : f32 to vector<8x128xf32>
    %51 = arith.select %49, %46, %50 : vector<8x128xi1>, vector<8x128xf32>
    %52 = vector.extract_strided_slice %6 {offsets = [0, 256], sizes = [16, 128], strides = [1, 1]} : vector<16x1024xf32> to vector<16x128xf32>
    %53 = vector.shape_cast %52 : vector<16x128xf32> to vector<1x16x128xf32>
    %54 = vector.broadcast %53 : vector<1x16x128xf32> to vector<8x16x128xf32>
    %55 = arith.mulf %24, %54 : vector<8x16x128xf32>
    %cst_13 = arith.constant dense<0.000000e+00> : vector<8x128xf32>
    %56 = vector.multi_reduction <add>, %55, %cst_13 [1] : vector<8x16x128xf32> to vector<8x128xf32>
    %cst_14 = arith.constant 2.500000e-01 : f32
    %57 = vector.broadcast %cst_14 : f32 to vector<8x128xf32>
    %58 = arith.mulf %56, %57 : vector<8x128xf32>
    %59 = vector.extract_strided_slice %27 {offsets = [2, 0], sizes = [1, 128], strides = [1, 1]} : vector<8x128xi1> to vector<1x128xi1>
    %60 = vector.broadcast %59 : vector<1x128xi1> to vector<8x128xi1>
    %61 = arith.andi %60, %27 : vector<8x128xi1>
    %cst_15 = arith.constant -1.000000e+09 : f32
    %62 = vector.broadcast %cst_15 : f32 to vector<8x128xf32>
    %63 = arith.select %61, %58, %62 : vector<8x128xi1>, vector<8x128xf32>
    %64 = vector.extract_strided_slice %6 {offsets = [0, 384], sizes = [16, 128], strides = [1, 1]} : vector<16x1024xf32> to vector<16x128xf32>
    %65 = vector.shape_cast %64 : vector<16x128xf32> to vector<1x16x128xf32>
    %66 = vector.broadcast %65 : vector<1x16x128xf32> to vector<8x16x128xf32>
    %67 = arith.mulf %24, %66 : vector<8x16x128xf32>
    %cst_16 = arith.constant dense<0.000000e+00> : vector<8x128xf32>
    %68 = vector.multi_reduction <add>, %67, %cst_16 [1] : vector<8x16x128xf32> to vector<8x128xf32>
    %cst_17 = arith.constant 2.500000e-01 : f32
    %69 = vector.broadcast %cst_17 : f32 to vector<8x128xf32>
    %70 = arith.mulf %68, %69 : vector<8x128xf32>
    %71 = vector.extract_strided_slice %27 {offsets = [3, 0], sizes = [1, 128], strides = [1, 1]} : vector<8x128xi1> to vector<1x128xi1>
    %72 = vector.broadcast %71 : vector<1x128xi1> to vector<8x128xi1>
    %73 = arith.andi %72, %27 : vector<8x128xi1>
    %cst_18 = arith.constant -1.000000e+09 : f32
    %74 = vector.broadcast %cst_18 : f32 to vector<8x128xf32>
    %75 = arith.select %73, %70, %74 : vector<8x128xi1>, vector<8x128xf32>
    %76 = vector.extract_strided_slice %6 {offsets = [0, 512], sizes = [16, 128], strides = [1, 1]} : vector<16x1024xf32> to vector<16x128xf32>
    %77 = vector.shape_cast %76 : vector<16x128xf32> to vector<1x16x128xf32>
    %78 = vector.broadcast %77 : vector<1x16x128xf32> to vector<8x16x128xf32>
    %79 = arith.mulf %24, %78 : vector<8x16x128xf32>
    %cst_19 = arith.constant dense<0.000000e+00> : vector<8x128xf32>
    %80 = vector.multi_reduction <add>, %79, %cst_19 [1] : vector<8x16x128xf32> to vector<8x128xf32>
    %cst_20 = arith.constant 2.500000e-01 : f32
    %81 = vector.broadcast %cst_20 : f32 to vector<8x128xf32>
    %82 = arith.mulf %80, %81 : vector<8x128xf32>
    %83 = vector.extract_strided_slice %27 {offsets = [4, 0], sizes = [1, 128], strides = [1, 1]} : vector<8x128xi1> to vector<1x128xi1>
    %84 = vector.broadcast %83 : vector<1x128xi1> to vector<8x128xi1>
    %85 = arith.andi %84, %27 : vector<8x128xi1>
    %cst_21 = arith.constant -1.000000e+09 : f32
    %86 = vector.broadcast %cst_21 : f32 to vector<8x128xf32>
    %87 = arith.select %85, %82, %86 : vector<8x128xi1>, vector<8x128xf32>
    %88 = vector.extract_strided_slice %6 {offsets = [0, 640], sizes = [16, 128], strides = [1, 1]} : vector<16x1024xf32> to vector<16x128xf32>
    %89 = vector.shape_cast %88 : vector<16x128xf32> to vector<1x16x128xf32>
    %90 = vector.broadcast %89 : vector<1x16x128xf32> to vector<8x16x128xf32>
    %91 = arith.mulf %24, %90 : vector<8x16x128xf32>
    %cst_22 = arith.constant dense<0.000000e+00> : vector<8x128xf32>
    %92 = vector.multi_reduction <add>, %91, %cst_22 [1] : vector<8x16x128xf32> to vector<8x128xf32>
    %cst_23 = arith.constant 2.500000e-01 : f32
    %93 = vector.broadcast %cst_23 : f32 to vector<8x128xf32>
    %94 = arith.mulf %92, %93 : vector<8x128xf32>
    %95 = vector.extract_strided_slice %27 {offsets = [5, 0], sizes = [1, 128], strides = [1, 1]} : vector<8x128xi1> to vector<1x128xi1>
    %96 = vector.broadcast %95 : vector<1x128xi1> to vector<8x128xi1>
    %97 = arith.andi %96, %27 : vector<8x128xi1>
    %cst_24 = arith.constant -1.000000e+09 : f32
    %98 = vector.broadcast %cst_24 : f32 to vector<8x128xf32>
    %99 = arith.select %97, %94, %98 : vector<8x128xi1>, vector<8x128xf32>
    %100 = vector.extract_strided_slice %6 {offsets = [0, 768], sizes = [16, 128], strides = [1, 1]} : vector<16x1024xf32> to vector<16x128xf32>
    %101 = vector.shape_cast %100 : vector<16x128xf32> to vector<1x16x128xf32>
    %102 = vector.broadcast %101 : vector<1x16x128xf32> to vector<8x16x128xf32>
    %103 = arith.mulf %24, %102 : vector<8x16x128xf32>
    %cst_25 = arith.constant dense<0.000000e+00> : vector<8x128xf32>
    %104 = vector.multi_reduction <add>, %103, %cst_25 [1] : vector<8x16x128xf32> to vector<8x128xf32>
    %cst_26 = arith.constant 2.500000e-01 : f32
    %105 = vector.broadcast %cst_26 : f32 to vector<8x128xf32>
    %106 = arith.mulf %104, %105 : vector<8x128xf32>
    %107 = vector.extract_strided_slice %27 {offsets = [6, 0], sizes = [1, 128], strides = [1, 1]} : vector<8x128xi1> to vector<1x128xi1>
    %108 = vector.broadcast %107 : vector<1x128xi1> to vector<8x128xi1>
    %109 = arith.andi %108, %27 : vector<8x128xi1>
    %cst_27 = arith.constant -1.000000e+09 : f32
    %110 = vector.broadcast %cst_27 : f32 to vector<8x128xf32>
    %111 = arith.select %109, %106, %110 : vector<8x128xi1>, vector<8x128xf32>
    %112 = vector.extract_strided_slice %6 {offsets = [0, 896], sizes = [16, 128], strides = [1, 1]} : vector<16x1024xf32> to vector<16x128xf32>
    %113 = vector.shape_cast %112 : vector<16x128xf32> to vector<1x16x128xf32>
    %114 = vector.broadcast %113 : vector<1x16x128xf32> to vector<8x16x128xf32>
    %115 = arith.mulf %24, %114 : vector<8x16x128xf32>
    %cst_28 = arith.constant dense<0.000000e+00> : vector<8x128xf32>
    %116 = vector.multi_reduction <add>, %115, %cst_28 [1] : vector<8x16x128xf32> to vector<8x128xf32>
    %cst_29 = arith.constant 2.500000e-01 : f32
    %117 = vector.broadcast %cst_29 : f32 to vector<8x128xf32>
    %118 = arith.mulf %116, %117 : vector<8x128xf32>
    %119 = vector.extract_strided_slice %27 {offsets = [7, 0], sizes = [1, 128], strides = [1, 1]} : vector<8x128xi1> to vector<1x128xi1>
    %120 = vector.broadcast %119 : vector<1x128xi1> to vector<8x128xi1>
    %121 = arith.andi %120, %27 : vector<8x128xi1>
    %cst_30 = arith.constant -1.000000e+09 : f32
    %122 = vector.broadcast %cst_30 : f32 to vector<8x128xf32>
    %123 = arith.select %121, %118, %122 : vector<8x128xi1>, vector<8x128xf32>
    %124 = tpu.iota {dimensions = array<i32: 0>} : vector<8x128xi32>
    %c0_i32_31 = arith.constant 0 : i32
    %125 = vector.broadcast %c0_i32_31 : i32 to vector<8x128xi32>
    %126 = arith.addi %124, %125 : vector<8x128xi32>
    %c8_i32 = arith.constant 8 : i32
    %127 = vector.broadcast %c8_i32 : i32 to vector<8x128xi32>
    %128 = arith.addi %124, %127 : vector<8x128xi32>
    %c16_i32 = arith.constant 16 : i32
    %129 = vector.broadcast %c16_i32 : i32 to vector<8x128xi32>
    %130 = arith.addi %124, %129 : vector<8x128xi32>
    %c24_i32 = arith.constant 24 : i32
    %131 = vector.broadcast %c24_i32 : i32 to vector<8x128xi32>
    %132 = arith.addi %124, %131 : vector<8x128xi32>
    %c32_i32 = arith.constant 32 : i32
    %133 = vector.broadcast %c32_i32 : i32 to vector<8x128xi32>
    %134 = arith.addi %124, %133 : vector<8x128xi32>
    %c40_i32 = arith.constant 40 : i32
    %135 = vector.broadcast %c40_i32 : i32 to vector<8x128xi32>
    %136 = arith.addi %124, %135 : vector<8x128xi32>
    %c48_i32 = arith.constant 48 : i32
    %137 = vector.broadcast %c48_i32 : i32 to vector<8x128xi32>
    %138 = arith.addi %124, %137 : vector<8x128xi32>
    %c56_i32 = arith.constant 56 : i32
    %139 = vector.broadcast %c56_i32 : i32 to vector<8x128xi32>
    %140 = arith.addi %124, %139 : vector<8x128xi32>
    %141 = tpu.iota {dimensions = array<i32: 0>} : vector<10x128xi32>
    %cst_32 = arith.constant 0.000000e+00 : f32
    %142 = vector.broadcast %cst_32 : f32 to vector<10x128xf32>
    %c0_i32_33 = arith.constant 0 : i32
    %143 = vector.broadcast %c0_i32_33 : i32 to vector<10x128xi32>
    %144 = arith.cmpf ogt, %39, %51 : vector<8x128xf32>
    %145 = arith.cmpf oeq, %39, %51 : vector<8x128xf32>
    %146 = arith.cmpi slt, %126, %128 : vector<8x128xi32>
    %147 = arith.andi %145, %146 : vector<8x128xi1>
    %148 = arith.ori %144, %147 : vector<8x128xi1>
    %149 = arith.select %148, %39, %51 : vector<8x128xi1>, vector<8x128xf32>
    %150 = arith.select %148, %126, %128 : vector<8x128xi1>, vector<8x128xi32>
    %151 = arith.cmpf ogt, %63, %75 : vector<8x128xf32>
    %152 = arith.cmpf oeq, %63, %75 : vector<8x128xf32>
    %153 = arith.cmpi slt, %130, %132 : vector<8x128xi32>
    %154 = arith.andi %152, %153 : vector<8x128xi1>
    %155 = arith.ori %151, %154 : vector<8x128xi1>
    %156 = arith.select %155, %63, %75 : vector<8x128xi1>, vector<8x128xf32>
    %157 = arith.select %155, %130, %132 : vector<8x128xi1>, vector<8x128xi32>
    %158 = arith.cmpf ogt, %87, %99 : vector<8x128xf32>
    %159 = arith.cmpf oeq, %87, %99 : vector<8x128xf32>
    %160 = arith.cmpi slt, %134, %136 : vector<8x128xi32>
    %161 = arith.andi %159, %160 : vector<8x128xi1>
    %162 = arith.ori %158, %161 : vector<8x128xi1>
    %163 = arith.select %162, %87, %99 : vector<8x128xi1>, vector<8x128xf32>
    %164 = arith.select %162, %134, %136 : vector<8x128xi1>, vector<8x128xi32>
    %165 = arith.cmpf ogt, %111, %123 : vector<8x128xf32>
    %166 = arith.cmpf oeq, %111, %123 : vector<8x128xf32>
    %167 = arith.cmpi slt, %138, %140 : vector<8x128xi32>
    %168 = arith.andi %166, %167 : vector<8x128xi1>
    %169 = arith.ori %165, %168 : vector<8x128xi1>
    %170 = arith.select %169, %111, %123 : vector<8x128xi1>, vector<8x128xf32>
    %171 = arith.select %169, %138, %140 : vector<8x128xi1>, vector<8x128xi32>
    %172 = arith.cmpf ogt, %149, %156 : vector<8x128xf32>
    %173 = arith.cmpf oeq, %149, %156 : vector<8x128xf32>
    %174 = arith.cmpi slt, %150, %157 : vector<8x128xi32>
    %175 = arith.andi %173, %174 : vector<8x128xi1>
    %176 = arith.ori %172, %175 : vector<8x128xi1>
    %177 = arith.select %176, %149, %156 : vector<8x128xi1>, vector<8x128xf32>
    %178 = arith.select %176, %150, %157 : vector<8x128xi1>, vector<8x128xi32>
    %179 = arith.cmpf ogt, %163, %170 : vector<8x128xf32>
    %180 = arith.cmpf oeq, %163, %170 : vector<8x128xf32>
    %181 = arith.cmpi slt, %164, %171 : vector<8x128xi32>
    %182 = arith.andi %180, %181 : vector<8x128xi1>
    %183 = arith.ori %179, %182 : vector<8x128xi1>
    %184 = arith.select %183, %163, %170 : vector<8x128xi1>, vector<8x128xf32>
    %185 = arith.select %183, %164, %171 : vector<8x128xi1>, vector<8x128xi32>
    %186 = arith.cmpf ogt, %177, %184 : vector<8x128xf32>
    %187 = arith.cmpf oeq, %177, %184 : vector<8x128xf32>
    %188 = arith.cmpi slt, %178, %185 : vector<8x128xi32>
    %189 = arith.andi %187, %188 : vector<8x128xi1>
    %190 = arith.ori %186, %189 : vector<8x128xi1>
    %191 = arith.select %190, %177, %184 : vector<8x128xi1>, vector<8x128xf32>
    %192 = arith.select %190, %178, %185 : vector<8x128xi1>, vector<8x128xi32>
    %cst_34 = arith.constant dense<0xFF800000> : vector<128xf32>
    %193 = vector.multi_reduction <maximumf>, %191, %cst_34 [0] : vector<8x128xf32> to vector<128xf32>
    %194 = vector.shape_cast %193 : vector<128xf32> to vector<1x128xf32>
    %195 = vector.broadcast %194 : vector<1x128xf32> to vector<8x128xf32>
    %196 = arith.cmpf oeq, %191, %195 : vector<8x128xf32>
    %c64_i32 = arith.constant 64 : i32
    %197 = vector.broadcast %c64_i32 : i32 to vector<8x128xi32>
    %198 = arith.select %196, %192, %197 : vector<8x128xi1>, vector<8x128xi32>
    %cst_35 = arith.constant dense<2147483647> : vector<128xi32>
    %199 = vector.multi_reduction <minsi>, %198, %cst_35 [0] : vector<8x128xi32> to vector<128xi32>
    %200 = vector.shape_cast %199 : vector<128xi32> to vector<1x128xi32>
    %c0_i32_36 = arith.constant 0 : i32
    %201 = vector.broadcast %c0_i32_36 : i32 to vector<10x128xi32>
    %202 = arith.cmpi eq, %141, %201 : vector<10x128xi32>
    %203 = vector.shape_cast %194 : vector<1x128xf32> to vector<1x128xf32>
    %204 = vector.broadcast %203 : vector<1x128xf32> to vector<10x128xf32>
    %205 = arith.select %202, %204, %142 : vector<10x128xi1>, vector<10x128xf32>
    %c0_i32_37 = arith.constant 0 : i32
    %206 = vector.broadcast %c0_i32_37 : i32 to vector<10x128xi32>
    %207 = arith.cmpi eq, %141, %206 : vector<10x128xi32>
    %208 = vector.shape_cast %200 : vector<1x128xi32> to vector<1x128xi32>
    %209 = vector.broadcast %208 : vector<1x128xi32> to vector<10x128xi32>
    %210 = arith.select %207, %209, %143 : vector<10x128xi1>, vector<10x128xi32>
    %211 = vector.shape_cast %200 : vector<1x128xi32> to vector<1x128xi32>
    %212 = vector.broadcast %211 : vector<1x128xi32> to vector<8x128xi32>
    %213 = arith.cmpi eq, %126, %212 : vector<8x128xi32>
    %cst_38 = arith.constant 0xFF800000 : f32
    %214 = vector.broadcast %cst_38 : f32 to vector<8x128xf32>
    %215 = arith.select %213, %214, %39 : vector<8x128xi1>, vector<8x128xf32>
    %216 = arith.cmpi eq, %128, %212 : vector<8x128xi32>
    %cst_39 = arith.constant 0xFF800000 : f32
    %217 = vector.broadcast %cst_39 : f32 to vector<8x128xf32>
    %218 = arith.select %216, %217, %51 : vector<8x128xi1>, vector<8x128xf32>
    %219 = arith.cmpi eq, %130, %212 : vector<8x128xi32>
    %cst_40 = arith.constant 0xFF800000 : f32
    %220 = vector.broadcast %cst_40 : f32 to vector<8x128xf32>
    %221 = arith.select %219, %220, %63 : vector<8x128xi1>, vector<8x128xf32>
    %222 = arith.cmpi eq, %132, %212 : vector<8x128xi32>
    %cst_41 = arith.constant 0xFF800000 : f32
    %223 = vector.broadcast %cst_41 : f32 to vector<8x128xf32>
    %224 = arith.select %222, %223, %75 : vector<8x128xi1>, vector<8x128xf32>
    %225 = arith.cmpi eq, %134, %212 : vector<8x128xi32>
    %cst_42 = arith.constant 0xFF800000 : f32
    %226 = vector.broadcast %cst_42 : f32 to vector<8x128xf32>
    %227 = arith.select %225, %226, %87 : vector<8x128xi1>, vector<8x128xf32>
    %228 = arith.cmpi eq, %136, %212 : vector<8x128xi32>
    %cst_43 = arith.constant 0xFF800000 : f32
    %229 = vector.broadcast %cst_43 : f32 to vector<8x128xf32>
    %230 = arith.select %228, %229, %99 : vector<8x128xi1>, vector<8x128xf32>
    %231 = arith.cmpi eq, %138, %212 : vector<8x128xi32>
    %cst_44 = arith.constant 0xFF800000 : f32
    %232 = vector.broadcast %cst_44 : f32 to vector<8x128xf32>
    %233 = arith.select %231, %232, %111 : vector<8x128xi1>, vector<8x128xf32>
    %234 = arith.cmpi eq, %140, %212 : vector<8x128xi32>
    %cst_45 = arith.constant 0xFF800000 : f32
    %235 = vector.broadcast %cst_45 : f32 to vector<8x128xf32>
    %236 = arith.select %234, %235, %123 : vector<8x128xi1>, vector<8x128xf32>
    %237 = arith.cmpf ogt, %215, %218 : vector<8x128xf32>
    %238 = arith.cmpf oeq, %215, %218 : vector<8x128xf32>
    %239 = arith.cmpi slt, %126, %128 : vector<8x128xi32>
    %240 = arith.andi %238, %239 : vector<8x128xi1>
    %241 = arith.ori %237, %240 : vector<8x128xi1>
    %242 = arith.select %241, %215, %218 : vector<8x128xi1>, vector<8x128xf32>
    %243 = arith.select %241, %126, %128 : vector<8x128xi1>, vector<8x128xi32>
    %244 = arith.cmpf ogt, %221, %224 : vector<8x128xf32>
    %245 = arith.cmpf oeq, %221, %224 : vector<8x128xf32>
    %246 = arith.cmpi slt, %130, %132 : vector<8x128xi32>
    %247 = arith.andi %245, %246 : vector<8x128xi1>
    %248 = arith.ori %244, %247 : vector<8x128xi1>
    %249 = arith.select %248, %221, %224 : vector<8x128xi1>, vector<8x128xf32>
    %250 = arith.select %248, %130, %132 : vector<8x128xi1>, vector<8x128xi32>
    %251 = arith.cmpf ogt, %227, %230 : vector<8x128xf32>
    %252 = arith.cmpf oeq, %227, %230 : vector<8x128xf32>
    %253 = arith.cmpi slt, %134, %136 : vector<8x128xi32>
    %254 = arith.andi %252, %253 : vector<8x128xi1>
    %255 = arith.ori %251, %254 : vector<8x128xi1>
    %256 = arith.select %255, %227, %230 : vector<8x128xi1>, vector<8x128xf32>
    %257 = arith.select %255, %134, %136 : vector<8x128xi1>, vector<8x128xi32>
    %258 = arith.cmpf ogt, %233, %236 : vector<8x128xf32>
    %259 = arith.cmpf oeq, %233, %236 : vector<8x128xf32>
    %260 = arith.cmpi slt, %138, %140 : vector<8x128xi32>
    %261 = arith.andi %259, %260 : vector<8x128xi1>
    %262 = arith.ori %258, %261 : vector<8x128xi1>
    %263 = arith.select %262, %233, %236 : vector<8x128xi1>, vector<8x128xf32>
    %264 = arith.select %262, %138, %140 : vector<8x128xi1>, vector<8x128xi32>
    %265 = arith.cmpf ogt, %242, %249 : vector<8x128xf32>
    %266 = arith.cmpf oeq, %242, %249 : vector<8x128xf32>
    %267 = arith.cmpi slt, %243, %250 : vector<8x128xi32>
    %268 = arith.andi %266, %267 : vector<8x128xi1>
    %269 = arith.ori %265, %268 : vector<8x128xi1>
    %270 = arith.select %269, %242, %249 : vector<8x128xi1>, vector<8x128xf32>
    %271 = arith.select %269, %243, %250 : vector<8x128xi1>, vector<8x128xi32>
    %272 = arith.cmpf ogt, %256, %263 : vector<8x128xf32>
    %273 = arith.cmpf oeq, %256, %263 : vector<8x128xf32>
    %274 = arith.cmpi slt, %257, %264 : vector<8x128xi32>
    %275 = arith.andi %273, %274 : vector<8x128xi1>
    %276 = arith.ori %272, %275 : vector<8x128xi1>
    %277 = arith.select %276, %256, %263 : vector<8x128xi1>, vector<8x128xf32>
    %278 = arith.select %276, %257, %264 : vector<8x128xi1>, vector<8x128xi32>
    %279 = arith.cmpf ogt, %270, %277 : vector<8x128xf32>
    %280 = arith.cmpf oeq, %270, %277 : vector<8x128xf32>
    %281 = arith.cmpi slt, %271, %278 : vector<8x128xi32>
    %282 = arith.andi %280, %281 : vector<8x128xi1>
    %283 = arith.ori %279, %282 : vector<8x128xi1>
    %284 = arith.select %283, %270, %277 : vector<8x128xi1>, vector<8x128xf32>
    %285 = arith.select %283, %271, %278 : vector<8x128xi1>, vector<8x128xi32>
    %cst_46 = arith.constant dense<0xFF800000> : vector<128xf32>
    %286 = vector.multi_reduction <maximumf>, %284, %cst_46 [0] : vector<8x128xf32> to vector<128xf32>
    %287 = vector.shape_cast %286 : vector<128xf32> to vector<1x128xf32>
    %288 = vector.broadcast %287 : vector<1x128xf32> to vector<8x128xf32>
    %289 = arith.cmpf oeq, %284, %288 : vector<8x128xf32>
    %c64_i32_47 = arith.constant 64 : i32
    %290 = vector.broadcast %c64_i32_47 : i32 to vector<8x128xi32>
    %291 = arith.select %289, %285, %290 : vector<8x128xi1>, vector<8x128xi32>
    %cst_48 = arith.constant dense<2147483647> : vector<128xi32>
    %292 = vector.multi_reduction <minsi>, %291, %cst_48 [0] : vector<8x128xi32> to vector<128xi32>
    %293 = vector.shape_cast %292 : vector<128xi32> to vector<1x128xi32>
    %c1_i32 = arith.constant 1 : i32
    %294 = vector.broadcast %c1_i32 : i32 to vector<10x128xi32>
    %295 = arith.cmpi eq, %141, %294 : vector<10x128xi32>
    %296 = vector.shape_cast %287 : vector<1x128xf32> to vector<1x128xf32>
    %297 = vector.broadcast %296 : vector<1x128xf32> to vector<10x128xf32>
    %298 = arith.select %295, %297, %205 : vector<10x128xi1>, vector<10x128xf32>
    %c1_i32_49 = arith.constant 1 : i32
    %299 = vector.broadcast %c1_i32_49 : i32 to vector<10x128xi32>
    %300 = arith.cmpi eq, %141, %299 : vector<10x128xi32>
    %301 = vector.shape_cast %293 : vector<1x128xi32> to vector<1x128xi32>
    %302 = vector.broadcast %301 : vector<1x128xi32> to vector<10x128xi32>
    %303 = arith.select %300, %302, %210 : vector<10x128xi1>, vector<10x128xi32>
    %304 = vector.shape_cast %293 : vector<1x128xi32> to vector<1x128xi32>
    %305 = vector.broadcast %304 : vector<1x128xi32> to vector<8x128xi32>
    %306 = arith.cmpi eq, %126, %305 : vector<8x128xi32>
    %cst_50 = arith.constant 0xFF800000 : f32
    %307 = vector.broadcast %cst_50 : f32 to vector<8x128xf32>
    %308 = arith.select %306, %307, %215 : vector<8x128xi1>, vector<8x128xf32>
    %309 = arith.cmpi eq, %128, %305 : vector<8x128xi32>
    %cst_51 = arith.constant 0xFF800000 : f32
    %310 = vector.broadcast %cst_51 : f32 to vector<8x128xf32>
    %311 = arith.select %309, %310, %218 : vector<8x128xi1>, vector<8x128xf32>
    %312 = arith.cmpi eq, %130, %305 : vector<8x128xi32>
    %cst_52 = arith.constant 0xFF800000 : f32
    %313 = vector.broadcast %cst_52 : f32 to vector<8x128xf32>
    %314 = arith.select %312, %313, %221 : vector<8x128xi1>, vector<8x128xf32>
    %315 = arith.cmpi eq, %132, %305 : vector<8x128xi32>
    %cst_53 = arith.constant 0xFF800000 : f32
    %316 = vector.broadcast %cst_53 : f32 to vector<8x128xf32>
    %317 = arith.select %315, %316, %224 : vector<8x128xi1>, vector<8x128xf32>
    %318 = arith.cmpi eq, %134, %305 : vector<8x128xi32>
    %cst_54 = arith.constant 0xFF800000 : f32
    %319 = vector.broadcast %cst_54 : f32 to vector<8x128xf32>
    %320 = arith.select %318, %319, %227 : vector<8x128xi1>, vector<8x128xf32>
    %321 = arith.cmpi eq, %136, %305 : vector<8x128xi32>
    %cst_55 = arith.constant 0xFF800000 : f32
    %322 = vector.broadcast %cst_55 : f32 to vector<8x128xf32>
    %323 = arith.select %321, %322, %230 : vector<8x128xi1>, vector<8x128xf32>
    %324 = arith.cmpi eq, %138, %305 : vector<8x128xi32>
    %cst_56 = arith.constant 0xFF800000 : f32
    %325 = vector.broadcast %cst_56 : f32 to vector<8x128xf32>
    %326 = arith.select %324, %325, %233 : vector<8x128xi1>, vector<8x128xf32>
    %327 = arith.cmpi eq, %140, %305 : vector<8x128xi32>
    %cst_57 = arith.constant 0xFF800000 : f32
    %328 = vector.broadcast %cst_57 : f32 to vector<8x128xf32>
    %329 = arith.select %327, %328, %236 : vector<8x128xi1>, vector<8x128xf32>
    %330 = arith.cmpf ogt, %308, %311 : vector<8x128xf32>
    %331 = arith.cmpf oeq, %308, %311 : vector<8x128xf32>
    %332 = arith.cmpi slt, %126, %128 : vector<8x128xi32>
    %333 = arith.andi %331, %332 : vector<8x128xi1>
    %334 = arith.ori %330, %333 : vector<8x128xi1>
    %335 = arith.select %334, %308, %311 : vector<8x128xi1>, vector<8x128xf32>
    %336 = arith.select %334, %126, %128 : vector<8x128xi1>, vector<8x128xi32>
    %337 = arith.cmpf ogt, %314, %317 : vector<8x128xf32>
    %338 = arith.cmpf oeq, %314, %317 : vector<8x128xf32>
    %339 = arith.cmpi slt, %130, %132 : vector<8x128xi32>
    %340 = arith.andi %338, %339 : vector<8x128xi1>
    %341 = arith.ori %337, %340 : vector<8x128xi1>
    %342 = arith.select %341, %314, %317 : vector<8x128xi1>, vector<8x128xf32>
    %343 = arith.select %341, %130, %132 : vector<8x128xi1>, vector<8x128xi32>
    %344 = arith.cmpf ogt, %320, %323 : vector<8x128xf32>
    %345 = arith.cmpf oeq, %320, %323 : vector<8x128xf32>
    %346 = arith.cmpi slt, %134, %136 : vector<8x128xi32>
    %347 = arith.andi %345, %346 : vector<8x128xi1>
    %348 = arith.ori %344, %347 : vector<8x128xi1>
    %349 = arith.select %348, %320, %323 : vector<8x128xi1>, vector<8x128xf32>
    %350 = arith.select %348, %134, %136 : vector<8x128xi1>, vector<8x128xi32>
    %351 = arith.cmpf ogt, %326, %329 : vector<8x128xf32>
    %352 = arith.cmpf oeq, %326, %329 : vector<8x128xf32>
    %353 = arith.cmpi slt, %138, %140 : vector<8x128xi32>
    %354 = arith.andi %352, %353 : vector<8x128xi1>
    %355 = arith.ori %351, %354 : vector<8x128xi1>
    %356 = arith.select %355, %326, %329 : vector<8x128xi1>, vector<8x128xf32>
    %357 = arith.select %355, %138, %140 : vector<8x128xi1>, vector<8x128xi32>
    %358 = arith.cmpf ogt, %335, %342 : vector<8x128xf32>
    %359 = arith.cmpf oeq, %335, %342 : vector<8x128xf32>
    %360 = arith.cmpi slt, %336, %343 : vector<8x128xi32>
    %361 = arith.andi %359, %360 : vector<8x128xi1>
    %362 = arith.ori %358, %361 : vector<8x128xi1>
    %363 = arith.select %362, %335, %342 : vector<8x128xi1>, vector<8x128xf32>
    %364 = arith.select %362, %336, %343 : vector<8x128xi1>, vector<8x128xi32>
    %365 = arith.cmpf ogt, %349, %356 : vector<8x128xf32>
    %366 = arith.cmpf oeq, %349, %356 : vector<8x128xf32>
    %367 = arith.cmpi slt, %350, %357 : vector<8x128xi32>
    %368 = arith.andi %366, %367 : vector<8x128xi1>
    %369 = arith.ori %365, %368 : vector<8x128xi1>
    %370 = arith.select %369, %349, %356 : vector<8x128xi1>, vector<8x128xf32>
    %371 = arith.select %369, %350, %357 : vector<8x128xi1>, vector<8x128xi32>
    %372 = arith.cmpf ogt, %363, %370 : vector<8x128xf32>
    %373 = arith.cmpf oeq, %363, %370 : vector<8x128xf32>
    %374 = arith.cmpi slt, %364, %371 : vector<8x128xi32>
    %375 = arith.andi %373, %374 : vector<8x128xi1>
    %376 = arith.ori %372, %375 : vector<8x128xi1>
    %377 = arith.select %376, %363, %370 : vector<8x128xi1>, vector<8x128xf32>
    %378 = arith.select %376, %364, %371 : vector<8x128xi1>, vector<8x128xi32>
    %cst_58 = arith.constant dense<0xFF800000> : vector<128xf32>
    %379 = vector.multi_reduction <maximumf>, %377, %cst_58 [0] : vector<8x128xf32> to vector<128xf32>
    %380 = vector.shape_cast %379 : vector<128xf32> to vector<1x128xf32>
    %381 = vector.broadcast %380 : vector<1x128xf32> to vector<8x128xf32>
    %382 = arith.cmpf oeq, %377, %381 : vector<8x128xf32>
    %c64_i32_59 = arith.constant 64 : i32
    %383 = vector.broadcast %c64_i32_59 : i32 to vector<8x128xi32>
    %384 = arith.select %382, %378, %383 : vector<8x128xi1>, vector<8x128xi32>
    %cst_60 = arith.constant dense<2147483647> : vector<128xi32>
    %385 = vector.multi_reduction <minsi>, %384, %cst_60 [0] : vector<8x128xi32> to vector<128xi32>
    %386 = vector.shape_cast %385 : vector<128xi32> to vector<1x128xi32>
    %c2_i32 = arith.constant 2 : i32
    %387 = vector.broadcast %c2_i32 : i32 to vector<10x128xi32>
    %388 = arith.cmpi eq, %141, %387 : vector<10x128xi32>
    %389 = vector.shape_cast %380 : vector<1x128xf32> to vector<1x128xf32>
    %390 = vector.broadcast %389 : vector<1x128xf32> to vector<10x128xf32>
    %391 = arith.select %388, %390, %298 : vector<10x128xi1>, vector<10x128xf32>
    %c2_i32_61 = arith.constant 2 : i32
    %392 = vector.broadcast %c2_i32_61 : i32 to vector<10x128xi32>
    %393 = arith.cmpi eq, %141, %392 : vector<10x128xi32>
    %394 = vector.shape_cast %386 : vector<1x128xi32> to vector<1x128xi32>
    %395 = vector.broadcast %394 : vector<1x128xi32> to vector<10x128xi32>
    %396 = arith.select %393, %395, %303 : vector<10x128xi1>, vector<10x128xi32>
    %397 = vector.shape_cast %386 : vector<1x128xi32> to vector<1x128xi32>
    %398 = vector.broadcast %397 : vector<1x128xi32> to vector<8x128xi32>
    %399 = arith.cmpi eq, %126, %398 : vector<8x128xi32>
    %cst_62 = arith.constant 0xFF800000 : f32
    %400 = vector.broadcast %cst_62 : f32 to vector<8x128xf32>
    %401 = arith.select %399, %400, %308 : vector<8x128xi1>, vector<8x128xf32>
    %402 = arith.cmpi eq, %128, %398 : vector<8x128xi32>
    %cst_63 = arith.constant 0xFF800000 : f32
    %403 = vector.broadcast %cst_63 : f32 to vector<8x128xf32>
    %404 = arith.select %402, %403, %311 : vector<8x128xi1>, vector<8x128xf32>
    %405 = arith.cmpi eq, %130, %398 : vector<8x128xi32>
    %cst_64 = arith.constant 0xFF800000 : f32
    %406 = vector.broadcast %cst_64 : f32 to vector<8x128xf32>
    %407 = arith.select %405, %406, %314 : vector<8x128xi1>, vector<8x128xf32>
    %408 = arith.cmpi eq, %132, %398 : vector<8x128xi32>
    %cst_65 = arith.constant 0xFF800000 : f32
    %409 = vector.broadcast %cst_65 : f32 to vector<8x128xf32>
    %410 = arith.select %408, %409, %317 : vector<8x128xi1>, vector<8x128xf32>
    %411 = arith.cmpi eq, %134, %398 : vector<8x128xi32>
    %cst_66 = arith.constant 0xFF800000 : f32
    %412 = vector.broadcast %cst_66 : f32 to vector<8x128xf32>
    %413 = arith.select %411, %412, %320 : vector<8x128xi1>, vector<8x128xf32>
    %414 = arith.cmpi eq, %136, %398 : vector<8x128xi32>
    %cst_67 = arith.constant 0xFF800000 : f32
    %415 = vector.broadcast %cst_67 : f32 to vector<8x128xf32>
    %416 = arith.select %414, %415, %323 : vector<8x128xi1>, vector<8x128xf32>
    %417 = arith.cmpi eq, %138, %398 : vector<8x128xi32>
    %cst_68 = arith.constant 0xFF800000 : f32
    %418 = vector.broadcast %cst_68 : f32 to vector<8x128xf32>
    %419 = arith.select %417, %418, %326 : vector<8x128xi1>, vector<8x128xf32>
    %420 = arith.cmpi eq, %140, %398 : vector<8x128xi32>
    %cst_69 = arith.constant 0xFF800000 : f32
    %421 = vector.broadcast %cst_69 : f32 to vector<8x128xf32>
    %422 = arith.select %420, %421, %329 : vector<8x128xi1>, vector<8x128xf32>
    %423 = arith.cmpf ogt, %401, %404 : vector<8x128xf32>
    %424 = arith.cmpf oeq, %401, %404 : vector<8x128xf32>
    %425 = arith.cmpi slt, %126, %128 : vector<8x128xi32>
    %426 = arith.andi %424, %425 : vector<8x128xi1>
    %427 = arith.ori %423, %426 : vector<8x128xi1>
    %428 = arith.select %427, %401, %404 : vector<8x128xi1>, vector<8x128xf32>
    %429 = arith.select %427, %126, %128 : vector<8x128xi1>, vector<8x128xi32>
    %430 = arith.cmpf ogt, %407, %410 : vector<8x128xf32>
    %431 = arith.cmpf oeq, %407, %410 : vector<8x128xf32>
    %432 = arith.cmpi slt, %130, %132 : vector<8x128xi32>
    %433 = arith.andi %431, %432 : vector<8x128xi1>
    %434 = arith.ori %430, %433 : vector<8x128xi1>
    %435 = arith.select %434, %407, %410 : vector<8x128xi1>, vector<8x128xf32>
    %436 = arith.select %434, %130, %132 : vector<8x128xi1>, vector<8x128xi32>
    %437 = arith.cmpf ogt, %413, %416 : vector<8x128xf32>
    %438 = arith.cmpf oeq, %413, %416 : vector<8x128xf32>
    %439 = arith.cmpi slt, %134, %136 : vector<8x128xi32>
    %440 = arith.andi %438, %439 : vector<8x128xi1>
    %441 = arith.ori %437, %440 : vector<8x128xi1>
    %442 = arith.select %441, %413, %416 : vector<8x128xi1>, vector<8x128xf32>
    %443 = arith.select %441, %134, %136 : vector<8x128xi1>, vector<8x128xi32>
    %444 = arith.cmpf ogt, %419, %422 : vector<8x128xf32>
    %445 = arith.cmpf oeq, %419, %422 : vector<8x128xf32>
    %446 = arith.cmpi slt, %138, %140 : vector<8x128xi32>
    %447 = arith.andi %445, %446 : vector<8x128xi1>
    %448 = arith.ori %444, %447 : vector<8x128xi1>
    %449 = arith.select %448, %419, %422 : vector<8x128xi1>, vector<8x128xf32>
    %450 = arith.select %448, %138, %140 : vector<8x128xi1>, vector<8x128xi32>
    %451 = arith.cmpf ogt, %428, %435 : vector<8x128xf32>
    %452 = arith.cmpf oeq, %428, %435 : vector<8x128xf32>
    %453 = arith.cmpi slt, %429, %436 : vector<8x128xi32>
    %454 = arith.andi %452, %453 : vector<8x128xi1>
    %455 = arith.ori %451, %454 : vector<8x128xi1>
    %456 = arith.select %455, %428, %435 : vector<8x128xi1>, vector<8x128xf32>
    %457 = arith.select %455, %429, %436 : vector<8x128xi1>, vector<8x128xi32>
    %458 = arith.cmpf ogt, %442, %449 : vector<8x128xf32>
    %459 = arith.cmpf oeq, %442, %449 : vector<8x128xf32>
    %460 = arith.cmpi slt, %443, %450 : vector<8x128xi32>
    %461 = arith.andi %459, %460 : vector<8x128xi1>
    %462 = arith.ori %458, %461 : vector<8x128xi1>
    %463 = arith.select %462, %442, %449 : vector<8x128xi1>, vector<8x128xf32>
    %464 = arith.select %462, %443, %450 : vector<8x128xi1>, vector<8x128xi32>
    %465 = arith.cmpf ogt, %456, %463 : vector<8x128xf32>
    %466 = arith.cmpf oeq, %456, %463 : vector<8x128xf32>
    %467 = arith.cmpi slt, %457, %464 : vector<8x128xi32>
    %468 = arith.andi %466, %467 : vector<8x128xi1>
    %469 = arith.ori %465, %468 : vector<8x128xi1>
    %470 = arith.select %469, %456, %463 : vector<8x128xi1>, vector<8x128xf32>
    %471 = arith.select %469, %457, %464 : vector<8x128xi1>, vector<8x128xi32>
    %cst_70 = arith.constant dense<0xFF800000> : vector<128xf32>
    %472 = vector.multi_reduction <maximumf>, %470, %cst_70 [0] : vector<8x128xf32> to vector<128xf32>
    %473 = vector.shape_cast %472 : vector<128xf32> to vector<1x128xf32>
    %474 = vector.broadcast %473 : vector<1x128xf32> to vector<8x128xf32>
    %475 = arith.cmpf oeq, %470, %474 : vector<8x128xf32>
    %c64_i32_71 = arith.constant 64 : i32
    %476 = vector.broadcast %c64_i32_71 : i32 to vector<8x128xi32>
    %477 = arith.select %475, %471, %476 : vector<8x128xi1>, vector<8x128xi32>
    %cst_72 = arith.constant dense<2147483647> : vector<128xi32>
    %478 = vector.multi_reduction <minsi>, %477, %cst_72 [0] : vector<8x128xi32> to vector<128xi32>
    %479 = vector.shape_cast %478 : vector<128xi32> to vector<1x128xi32>
    %c3_i32 = arith.constant 3 : i32
    %480 = vector.broadcast %c3_i32 : i32 to vector<10x128xi32>
    %481 = arith.cmpi eq, %141, %480 : vector<10x128xi32>
    %482 = vector.shape_cast %473 : vector<1x128xf32> to vector<1x128xf32>
    %483 = vector.broadcast %482 : vector<1x128xf32> to vector<10x128xf32>
    %484 = arith.select %481, %483, %391 : vector<10x128xi1>, vector<10x128xf32>
    %c3_i32_73 = arith.constant 3 : i32
    %485 = vector.broadcast %c3_i32_73 : i32 to vector<10x128xi32>
    %486 = arith.cmpi eq, %141, %485 : vector<10x128xi32>
    %487 = vector.shape_cast %479 : vector<1x128xi32> to vector<1x128xi32>
    %488 = vector.broadcast %487 : vector<1x128xi32> to vector<10x128xi32>
    %489 = arith.select %486, %488, %396 : vector<10x128xi1>, vector<10x128xi32>
    %490 = vector.shape_cast %479 : vector<1x128xi32> to vector<1x128xi32>
    %491 = vector.broadcast %490 : vector<1x128xi32> to vector<8x128xi32>
    %492 = arith.cmpi eq, %126, %491 : vector<8x128xi32>
    %cst_74 = arith.constant 0xFF800000 : f32
    %493 = vector.broadcast %cst_74 : f32 to vector<8x128xf32>
    %494 = arith.select %492, %493, %401 : vector<8x128xi1>, vector<8x128xf32>
    %495 = arith.cmpi eq, %128, %491 : vector<8x128xi32>
    %cst_75 = arith.constant 0xFF800000 : f32
    %496 = vector.broadcast %cst_75 : f32 to vector<8x128xf32>
    %497 = arith.select %495, %496, %404 : vector<8x128xi1>, vector<8x128xf32>
    %498 = arith.cmpi eq, %130, %491 : vector<8x128xi32>
    %cst_76 = arith.constant 0xFF800000 : f32
    %499 = vector.broadcast %cst_76 : f32 to vector<8x128xf32>
    %500 = arith.select %498, %499, %407 : vector<8x128xi1>, vector<8x128xf32>
    %501 = arith.cmpi eq, %132, %491 : vector<8x128xi32>
    %cst_77 = arith.constant 0xFF800000 : f32
    %502 = vector.broadcast %cst_77 : f32 to vector<8x128xf32>
    %503 = arith.select %501, %502, %410 : vector<8x128xi1>, vector<8x128xf32>
    %504 = arith.cmpi eq, %134, %491 : vector<8x128xi32>
    %cst_78 = arith.constant 0xFF800000 : f32
    %505 = vector.broadcast %cst_78 : f32 to vector<8x128xf32>
    %506 = arith.select %504, %505, %413 : vector<8x128xi1>, vector<8x128xf32>
    %507 = arith.cmpi eq, %136, %491 : vector<8x128xi32>
    %cst_79 = arith.constant 0xFF800000 : f32
    %508 = vector.broadcast %cst_79 : f32 to vector<8x128xf32>
    %509 = arith.select %507, %508, %416 : vector<8x128xi1>, vector<8x128xf32>
    %510 = arith.cmpi eq, %138, %491 : vector<8x128xi32>
    %cst_80 = arith.constant 0xFF800000 : f32
    %511 = vector.broadcast %cst_80 : f32 to vector<8x128xf32>
    %512 = arith.select %510, %511, %419 : vector<8x128xi1>, vector<8x128xf32>
    %513 = arith.cmpi eq, %140, %491 : vector<8x128xi32>
    %cst_81 = arith.constant 0xFF800000 : f32
    %514 = vector.broadcast %cst_81 : f32 to vector<8x128xf32>
    %515 = arith.select %513, %514, %422 : vector<8x128xi1>, vector<8x128xf32>
    %516 = arith.cmpf ogt, %494, %497 : vector<8x128xf32>
    %517 = arith.cmpf oeq, %494, %497 : vector<8x128xf32>
    %518 = arith.cmpi slt, %126, %128 : vector<8x128xi32>
    %519 = arith.andi %517, %518 : vector<8x128xi1>
    %520 = arith.ori %516, %519 : vector<8x128xi1>
    %521 = arith.select %520, %494, %497 : vector<8x128xi1>, vector<8x128xf32>
    %522 = arith.select %520, %126, %128 : vector<8x128xi1>, vector<8x128xi32>
    %523 = arith.cmpf ogt, %500, %503 : vector<8x128xf32>
    %524 = arith.cmpf oeq, %500, %503 : vector<8x128xf32>
    %525 = arith.cmpi slt, %130, %132 : vector<8x128xi32>
    %526 = arith.andi %524, %525 : vector<8x128xi1>
    %527 = arith.ori %523, %526 : vector<8x128xi1>
    %528 = arith.select %527, %500, %503 : vector<8x128xi1>, vector<8x128xf32>
    %529 = arith.select %527, %130, %132 : vector<8x128xi1>, vector<8x128xi32>
    %530 = arith.cmpf ogt, %506, %509 : vector<8x128xf32>
    %531 = arith.cmpf oeq, %506, %509 : vector<8x128xf32>
    %532 = arith.cmpi slt, %134, %136 : vector<8x128xi32>
    %533 = arith.andi %531, %532 : vector<8x128xi1>
    %534 = arith.ori %530, %533 : vector<8x128xi1>
    %535 = arith.select %534, %506, %509 : vector<8x128xi1>, vector<8x128xf32>
    %536 = arith.select %534, %134, %136 : vector<8x128xi1>, vector<8x128xi32>
    %537 = arith.cmpf ogt, %512, %515 : vector<8x128xf32>
    %538 = arith.cmpf oeq, %512, %515 : vector<8x128xf32>
    %539 = arith.cmpi slt, %138, %140 : vector<8x128xi32>
    %540 = arith.andi %538, %539 : vector<8x128xi1>
    %541 = arith.ori %537, %540 : vector<8x128xi1>
    %542 = arith.select %541, %512, %515 : vector<8x128xi1>, vector<8x128xf32>
    %543 = arith.select %541, %138, %140 : vector<8x128xi1>, vector<8x128xi32>
    %544 = arith.cmpf ogt, %521, %528 : vector<8x128xf32>
    %545 = arith.cmpf oeq, %521, %528 : vector<8x128xf32>
    %546 = arith.cmpi slt, %522, %529 : vector<8x128xi32>
    %547 = arith.andi %545, %546 : vector<8x128xi1>
    %548 = arith.ori %544, %547 : vector<8x128xi1>
    %549 = arith.select %548, %521, %528 : vector<8x128xi1>, vector<8x128xf32>
    %550 = arith.select %548, %522, %529 : vector<8x128xi1>, vector<8x128xi32>
    %551 = arith.cmpf ogt, %535, %542 : vector<8x128xf32>
    %552 = arith.cmpf oeq, %535, %542 : vector<8x128xf32>
    %553 = arith.cmpi slt, %536, %543 : vector<8x128xi32>
    %554 = arith.andi %552, %553 : vector<8x128xi1>
    %555 = arith.ori %551, %554 : vector<8x128xi1>
    %556 = arith.select %555, %535, %542 : vector<8x128xi1>, vector<8x128xf32>
    %557 = arith.select %555, %536, %543 : vector<8x128xi1>, vector<8x128xi32>
    %558 = arith.cmpf ogt, %549, %556 : vector<8x128xf32>
    %559 = arith.cmpf oeq, %549, %556 : vector<8x128xf32>
    %560 = arith.cmpi slt, %550, %557 : vector<8x128xi32>
    %561 = arith.andi %559, %560 : vector<8x128xi1>
    %562 = arith.ori %558, %561 : vector<8x128xi1>
    %563 = arith.select %562, %549, %556 : vector<8x128xi1>, vector<8x128xf32>
    %564 = arith.select %562, %550, %557 : vector<8x128xi1>, vector<8x128xi32>
    %cst_82 = arith.constant dense<0xFF800000> : vector<128xf32>
    %565 = vector.multi_reduction <maximumf>, %563, %cst_82 [0] : vector<8x128xf32> to vector<128xf32>
    %566 = vector.shape_cast %565 : vector<128xf32> to vector<1x128xf32>
    %567 = vector.broadcast %566 : vector<1x128xf32> to vector<8x128xf32>
    %568 = arith.cmpf oeq, %563, %567 : vector<8x128xf32>
    %c64_i32_83 = arith.constant 64 : i32
    %569 = vector.broadcast %c64_i32_83 : i32 to vector<8x128xi32>
    %570 = arith.select %568, %564, %569 : vector<8x128xi1>, vector<8x128xi32>
    %cst_84 = arith.constant dense<2147483647> : vector<128xi32>
    %571 = vector.multi_reduction <minsi>, %570, %cst_84 [0] : vector<8x128xi32> to vector<128xi32>
    %572 = vector.shape_cast %571 : vector<128xi32> to vector<1x128xi32>
    %c4_i32 = arith.constant 4 : i32
    %573 = vector.broadcast %c4_i32 : i32 to vector<10x128xi32>
    %574 = arith.cmpi eq, %141, %573 : vector<10x128xi32>
    %575 = vector.shape_cast %566 : vector<1x128xf32> to vector<1x128xf32>
    %576 = vector.broadcast %575 : vector<1x128xf32> to vector<10x128xf32>
    %577 = arith.select %574, %576, %484 : vector<10x128xi1>, vector<10x128xf32>
    %c4_i32_85 = arith.constant 4 : i32
    %578 = vector.broadcast %c4_i32_85 : i32 to vector<10x128xi32>
    %579 = arith.cmpi eq, %141, %578 : vector<10x128xi32>
    %580 = vector.shape_cast %572 : vector<1x128xi32> to vector<1x128xi32>
    %581 = vector.broadcast %580 : vector<1x128xi32> to vector<10x128xi32>
    %582 = arith.select %579, %581, %489 : vector<10x128xi1>, vector<10x128xi32>
    %583 = vector.shape_cast %572 : vector<1x128xi32> to vector<1x128xi32>
    %584 = vector.broadcast %583 : vector<1x128xi32> to vector<8x128xi32>
    %585 = arith.cmpi eq, %126, %584 : vector<8x128xi32>
    %cst_86 = arith.constant 0xFF800000 : f32
    %586 = vector.broadcast %cst_86 : f32 to vector<8x128xf32>
    %587 = arith.select %585, %586, %494 : vector<8x128xi1>, vector<8x128xf32>
    %588 = arith.cmpi eq, %128, %584 : vector<8x128xi32>
    %cst_87 = arith.constant 0xFF800000 : f32
    %589 = vector.broadcast %cst_87 : f32 to vector<8x128xf32>
    %590 = arith.select %588, %589, %497 : vector<8x128xi1>, vector<8x128xf32>
    %591 = arith.cmpi eq, %130, %584 : vector<8x128xi32>
    %cst_88 = arith.constant 0xFF800000 : f32
    %592 = vector.broadcast %cst_88 : f32 to vector<8x128xf32>
    %593 = arith.select %591, %592, %500 : vector<8x128xi1>, vector<8x128xf32>
    %594 = arith.cmpi eq, %132, %584 : vector<8x128xi32>
    %cst_89 = arith.constant 0xFF800000 : f32
    %595 = vector.broadcast %cst_89 : f32 to vector<8x128xf32>
    %596 = arith.select %594, %595, %503 : vector<8x128xi1>, vector<8x128xf32>
    %597 = arith.cmpi eq, %134, %584 : vector<8x128xi32>
    %cst_90 = arith.constant 0xFF800000 : f32
    %598 = vector.broadcast %cst_90 : f32 to vector<8x128xf32>
    %599 = arith.select %597, %598, %506 : vector<8x128xi1>, vector<8x128xf32>
    %600 = arith.cmpi eq, %136, %584 : vector<8x128xi32>
    %cst_91 = arith.constant 0xFF800000 : f32
    %601 = vector.broadcast %cst_91 : f32 to vector<8x128xf32>
    %602 = arith.select %600, %601, %509 : vector<8x128xi1>, vector<8x128xf32>
    %603 = arith.cmpi eq, %138, %584 : vector<8x128xi32>
    %cst_92 = arith.constant 0xFF800000 : f32
    %604 = vector.broadcast %cst_92 : f32 to vector<8x128xf32>
    %605 = arith.select %603, %604, %512 : vector<8x128xi1>, vector<8x128xf32>
    %606 = arith.cmpi eq, %140, %584 : vector<8x128xi32>
    %cst_93 = arith.constant 0xFF800000 : f32
    %607 = vector.broadcast %cst_93 : f32 to vector<8x128xf32>
    %608 = arith.select %606, %607, %515 : vector<8x128xi1>, vector<8x128xf32>
    %609 = arith.cmpf ogt, %587, %590 : vector<8x128xf32>
    %610 = arith.cmpf oeq, %587, %590 : vector<8x128xf32>
    %611 = arith.cmpi slt, %126, %128 : vector<8x128xi32>
    %612 = arith.andi %610, %611 : vector<8x128xi1>
    %613 = arith.ori %609, %612 : vector<8x128xi1>
    %614 = arith.select %613, %587, %590 : vector<8x128xi1>, vector<8x128xf32>
    %615 = arith.select %613, %126, %128 : vector<8x128xi1>, vector<8x128xi32>
    %616 = arith.cmpf ogt, %593, %596 : vector<8x128xf32>
    %617 = arith.cmpf oeq, %593, %596 : vector<8x128xf32>
    %618 = arith.cmpi slt, %130, %132 : vector<8x128xi32>
    %619 = arith.andi %617, %618 : vector<8x128xi1>
    %620 = arith.ori %616, %619 : vector<8x128xi1>
    %621 = arith.select %620, %593, %596 : vector<8x128xi1>, vector<8x128xf32>
    %622 = arith.select %620, %130, %132 : vector<8x128xi1>, vector<8x128xi32>
    %623 = arith.cmpf ogt, %599, %602 : vector<8x128xf32>
    %624 = arith.cmpf oeq, %599, %602 : vector<8x128xf32>
    %625 = arith.cmpi slt, %134, %136 : vector<8x128xi32>
    %626 = arith.andi %624, %625 : vector<8x128xi1>
    %627 = arith.ori %623, %626 : vector<8x128xi1>
    %628 = arith.select %627, %599, %602 : vector<8x128xi1>, vector<8x128xf32>
    %629 = arith.select %627, %134, %136 : vector<8x128xi1>, vector<8x128xi32>
    %630 = arith.cmpf ogt, %605, %608 : vector<8x128xf32>
    %631 = arith.cmpf oeq, %605, %608 : vector<8x128xf32>
    %632 = arith.cmpi slt, %138, %140 : vector<8x128xi32>
    %633 = arith.andi %631, %632 : vector<8x128xi1>
    %634 = arith.ori %630, %633 : vector<8x128xi1>
    %635 = arith.select %634, %605, %608 : vector<8x128xi1>, vector<8x128xf32>
    %636 = arith.select %634, %138, %140 : vector<8x128xi1>, vector<8x128xi32>
    %637 = arith.cmpf ogt, %614, %621 : vector<8x128xf32>
    %638 = arith.cmpf oeq, %614, %621 : vector<8x128xf32>
    %639 = arith.cmpi slt, %615, %622 : vector<8x128xi32>
    %640 = arith.andi %638, %639 : vector<8x128xi1>
    %641 = arith.ori %637, %640 : vector<8x128xi1>
    %642 = arith.select %641, %614, %621 : vector<8x128xi1>, vector<8x128xf32>
    %643 = arith.select %641, %615, %622 : vector<8x128xi1>, vector<8x128xi32>
    %644 = arith.cmpf ogt, %628, %635 : vector<8x128xf32>
    %645 = arith.cmpf oeq, %628, %635 : vector<8x128xf32>
    %646 = arith.cmpi slt, %629, %636 : vector<8x128xi32>
    %647 = arith.andi %645, %646 : vector<8x128xi1>
    %648 = arith.ori %644, %647 : vector<8x128xi1>
    %649 = arith.select %648, %628, %635 : vector<8x128xi1>, vector<8x128xf32>
    %650 = arith.select %648, %629, %636 : vector<8x128xi1>, vector<8x128xi32>
    %651 = arith.cmpf ogt, %642, %649 : vector<8x128xf32>
    %652 = arith.cmpf oeq, %642, %649 : vector<8x128xf32>
    %653 = arith.cmpi slt, %643, %650 : vector<8x128xi32>
    %654 = arith.andi %652, %653 : vector<8x128xi1>
    %655 = arith.ori %651, %654 : vector<8x128xi1>
    %656 = arith.select %655, %642, %649 : vector<8x128xi1>, vector<8x128xf32>
    %657 = arith.select %655, %643, %650 : vector<8x128xi1>, vector<8x128xi32>
    %cst_94 = arith.constant dense<0xFF800000> : vector<128xf32>
    %658 = vector.multi_reduction <maximumf>, %656, %cst_94 [0] : vector<8x128xf32> to vector<128xf32>
    %659 = vector.shape_cast %658 : vector<128xf32> to vector<1x128xf32>
    %660 = vector.broadcast %659 : vector<1x128xf32> to vector<8x128xf32>
    %661 = arith.cmpf oeq, %656, %660 : vector<8x128xf32>
    %c64_i32_95 = arith.constant 64 : i32
    %662 = vector.broadcast %c64_i32_95 : i32 to vector<8x128xi32>
    %663 = arith.select %661, %657, %662 : vector<8x128xi1>, vector<8x128xi32>
    %cst_96 = arith.constant dense<2147483647> : vector<128xi32>
    %664 = vector.multi_reduction <minsi>, %663, %cst_96 [0] : vector<8x128xi32> to vector<128xi32>
    %665 = vector.shape_cast %664 : vector<128xi32> to vector<1x128xi32>
    %c5_i32 = arith.constant 5 : i32
    %666 = vector.broadcast %c5_i32 : i32 to vector<10x128xi32>
    %667 = arith.cmpi eq, %141, %666 : vector<10x128xi32>
    %668 = vector.shape_cast %659 : vector<1x128xf32> to vector<1x128xf32>
    %669 = vector.broadcast %668 : vector<1x128xf32> to vector<10x128xf32>
    %670 = arith.select %667, %669, %577 : vector<10x128xi1>, vector<10x128xf32>
    %c5_i32_97 = arith.constant 5 : i32
    %671 = vector.broadcast %c5_i32_97 : i32 to vector<10x128xi32>
    %672 = arith.cmpi eq, %141, %671 : vector<10x128xi32>
    %673 = vector.shape_cast %665 : vector<1x128xi32> to vector<1x128xi32>
    %674 = vector.broadcast %673 : vector<1x128xi32> to vector<10x128xi32>
    %675 = arith.select %672, %674, %582 : vector<10x128xi1>, vector<10x128xi32>
    %676 = vector.shape_cast %665 : vector<1x128xi32> to vector<1x128xi32>
    %677 = vector.broadcast %676 : vector<1x128xi32> to vector<8x128xi32>
    %678 = arith.cmpi eq, %126, %677 : vector<8x128xi32>
    %cst_98 = arith.constant 0xFF800000 : f32
    %679 = vector.broadcast %cst_98 : f32 to vector<8x128xf32>
    %680 = arith.select %678, %679, %587 : vector<8x128xi1>, vector<8x128xf32>
    %681 = arith.cmpi eq, %128, %677 : vector<8x128xi32>
    %cst_99 = arith.constant 0xFF800000 : f32
    %682 = vector.broadcast %cst_99 : f32 to vector<8x128xf32>
    %683 = arith.select %681, %682, %590 : vector<8x128xi1>, vector<8x128xf32>
    %684 = arith.cmpi eq, %130, %677 : vector<8x128xi32>
    %cst_100 = arith.constant 0xFF800000 : f32
    %685 = vector.broadcast %cst_100 : f32 to vector<8x128xf32>
    %686 = arith.select %684, %685, %593 : vector<8x128xi1>, vector<8x128xf32>
    %687 = arith.cmpi eq, %132, %677 : vector<8x128xi32>
    %cst_101 = arith.constant 0xFF800000 : f32
    %688 = vector.broadcast %cst_101 : f32 to vector<8x128xf32>
    %689 = arith.select %687, %688, %596 : vector<8x128xi1>, vector<8x128xf32>
    %690 = arith.cmpi eq, %134, %677 : vector<8x128xi32>
    %cst_102 = arith.constant 0xFF800000 : f32
    %691 = vector.broadcast %cst_102 : f32 to vector<8x128xf32>
    %692 = arith.select %690, %691, %599 : vector<8x128xi1>, vector<8x128xf32>
    %693 = arith.cmpi eq, %136, %677 : vector<8x128xi32>
    %cst_103 = arith.constant 0xFF800000 : f32
    %694 = vector.broadcast %cst_103 : f32 to vector<8x128xf32>
    %695 = arith.select %693, %694, %602 : vector<8x128xi1>, vector<8x128xf32>
    %696 = arith.cmpi eq, %138, %677 : vector<8x128xi32>
    %cst_104 = arith.constant 0xFF800000 : f32
    %697 = vector.broadcast %cst_104 : f32 to vector<8x128xf32>
    %698 = arith.select %696, %697, %605 : vector<8x128xi1>, vector<8x128xf32>
    %699 = arith.cmpi eq, %140, %677 : vector<8x128xi32>
    %cst_105 = arith.constant 0xFF800000 : f32
    %700 = vector.broadcast %cst_105 : f32 to vector<8x128xf32>
    %701 = arith.select %699, %700, %608 : vector<8x128xi1>, vector<8x128xf32>
    %702 = arith.cmpf ogt, %680, %683 : vector<8x128xf32>
    %703 = arith.cmpf oeq, %680, %683 : vector<8x128xf32>
    %704 = arith.cmpi slt, %126, %128 : vector<8x128xi32>
    %705 = arith.andi %703, %704 : vector<8x128xi1>
    %706 = arith.ori %702, %705 : vector<8x128xi1>
    %707 = arith.select %706, %680, %683 : vector<8x128xi1>, vector<8x128xf32>
    %708 = arith.select %706, %126, %128 : vector<8x128xi1>, vector<8x128xi32>
    %709 = arith.cmpf ogt, %686, %689 : vector<8x128xf32>
    %710 = arith.cmpf oeq, %686, %689 : vector<8x128xf32>
    %711 = arith.cmpi slt, %130, %132 : vector<8x128xi32>
    %712 = arith.andi %710, %711 : vector<8x128xi1>
    %713 = arith.ori %709, %712 : vector<8x128xi1>
    %714 = arith.select %713, %686, %689 : vector<8x128xi1>, vector<8x128xf32>
    %715 = arith.select %713, %130, %132 : vector<8x128xi1>, vector<8x128xi32>
    %716 = arith.cmpf ogt, %692, %695 : vector<8x128xf32>
    %717 = arith.cmpf oeq, %692, %695 : vector<8x128xf32>
    %718 = arith.cmpi slt, %134, %136 : vector<8x128xi32>
    %719 = arith.andi %717, %718 : vector<8x128xi1>
    %720 = arith.ori %716, %719 : vector<8x128xi1>
    %721 = arith.select %720, %692, %695 : vector<8x128xi1>, vector<8x128xf32>
    %722 = arith.select %720, %134, %136 : vector<8x128xi1>, vector<8x128xi32>
    %723 = arith.cmpf ogt, %698, %701 : vector<8x128xf32>
    %724 = arith.cmpf oeq, %698, %701 : vector<8x128xf32>
    %725 = arith.cmpi slt, %138, %140 : vector<8x128xi32>
    %726 = arith.andi %724, %725 : vector<8x128xi1>
    %727 = arith.ori %723, %726 : vector<8x128xi1>
    %728 = arith.select %727, %698, %701 : vector<8x128xi1>, vector<8x128xf32>
    %729 = arith.select %727, %138, %140 : vector<8x128xi1>, vector<8x128xi32>
    %730 = arith.cmpf ogt, %707, %714 : vector<8x128xf32>
    %731 = arith.cmpf oeq, %707, %714 : vector<8x128xf32>
    %732 = arith.cmpi slt, %708, %715 : vector<8x128xi32>
    %733 = arith.andi %731, %732 : vector<8x128xi1>
    %734 = arith.ori %730, %733 : vector<8x128xi1>
    %735 = arith.select %734, %707, %714 : vector<8x128xi1>, vector<8x128xf32>
    %736 = arith.select %734, %708, %715 : vector<8x128xi1>, vector<8x128xi32>
    %737 = arith.cmpf ogt, %721, %728 : vector<8x128xf32>
    %738 = arith.cmpf oeq, %721, %728 : vector<8x128xf32>
    %739 = arith.cmpi slt, %722, %729 : vector<8x128xi32>
    %740 = arith.andi %738, %739 : vector<8x128xi1>
    %741 = arith.ori %737, %740 : vector<8x128xi1>
    %742 = arith.select %741, %721, %728 : vector<8x128xi1>, vector<8x128xf32>
    %743 = arith.select %741, %722, %729 : vector<8x128xi1>, vector<8x128xi32>
    %744 = arith.cmpf ogt, %735, %742 : vector<8x128xf32>
    %745 = arith.cmpf oeq, %735, %742 : vector<8x128xf32>
    %746 = arith.cmpi slt, %736, %743 : vector<8x128xi32>
    %747 = arith.andi %745, %746 : vector<8x128xi1>
    %748 = arith.ori %744, %747 : vector<8x128xi1>
    %749 = arith.select %748, %735, %742 : vector<8x128xi1>, vector<8x128xf32>
    %750 = arith.select %748, %736, %743 : vector<8x128xi1>, vector<8x128xi32>
    %cst_106 = arith.constant dense<0xFF800000> : vector<128xf32>
    %751 = vector.multi_reduction <maximumf>, %749, %cst_106 [0] : vector<8x128xf32> to vector<128xf32>
    %752 = vector.shape_cast %751 : vector<128xf32> to vector<1x128xf32>
    %753 = vector.broadcast %752 : vector<1x128xf32> to vector<8x128xf32>
    %754 = arith.cmpf oeq, %749, %753 : vector<8x128xf32>
    %c64_i32_107 = arith.constant 64 : i32
    %755 = vector.broadcast %c64_i32_107 : i32 to vector<8x128xi32>
    %756 = arith.select %754, %750, %755 : vector<8x128xi1>, vector<8x128xi32>
    %cst_108 = arith.constant dense<2147483647> : vector<128xi32>
    %757 = vector.multi_reduction <minsi>, %756, %cst_108 [0] : vector<8x128xi32> to vector<128xi32>
    %758 = vector.shape_cast %757 : vector<128xi32> to vector<1x128xi32>
    %c6_i32 = arith.constant 6 : i32
    %759 = vector.broadcast %c6_i32 : i32 to vector<10x128xi32>
    %760 = arith.cmpi eq, %141, %759 : vector<10x128xi32>
    %761 = vector.shape_cast %752 : vector<1x128xf32> to vector<1x128xf32>
    %762 = vector.broadcast %761 : vector<1x128xf32> to vector<10x128xf32>
    %763 = arith.select %760, %762, %670 : vector<10x128xi1>, vector<10x128xf32>
    %c6_i32_109 = arith.constant 6 : i32
    %764 = vector.broadcast %c6_i32_109 : i32 to vector<10x128xi32>
    %765 = arith.cmpi eq, %141, %764 : vector<10x128xi32>
    %766 = vector.shape_cast %758 : vector<1x128xi32> to vector<1x128xi32>
    %767 = vector.broadcast %766 : vector<1x128xi32> to vector<10x128xi32>
    %768 = arith.select %765, %767, %675 : vector<10x128xi1>, vector<10x128xi32>
    %769 = vector.shape_cast %758 : vector<1x128xi32> to vector<1x128xi32>
    %770 = vector.broadcast %769 : vector<1x128xi32> to vector<8x128xi32>
    %771 = arith.cmpi eq, %126, %770 : vector<8x128xi32>
    %cst_110 = arith.constant 0xFF800000 : f32
    %772 = vector.broadcast %cst_110 : f32 to vector<8x128xf32>
    %773 = arith.select %771, %772, %680 : vector<8x128xi1>, vector<8x128xf32>
    %774 = arith.cmpi eq, %128, %770 : vector<8x128xi32>
    %cst_111 = arith.constant 0xFF800000 : f32
    %775 = vector.broadcast %cst_111 : f32 to vector<8x128xf32>
    %776 = arith.select %774, %775, %683 : vector<8x128xi1>, vector<8x128xf32>
    %777 = arith.cmpi eq, %130, %770 : vector<8x128xi32>
    %cst_112 = arith.constant 0xFF800000 : f32
    %778 = vector.broadcast %cst_112 : f32 to vector<8x128xf32>
    %779 = arith.select %777, %778, %686 : vector<8x128xi1>, vector<8x128xf32>
    %780 = arith.cmpi eq, %132, %770 : vector<8x128xi32>
    %cst_113 = arith.constant 0xFF800000 : f32
    %781 = vector.broadcast %cst_113 : f32 to vector<8x128xf32>
    %782 = arith.select %780, %781, %689 : vector<8x128xi1>, vector<8x128xf32>
    %783 = arith.cmpi eq, %134, %770 : vector<8x128xi32>
    %cst_114 = arith.constant 0xFF800000 : f32
    %784 = vector.broadcast %cst_114 : f32 to vector<8x128xf32>
    %785 = arith.select %783, %784, %692 : vector<8x128xi1>, vector<8x128xf32>
    %786 = arith.cmpi eq, %136, %770 : vector<8x128xi32>
    %cst_115 = arith.constant 0xFF800000 : f32
    %787 = vector.broadcast %cst_115 : f32 to vector<8x128xf32>
    %788 = arith.select %786, %787, %695 : vector<8x128xi1>, vector<8x128xf32>
    %789 = arith.cmpi eq, %138, %770 : vector<8x128xi32>
    %cst_116 = arith.constant 0xFF800000 : f32
    %790 = vector.broadcast %cst_116 : f32 to vector<8x128xf32>
    %791 = arith.select %789, %790, %698 : vector<8x128xi1>, vector<8x128xf32>
    %792 = arith.cmpi eq, %140, %770 : vector<8x128xi32>
    %cst_117 = arith.constant 0xFF800000 : f32
    %793 = vector.broadcast %cst_117 : f32 to vector<8x128xf32>
    %794 = arith.select %792, %793, %701 : vector<8x128xi1>, vector<8x128xf32>
    %795 = arith.cmpf ogt, %773, %776 : vector<8x128xf32>
    %796 = arith.cmpf oeq, %773, %776 : vector<8x128xf32>
    %797 = arith.cmpi slt, %126, %128 : vector<8x128xi32>
    %798 = arith.andi %796, %797 : vector<8x128xi1>
    %799 = arith.ori %795, %798 : vector<8x128xi1>
    %800 = arith.select %799, %773, %776 : vector<8x128xi1>, vector<8x128xf32>
    %801 = arith.select %799, %126, %128 : vector<8x128xi1>, vector<8x128xi32>
    %802 = arith.cmpf ogt, %779, %782 : vector<8x128xf32>
    %803 = arith.cmpf oeq, %779, %782 : vector<8x128xf32>
    %804 = arith.cmpi slt, %130, %132 : vector<8x128xi32>
    %805 = arith.andi %803, %804 : vector<8x128xi1>
    %806 = arith.ori %802, %805 : vector<8x128xi1>
    %807 = arith.select %806, %779, %782 : vector<8x128xi1>, vector<8x128xf32>
    %808 = arith.select %806, %130, %132 : vector<8x128xi1>, vector<8x128xi32>
    %809 = arith.cmpf ogt, %785, %788 : vector<8x128xf32>
    %810 = arith.cmpf oeq, %785, %788 : vector<8x128xf32>
    %811 = arith.cmpi slt, %134, %136 : vector<8x128xi32>
    %812 = arith.andi %810, %811 : vector<8x128xi1>
    %813 = arith.ori %809, %812 : vector<8x128xi1>
    %814 = arith.select %813, %785, %788 : vector<8x128xi1>, vector<8x128xf32>
    %815 = arith.select %813, %134, %136 : vector<8x128xi1>, vector<8x128xi32>
    %816 = arith.cmpf ogt, %791, %794 : vector<8x128xf32>
    %817 = arith.cmpf oeq, %791, %794 : vector<8x128xf32>
    %818 = arith.cmpi slt, %138, %140 : vector<8x128xi32>
    %819 = arith.andi %817, %818 : vector<8x128xi1>
    %820 = arith.ori %816, %819 : vector<8x128xi1>
    %821 = arith.select %820, %791, %794 : vector<8x128xi1>, vector<8x128xf32>
    %822 = arith.select %820, %138, %140 : vector<8x128xi1>, vector<8x128xi32>
    %823 = arith.cmpf ogt, %800, %807 : vector<8x128xf32>
    %824 = arith.cmpf oeq, %800, %807 : vector<8x128xf32>
    %825 = arith.cmpi slt, %801, %808 : vector<8x128xi32>
    %826 = arith.andi %824, %825 : vector<8x128xi1>
    %827 = arith.ori %823, %826 : vector<8x128xi1>
    %828 = arith.select %827, %800, %807 : vector<8x128xi1>, vector<8x128xf32>
    %829 = arith.select %827, %801, %808 : vector<8x128xi1>, vector<8x128xi32>
    %830 = arith.cmpf ogt, %814, %821 : vector<8x128xf32>
    %831 = arith.cmpf oeq, %814, %821 : vector<8x128xf32>
    %832 = arith.cmpi slt, %815, %822 : vector<8x128xi32>
    %833 = arith.andi %831, %832 : vector<8x128xi1>
    %834 = arith.ori %830, %833 : vector<8x128xi1>
    %835 = arith.select %834, %814, %821 : vector<8x128xi1>, vector<8x128xf32>
    %836 = arith.select %834, %815, %822 : vector<8x128xi1>, vector<8x128xi32>
    %837 = arith.cmpf ogt, %828, %835 : vector<8x128xf32>
    %838 = arith.cmpf oeq, %828, %835 : vector<8x128xf32>
    %839 = arith.cmpi slt, %829, %836 : vector<8x128xi32>
    %840 = arith.andi %838, %839 : vector<8x128xi1>
    %841 = arith.ori %837, %840 : vector<8x128xi1>
    %842 = arith.select %841, %828, %835 : vector<8x128xi1>, vector<8x128xf32>
    %843 = arith.select %841, %829, %836 : vector<8x128xi1>, vector<8x128xi32>
    %cst_118 = arith.constant dense<0xFF800000> : vector<128xf32>
    %844 = vector.multi_reduction <maximumf>, %842, %cst_118 [0] : vector<8x128xf32> to vector<128xf32>
    %845 = vector.shape_cast %844 : vector<128xf32> to vector<1x128xf32>
    %846 = vector.broadcast %845 : vector<1x128xf32> to vector<8x128xf32>
    %847 = arith.cmpf oeq, %842, %846 : vector<8x128xf32>
    %c64_i32_119 = arith.constant 64 : i32
    %848 = vector.broadcast %c64_i32_119 : i32 to vector<8x128xi32>
    %849 = arith.select %847, %843, %848 : vector<8x128xi1>, vector<8x128xi32>
    %cst_120 = arith.constant dense<2147483647> : vector<128xi32>
    %850 = vector.multi_reduction <minsi>, %849, %cst_120 [0] : vector<8x128xi32> to vector<128xi32>
    %851 = vector.shape_cast %850 : vector<128xi32> to vector<1x128xi32>
    %c7_i32 = arith.constant 7 : i32
    %852 = vector.broadcast %c7_i32 : i32 to vector<10x128xi32>
    %853 = arith.cmpi eq, %141, %852 : vector<10x128xi32>
    %854 = vector.shape_cast %845 : vector<1x128xf32> to vector<1x128xf32>
    %855 = vector.broadcast %854 : vector<1x128xf32> to vector<10x128xf32>
    %856 = arith.select %853, %855, %763 : vector<10x128xi1>, vector<10x128xf32>
    %c7_i32_121 = arith.constant 7 : i32
    %857 = vector.broadcast %c7_i32_121 : i32 to vector<10x128xi32>
    %858 = arith.cmpi eq, %141, %857 : vector<10x128xi32>
    %859 = vector.shape_cast %851 : vector<1x128xi32> to vector<1x128xi32>
    %860 = vector.broadcast %859 : vector<1x128xi32> to vector<10x128xi32>
    %861 = arith.select %858, %860, %768 : vector<10x128xi1>, vector<10x128xi32>
    %862 = vector.shape_cast %851 : vector<1x128xi32> to vector<1x128xi32>
    %863 = vector.broadcast %862 : vector<1x128xi32> to vector<8x128xi32>
    %864 = arith.cmpi eq, %126, %863 : vector<8x128xi32>
    %cst_122 = arith.constant 0xFF800000 : f32
    %865 = vector.broadcast %cst_122 : f32 to vector<8x128xf32>
    %866 = arith.select %864, %865, %773 : vector<8x128xi1>, vector<8x128xf32>
    %867 = arith.cmpi eq, %128, %863 : vector<8x128xi32>
    %cst_123 = arith.constant 0xFF800000 : f32
    %868 = vector.broadcast %cst_123 : f32 to vector<8x128xf32>
    %869 = arith.select %867, %868, %776 : vector<8x128xi1>, vector<8x128xf32>
    %870 = arith.cmpi eq, %130, %863 : vector<8x128xi32>
    %cst_124 = arith.constant 0xFF800000 : f32
    %871 = vector.broadcast %cst_124 : f32 to vector<8x128xf32>
    %872 = arith.select %870, %871, %779 : vector<8x128xi1>, vector<8x128xf32>
    %873 = arith.cmpi eq, %132, %863 : vector<8x128xi32>
    %cst_125 = arith.constant 0xFF800000 : f32
    %874 = vector.broadcast %cst_125 : f32 to vector<8x128xf32>
    %875 = arith.select %873, %874, %782 : vector<8x128xi1>, vector<8x128xf32>
    %876 = arith.cmpi eq, %134, %863 : vector<8x128xi32>
    %cst_126 = arith.constant 0xFF800000 : f32
    %877 = vector.broadcast %cst_126 : f32 to vector<8x128xf32>
    %878 = arith.select %876, %877, %785 : vector<8x128xi1>, vector<8x128xf32>
    %879 = arith.cmpi eq, %136, %863 : vector<8x128xi32>
    %cst_127 = arith.constant 0xFF800000 : f32
    %880 = vector.broadcast %cst_127 : f32 to vector<8x128xf32>
    %881 = arith.select %879, %880, %788 : vector<8x128xi1>, vector<8x128xf32>
    %882 = arith.cmpi eq, %138, %863 : vector<8x128xi32>
    %cst_128 = arith.constant 0xFF800000 : f32
    %883 = vector.broadcast %cst_128 : f32 to vector<8x128xf32>
    %884 = arith.select %882, %883, %791 : vector<8x128xi1>, vector<8x128xf32>
    %885 = arith.cmpi eq, %140, %863 : vector<8x128xi32>
    %cst_129 = arith.constant 0xFF800000 : f32
    %886 = vector.broadcast %cst_129 : f32 to vector<8x128xf32>
    %887 = arith.select %885, %886, %794 : vector<8x128xi1>, vector<8x128xf32>
    %888 = arith.cmpf ogt, %866, %869 : vector<8x128xf32>
    %889 = arith.cmpf oeq, %866, %869 : vector<8x128xf32>
    %890 = arith.cmpi slt, %126, %128 : vector<8x128xi32>
    %891 = arith.andi %889, %890 : vector<8x128xi1>
    %892 = arith.ori %888, %891 : vector<8x128xi1>
    %893 = arith.select %892, %866, %869 : vector<8x128xi1>, vector<8x128xf32>
    %894 = arith.select %892, %126, %128 : vector<8x128xi1>, vector<8x128xi32>
    %895 = arith.cmpf ogt, %872, %875 : vector<8x128xf32>
    %896 = arith.cmpf oeq, %872, %875 : vector<8x128xf32>
    %897 = arith.cmpi slt, %130, %132 : vector<8x128xi32>
    %898 = arith.andi %896, %897 : vector<8x128xi1>
    %899 = arith.ori %895, %898 : vector<8x128xi1>
    %900 = arith.select %899, %872, %875 : vector<8x128xi1>, vector<8x128xf32>
    %901 = arith.select %899, %130, %132 : vector<8x128xi1>, vector<8x128xi32>
    %902 = arith.cmpf ogt, %878, %881 : vector<8x128xf32>
    %903 = arith.cmpf oeq, %878, %881 : vector<8x128xf32>
    %904 = arith.cmpi slt, %134, %136 : vector<8x128xi32>
    %905 = arith.andi %903, %904 : vector<8x128xi1>
    %906 = arith.ori %902, %905 : vector<8x128xi1>
    %907 = arith.select %906, %878, %881 : vector<8x128xi1>, vector<8x128xf32>
    %908 = arith.select %906, %134, %136 : vector<8x128xi1>, vector<8x128xi32>
    %909 = arith.cmpf ogt, %884, %887 : vector<8x128xf32>
    %910 = arith.cmpf oeq, %884, %887 : vector<8x128xf32>
    %911 = arith.cmpi slt, %138, %140 : vector<8x128xi32>
    %912 = arith.andi %910, %911 : vector<8x128xi1>
    %913 = arith.ori %909, %912 : vector<8x128xi1>
    %914 = arith.select %913, %884, %887 : vector<8x128xi1>, vector<8x128xf32>
    %915 = arith.select %913, %138, %140 : vector<8x128xi1>, vector<8x128xi32>
    %916 = arith.cmpf ogt, %893, %900 : vector<8x128xf32>
    %917 = arith.cmpf oeq, %893, %900 : vector<8x128xf32>
    %918 = arith.cmpi slt, %894, %901 : vector<8x128xi32>
    %919 = arith.andi %917, %918 : vector<8x128xi1>
    %920 = arith.ori %916, %919 : vector<8x128xi1>
    %921 = arith.select %920, %893, %900 : vector<8x128xi1>, vector<8x128xf32>
    %922 = arith.select %920, %894, %901 : vector<8x128xi1>, vector<8x128xi32>
    %923 = arith.cmpf ogt, %907, %914 : vector<8x128xf32>
    %924 = arith.cmpf oeq, %907, %914 : vector<8x128xf32>
    %925 = arith.cmpi slt, %908, %915 : vector<8x128xi32>
    %926 = arith.andi %924, %925 : vector<8x128xi1>
    %927 = arith.ori %923, %926 : vector<8x128xi1>
    %928 = arith.select %927, %907, %914 : vector<8x128xi1>, vector<8x128xf32>
    %929 = arith.select %927, %908, %915 : vector<8x128xi1>, vector<8x128xi32>
    %930 = arith.cmpf ogt, %921, %928 : vector<8x128xf32>
    %931 = arith.cmpf oeq, %921, %928 : vector<8x128xf32>
    %932 = arith.cmpi slt, %922, %929 : vector<8x128xi32>
    %933 = arith.andi %931, %932 : vector<8x128xi1>
    %934 = arith.ori %930, %933 : vector<8x128xi1>
    %935 = arith.select %934, %921, %928 : vector<8x128xi1>, vector<8x128xf32>
    %936 = arith.select %934, %922, %929 : vector<8x128xi1>, vector<8x128xi32>
    %cst_130 = arith.constant dense<0xFF800000> : vector<128xf32>
    %937 = vector.multi_reduction <maximumf>, %935, %cst_130 [0] : vector<8x128xf32> to vector<128xf32>
    %938 = vector.shape_cast %937 : vector<128xf32> to vector<1x128xf32>
    %939 = vector.broadcast %938 : vector<1x128xf32> to vector<8x128xf32>
    %940 = arith.cmpf oeq, %935, %939 : vector<8x128xf32>
    %c64_i32_131 = arith.constant 64 : i32
    %941 = vector.broadcast %c64_i32_131 : i32 to vector<8x128xi32>
    %942 = arith.select %940, %936, %941 : vector<8x128xi1>, vector<8x128xi32>
    %cst_132 = arith.constant dense<2147483647> : vector<128xi32>
    %943 = vector.multi_reduction <minsi>, %942, %cst_132 [0] : vector<8x128xi32> to vector<128xi32>
    %944 = vector.shape_cast %943 : vector<128xi32> to vector<1x128xi32>
    %c8_i32_133 = arith.constant 8 : i32
    %945 = vector.broadcast %c8_i32_133 : i32 to vector<10x128xi32>
    %946 = arith.cmpi eq, %141, %945 : vector<10x128xi32>
    %947 = vector.shape_cast %938 : vector<1x128xf32> to vector<1x128xf32>
    %948 = vector.broadcast %947 : vector<1x128xf32> to vector<10x128xf32>
    %949 = arith.select %946, %948, %856 : vector<10x128xi1>, vector<10x128xf32>
    %c8_i32_134 = arith.constant 8 : i32
    %950 = vector.broadcast %c8_i32_134 : i32 to vector<10x128xi32>
    %951 = arith.cmpi eq, %141, %950 : vector<10x128xi32>
    %952 = vector.shape_cast %944 : vector<1x128xi32> to vector<1x128xi32>
    %953 = vector.broadcast %952 : vector<1x128xi32> to vector<10x128xi32>
    %954 = arith.select %951, %953, %861 : vector<10x128xi1>, vector<10x128xi32>
    %955 = vector.shape_cast %944 : vector<1x128xi32> to vector<1x128xi32>
    %956 = vector.broadcast %955 : vector<1x128xi32> to vector<8x128xi32>
    %957 = arith.cmpi eq, %126, %956 : vector<8x128xi32>
    %cst_135 = arith.constant 0xFF800000 : f32
    %958 = vector.broadcast %cst_135 : f32 to vector<8x128xf32>
    %959 = arith.select %957, %958, %866 : vector<8x128xi1>, vector<8x128xf32>
    %960 = arith.cmpi eq, %128, %956 : vector<8x128xi32>
    %cst_136 = arith.constant 0xFF800000 : f32
    %961 = vector.broadcast %cst_136 : f32 to vector<8x128xf32>
    %962 = arith.select %960, %961, %869 : vector<8x128xi1>, vector<8x128xf32>
    %963 = arith.cmpi eq, %130, %956 : vector<8x128xi32>
    %cst_137 = arith.constant 0xFF800000 : f32
    %964 = vector.broadcast %cst_137 : f32 to vector<8x128xf32>
    %965 = arith.select %963, %964, %872 : vector<8x128xi1>, vector<8x128xf32>
    %966 = arith.cmpi eq, %132, %956 : vector<8x128xi32>
    %cst_138 = arith.constant 0xFF800000 : f32
    %967 = vector.broadcast %cst_138 : f32 to vector<8x128xf32>
    %968 = arith.select %966, %967, %875 : vector<8x128xi1>, vector<8x128xf32>
    %969 = arith.cmpi eq, %134, %956 : vector<8x128xi32>
    %cst_139 = arith.constant 0xFF800000 : f32
    %970 = vector.broadcast %cst_139 : f32 to vector<8x128xf32>
    %971 = arith.select %969, %970, %878 : vector<8x128xi1>, vector<8x128xf32>
    %972 = arith.cmpi eq, %136, %956 : vector<8x128xi32>
    %cst_140 = arith.constant 0xFF800000 : f32
    %973 = vector.broadcast %cst_140 : f32 to vector<8x128xf32>
    %974 = arith.select %972, %973, %881 : vector<8x128xi1>, vector<8x128xf32>
    %975 = arith.cmpi eq, %138, %956 : vector<8x128xi32>
    %cst_141 = arith.constant 0xFF800000 : f32
    %976 = vector.broadcast %cst_141 : f32 to vector<8x128xf32>
    %977 = arith.select %975, %976, %884 : vector<8x128xi1>, vector<8x128xf32>
    %978 = arith.cmpi eq, %140, %956 : vector<8x128xi32>
    %cst_142 = arith.constant 0xFF800000 : f32
    %979 = vector.broadcast %cst_142 : f32 to vector<8x128xf32>
    %980 = arith.select %978, %979, %887 : vector<8x128xi1>, vector<8x128xf32>
    %981 = arith.cmpf ogt, %959, %962 : vector<8x128xf32>
    %982 = arith.cmpf oeq, %959, %962 : vector<8x128xf32>
    %983 = arith.cmpi slt, %126, %128 : vector<8x128xi32>
    %984 = arith.andi %982, %983 : vector<8x128xi1>
    %985 = arith.ori %981, %984 : vector<8x128xi1>
    %986 = arith.select %985, %959, %962 : vector<8x128xi1>, vector<8x128xf32>
    %987 = arith.select %985, %126, %128 : vector<8x128xi1>, vector<8x128xi32>
    %988 = arith.cmpf ogt, %965, %968 : vector<8x128xf32>
    %989 = arith.cmpf oeq, %965, %968 : vector<8x128xf32>
    %990 = arith.cmpi slt, %130, %132 : vector<8x128xi32>
    %991 = arith.andi %989, %990 : vector<8x128xi1>
    %992 = arith.ori %988, %991 : vector<8x128xi1>
    %993 = arith.select %992, %965, %968 : vector<8x128xi1>, vector<8x128xf32>
    %994 = arith.select %992, %130, %132 : vector<8x128xi1>, vector<8x128xi32>
    %995 = arith.cmpf ogt, %971, %974 : vector<8x128xf32>
    %996 = arith.cmpf oeq, %971, %974 : vector<8x128xf32>
    %997 = arith.cmpi slt, %134, %136 : vector<8x128xi32>
    %998 = arith.andi %996, %997 : vector<8x128xi1>
    %999 = arith.ori %995, %998 : vector<8x128xi1>
    %1000 = arith.select %999, %971, %974 : vector<8x128xi1>, vector<8x128xf32>
    %1001 = arith.select %999, %134, %136 : vector<8x128xi1>, vector<8x128xi32>
    %1002 = arith.cmpf ogt, %977, %980 : vector<8x128xf32>
    %1003 = arith.cmpf oeq, %977, %980 : vector<8x128xf32>
    %1004 = arith.cmpi slt, %138, %140 : vector<8x128xi32>
    %1005 = arith.andi %1003, %1004 : vector<8x128xi1>
    %1006 = arith.ori %1002, %1005 : vector<8x128xi1>
    %1007 = arith.select %1006, %977, %980 : vector<8x128xi1>, vector<8x128xf32>
    %1008 = arith.select %1006, %138, %140 : vector<8x128xi1>, vector<8x128xi32>
    %1009 = arith.cmpf ogt, %986, %993 : vector<8x128xf32>
    %1010 = arith.cmpf oeq, %986, %993 : vector<8x128xf32>
    %1011 = arith.cmpi slt, %987, %994 : vector<8x128xi32>
    %1012 = arith.andi %1010, %1011 : vector<8x128xi1>
    %1013 = arith.ori %1009, %1012 : vector<8x128xi1>
    %1014 = arith.select %1013, %986, %993 : vector<8x128xi1>, vector<8x128xf32>
    %1015 = arith.select %1013, %987, %994 : vector<8x128xi1>, vector<8x128xi32>
    %1016 = arith.cmpf ogt, %1000, %1007 : vector<8x128xf32>
    %1017 = arith.cmpf oeq, %1000, %1007 : vector<8x128xf32>
    %1018 = arith.cmpi slt, %1001, %1008 : vector<8x128xi32>
    %1019 = arith.andi %1017, %1018 : vector<8x128xi1>
    %1020 = arith.ori %1016, %1019 : vector<8x128xi1>
    %1021 = arith.select %1020, %1000, %1007 : vector<8x128xi1>, vector<8x128xf32>
    %1022 = arith.select %1020, %1001, %1008 : vector<8x128xi1>, vector<8x128xi32>
    %1023 = arith.cmpf ogt, %1014, %1021 : vector<8x128xf32>
    %1024 = arith.cmpf oeq, %1014, %1021 : vector<8x128xf32>
    %1025 = arith.cmpi slt, %1015, %1022 : vector<8x128xi32>
    %1026 = arith.andi %1024, %1025 : vector<8x128xi1>
    %1027 = arith.ori %1023, %1026 : vector<8x128xi1>
    %1028 = arith.select %1027, %1014, %1021 : vector<8x128xi1>, vector<8x128xf32>
    %1029 = arith.select %1027, %1015, %1022 : vector<8x128xi1>, vector<8x128xi32>
    %cst_143 = arith.constant dense<0xFF800000> : vector<128xf32>
    %1030 = vector.multi_reduction <maximumf>, %1028, %cst_143 [0] : vector<8x128xf32> to vector<128xf32>
    %1031 = vector.shape_cast %1030 : vector<128xf32> to vector<1x128xf32>
    %1032 = vector.broadcast %1031 : vector<1x128xf32> to vector<8x128xf32>
    %1033 = arith.cmpf oeq, %1028, %1032 : vector<8x128xf32>
    %c64_i32_144 = arith.constant 64 : i32
    %1034 = vector.broadcast %c64_i32_144 : i32 to vector<8x128xi32>
    %1035 = arith.select %1033, %1029, %1034 : vector<8x128xi1>, vector<8x128xi32>
    %cst_145 = arith.constant dense<2147483647> : vector<128xi32>
    %1036 = vector.multi_reduction <minsi>, %1035, %cst_145 [0] : vector<8x128xi32> to vector<128xi32>
    %1037 = vector.shape_cast %1036 : vector<128xi32> to vector<1x128xi32>
    %c9_i32 = arith.constant 9 : i32
    %1038 = vector.broadcast %c9_i32 : i32 to vector<10x128xi32>
    %1039 = arith.cmpi eq, %141, %1038 : vector<10x128xi32>
    %1040 = vector.shape_cast %1031 : vector<1x128xf32> to vector<1x128xf32>
    %1041 = vector.broadcast %1040 : vector<1x128xf32> to vector<10x128xf32>
    %1042 = arith.select %1039, %1041, %949 : vector<10x128xi1>, vector<10x128xf32>
    %c9_i32_146 = arith.constant 9 : i32
    %1043 = vector.broadcast %c9_i32_146 : i32 to vector<10x128xi32>
    %1044 = arith.cmpi eq, %141, %1043 : vector<10x128xi32>
    %1045 = vector.shape_cast %1037 : vector<1x128xi32> to vector<1x128xi32>
    %1046 = vector.broadcast %1045 : vector<1x128xi32> to vector<10x128xi32>
    %1047 = arith.select %1044, %1046, %954 : vector<10x128xi1>, vector<10x128xi32>
    %1048 = vector.extract_strided_slice %1042 {offsets = [0, 0], sizes = [1, 128], strides = [1, 1]} : vector<10x128xf32> to vector<1x128xf32>
    %1049 = vector.broadcast %1048 : vector<1x128xf32> to vector<10x128xf32>
    %1050 = arith.subf %1042, %1049 : vector<10x128xf32>
    %1051 = math.exp %1050 : vector<10x128xf32>
    %cst_147 = arith.constant dense<0.000000e+00> : vector<128xf32>
    %1052 = vector.multi_reduction <add>, %1051, %cst_147 [0] : vector<10x128xf32> to vector<128xf32>
    %1053 = vector.shape_cast %1052 : vector<128xf32> to vector<1x128xf32>
    %1054 = tpu.reciprocal %1053 {approx = true} : vector<1x128xf32> -> vector<1x128xf32>
    %1055 = vector.broadcast %1054 : vector<1x128xf32> to vector<10x128xf32>
    %1056 = arith.mulf %1051, %1055 : vector<10x128xf32>
    %c0_148 = arith.constant 0 : index
    %c0_149 = arith.constant 0 : index
    %1057 = vector.load %arg5[%c0_148, %c0_149] : memref<10x128xi32, #tpu.memory_space<vmem>>, vector<10x128xi32>
    tpu.vector_store %arg5[%c0_148, %c0_149], %1047 {strides = array<i32>} : memref<10x128xi32, #tpu.memory_space<vmem>>, vector<10x128xi32>,
    %c0_150 = arith.constant 0 : index
    %c0_151 = arith.constant 0 : index
    %1058 = vector.load %arg6[%c0_150, %c0_151] : memref<10x128xf32, #tpu.memory_space<vmem>>, vector<10x128xf32>
    tpu.vector_store %arg6[%c0_150, %c0_151], %1056 {strides = array<i32>} : memref<10x128xf32, #tpu.memory_space<vmem>>, vector<10x128xf32>,
    return
  }
  func.func @transform_0(%arg0: i32) -> (i32, i32) {
    %c0_i32 = arith.constant 0 : i32
    %c0_i32_0 = arith.constant 0 : i32
    return %c0_i32, %arg0 : i32, i32
  }
  func.func @transform_1(%arg0: i32) -> (i32, i32) {
    %c0_i32 = arith.constant 0 : i32
    %c0_i32_0 = arith.constant 0 : i32
    %c0_i32_1 = arith.constant 0 : i32
    return %c0_i32, %c0_i32_0 : i32, i32
  }
  func.func @transform_2(%arg0: i32) -> (i32, i32) {
    %c0_i32 = arith.constant 0 : i32
    %c0_i32_0 = arith.constant 0 : i32
    %c0_i32_1 = arith.constant 0 : i32
    return %c0_i32, %c0_i32_0 : i32, i32
  }
  func.func @transform_3(%arg0: i32) -> (i32, i32) {
    %c0_i32 = arith.constant 0 : i32
    %c0_i32_0 = arith.constant 0 : i32
    return %c0_i32, %arg0 : i32, i32
  }
  func.func @transform_4(%arg0: i32) -> (i32, i32) {
    %c0_i32 = arith.constant 0 : i32
    %c0_i32_0 = arith.constant 0 : i32
    return %c0_i32, %arg0 : i32, i32
  }
  func.func @transform_5(%arg0: i32) -> (i32, i32) {
    %c0_i32 = arith.constant 0 : i32
    %c0_i32_0 = arith.constant 0 : i32
    return %c0_i32, %arg0 : i32, i32
  }
}

</mosaic_0001>

<llo_original>
// kernel: tpu_custom_call.1
$region0: #{tpu_custom_call.1}
  #allocation0 [shape = 'u32[]', space=smem, size = 0x4, offset = 0x4, fixed_abs, tag = 'smem constant byte address 0x4 - core index']
  #allocation1 [shape = 'u32[144,128]{1,0:T(1,128)}', space=vmem, size = 0x12000, scoped, tag = 'internal scratch']
  %s0 = inlined_call_operand.hbm [shape: f32[32,1024], index: 0, kind: input, shape index: {}]
  %s1 = inlined_call_operand.vmem [shape: f32[32,32], index: 1, kind: input, shape index: {}]
  %s2 = inlined_call_operand.vmem [shape: f32[32,1], index: 2, kind: input, shape index: {}]
  %s3 = inlined_call_operand.vmem [shape: s32[8,128], index: 3, kind: input, shape index: {}]
  %s4 = inlined_call_operand.hbm [shape: s32[10,128], index: 4, kind: output, shape index: {0}]
  %s5 = inlined_call_operand.hbm [shape: f32[10,128], index: 5, kind: output, shape index: {1}]
  %6 = xla_tuple %s4, %s5
  %s7 = sld [smem:[#allocation0]]
  $region38: #{tpu_custom_call.1} parent=0
    _
  %s9 = ssub.s32 1, %s7
  %s10 = scalar_select 0, %s9, %s7
  $region1: #{tpu_custom_call.1} parent=0
    #allocation2 [shape = 'u8[131072]{0}', space=vmem, size = 0x20000, scoped, tag = 'input window, operand 0, single buffered']
    #allocation3 [shape = 's32[1]{0}', space=sflag, size = 0x4, scoped, tag = 'scoped memory for tpu_custom_call.1']
    #allocation4 [shape = 's32[1]{0}', space=sflag, size = 0x4, scoped, tag = 'scoped memory for tpu_custom_call.1']
    #allocation5 [shape = 'u8[8192]{0}', space=vmem, size = 0x2000, scoped, tag = 'output window, operand 0, single buffered']
    #allocation6 [shape = 'u8[8192]{0}', space=vmem, size = 0x2000, scoped, tag = 'output window, operand 1, single buffered']
    #allocation7 [shape = 's32[1]{0}', space=sflag, size = 0x4, scoped, tag = 'scoped memory for tpu_custom_call.1']
    %11 = vsyncpa [#allocation3], 0
    %12 = vsyncpa [#allocation4], 0
    %13 = vsyncpa [#allocation7], 0
    // Predicated region
    $region2: #{tpu_custom_call.1} parent=1 // pred_check
      _
    $region3: #{tpu_custom_call.1} parent=1 // pred_check_branch
      %15 = sbr.rel (0) target = $region5
    $region4: #{tpu_custom_call.1} parent=1 // pred_region
      %s17 = ssub.s32 4096, 4096
      %18 = vsyncadd [#allocation3], %s17
      %s19 = sshll.u32 [#allocation2], 4
      %s20 = int_to_ptr.vmem [resolvable:$true] %s19
      %25 = dma.hbm_to_vmem [thread:$0]  %s0, 4096, %s20, [#allocation3], 1024, 1024, 64
    $region5: #{tpu_custom_call.1} parent=1 // pred_fallthru
      _
    // Predicated region
    $region6: #{tpu_custom_call.1} parent=1 // pred_check
      _
    $region7: #{tpu_custom_call.1} parent=1 // pred_check_branch
      %27 = sbr.rel (0) target = $region9
    $region8: #{tpu_custom_call.1} parent=1 // pred_region
      _
    $region9: #{tpu_custom_call.1} parent=1 // pred_fallthru
      _
    // Predicated region
    $region10: #{tpu_custom_call.1} parent=1 // pred_check
      _
    $region11: #{tpu_custom_call.1} parent=1 // pred_check_branch
      %29 = sbr.rel (0) target = $region13
    $region12: #{tpu_custom_call.1} parent=1 // pred_region
      _
    $region13: #{tpu_custom_call.1} parent=1 // pred_fallthru
      _
    // Predicated region
    $region14: #{tpu_custom_call.1} parent=1 // pred_check
      _
    $region15: #{tpu_custom_call.1} parent=1 // pred_check_branch
      %31 = sbr.rel (0) target = $region17
    $region16: #{tpu_custom_call.1} parent=1 // pred_region
      _
    $region17: #{tpu_custom_call.1} parent=1 // pred_fallthru
      _
    // Predicated region
    $region18: #{tpu_custom_call.1} parent=1 // pred_check
      _
    $region19: #{tpu_custom_call.1} parent=1 // pred_check_branch
      %33 = sbr.rel (0) target = $region21
    $region20: #{tpu_custom_call.1} parent=1 // pred_region
      %34 = dma.done [#allocation3], 4096
    $region21: #{tpu_custom_call.1} parent=1 // pred_fallthru
      _
    %v35 = vld [vmem:[%s1] sm:$0xff]
    %v36 = vld [vmem:[%s1 + $0x8] sm:$0xff]
    %v37 = vld [vmem:[%s1 + $0x10] sm:$0xff]
    %v38 = vld [vmem:[%s1 + $0x18] sm:$0xff]
    %v39 = vld [vmem:[#allocation2] sm:$0xff]
    %v40 = vld [vmem:[#allocation2 + $0x8] sm:$0xff]
    %v41 = vld [vmem:[#allocation2 + $0x10] sm:$0xff]
    %v42 = vld [vmem:[#allocation2 + $0x18] sm:$0xff]
    %v43 = vld [vmem:[#allocation2 + $0x20] sm:$0xff]
    %v44 = vld [vmem:[#allocation2 + $0x28] sm:$0xff]
    %v45 = vld [vmem:[#allocation2 + $0x30] sm:$0xff]
    %v46 = vld [vmem:[#allocation2 + $0x38] sm:$0xff]
    %v47 = vld [vmem:[#allocation2 + $0x40] sm:$0xff]
    %v48 = vld [vmem:[#allocation2 + $0x48] sm:$0xff]
    %v49 = vld [vmem:[#allocation2 + $0x50] sm:$0xff]
    %v50 = vld [vmem:[#allocation2 + $0x58] sm:$0xff]
    %v51 = vld [vmem:[#allocation2 + $0x60] sm:$0xff]
    %v52 = vld [vmem:[#allocation2 + $0x68] sm:$0xff]
    %v53 = vld [vmem:[#allocation2 + $0x70] sm:$0xff]
    %v54 = vld [vmem:[#allocation2 + $0x78] sm:$0xff]
    %v55 = vld [vmem:[#allocation2 + $0x80] sm:$0xff]
    %v56 = vld [vmem:[#allocation2 + $0x88] sm:$0xff]
    %v57 = vld [vmem:[#allocation2 + $0x90] sm:$0xff]
    %v58 = vld [vmem:[#allocation2 + $0x98] sm:$0xff]
    %v59 = vld [vmem:[#allocation2 + $0xa0] sm:$0xff]
    %v60 = vld [vmem:[#allocation2 + $0xa8] sm:$0xff]
    %v61 = vld [vmem:[#allocation2 + $0xb0] sm:$0xff]
    %v62 = vld [vmem:[#allocation2 + $0xb8] sm:$0xff]
    %v63 = vld [vmem:[#allocation2 + $0xc0] sm:$0xff]
    %v64 = vld [vmem:[#allocation2 + $0xc8] sm:$0xff]
    %v65 = vld [vmem:[#allocation2 + $0xd0] sm:$0xff]
    %v66 = vld [vmem:[#allocation2 + $0xd8] sm:$0xff]
    %v67 = vld [vmem:[#allocation2 + $0xe0] sm:$0xff]
    %v68 = vld [vmem:[#allocation2 + $0xe8] sm:$0xff]
    %v69 = vld [vmem:[#allocation2 + $0xf0] sm:$0xff]
    %v70 = vld [vmem:[#allocation2 + $0xf8] sm:$0xff]
    %v71 = vld [vmem:[%s2] sm:$0xff]
    %v72 = vld [vmem:[%s2 + $0x8] sm:$0xff]
    %v73 = vld [vmem:[%s2 + $0x10] sm:$0xff]
    %v74 = vld [vmem:[%s2 + $0x18] sm:$0xff]
    %76 = vset.pattern.permute.xlu0 0
    %77 = vperm.xlu0 %76, %v71
    %v78 = vpop.permute.xlu0 %77
    %81 = vset.pattern.permute.xlu0 0
    %82 = vperm.xlu0 %81, %v72
    %v83 = vpop.permute.xlu0 %82
    %86 = vset.pattern.permute.xlu0 0
    %87 = vperm.xlu0 %86, %v73
    %v88 = vpop.permute.xlu0 %87
    %91 = vset.pattern.permute.xlu0 0
    %92 = vperm.xlu0 %91, %v74
    %v93 = vpop.permute.xlu0 %92
    %vm95 = vcmask 261120
    %v97 = vsel %vm95, %v35, 0
    %v100 = vsel %vm95, %v36, 0
    %v103 = vsel %vm95, %v37, 0
    %v106 = vsel %vm95, %v38, 0
    %108 = vmatprep.subr.mxu0 %v40
    %109 = vmatpush1.msra.mxu0 %v39
    %110 = vmatprep.subr.mxu0 %v48
    %111 = vmatpush1.msra.mxu0 %v47
    %112 = vmatprep.subr.mxu0 %v56
    %113 = vmatpush1.msra.mxu0 %v55
    %114 = vmatprep.subr.mxu0 %v64
    %115 = vmatpush1.msra.mxu0 %v63
    %116 = vmatprep.subr.mxu0 0.0
    %117 = vmatpush1.msra.mxu0 0.0
    %118 = vmatprep.subr.mxu0 0.0
    %119 = vmatpush1.msra.mxu0 0.0
    %120 = vmatprep.subr.mxu0 0.0
    %121 = vmatpush1.msra.mxu0 0.0
    %122 = vmatprep.subr.mxu0 0.0
    %123 = vmatpush1.msra.mxu0 0.0
    %124 = vmatprep.subr.mxu0 0.0
    %125 = vmatpush1.msra.mxu0 0.0
    %126 = vmatprep.subr.mxu0 0.0
    %127 = vmatpush1.msra.mxu0 0.0
    %128 = vmatprep.subr.mxu0 0.0
    %129 = vmatpush1.msra.mxu0 0.0
    %130 = vmatprep.subr.mxu0 0.0
    %131 = vmatpush1.msra.mxu0 0.0
    %132 = vmatprep.subr.mxu0 0.0
    %133 = vmatpush1.msra.mxu0 0.0
    %134 = vmatprep.subr.mxu0 0.0
    %135 = vmatpush1.msra.mxu0 0.0
    %136 = vmatprep.subr.mxu0 0.0
    %137 = vmatpush1.msra.mxu0 0.0
    %138 = vmatprep.subr.mxu0 0.0
    %139 = vmatpush1.msra.mxu0 0.0
    %140 = vmatprep.subr.mxu0 0.0
    %141 = vmatpush1.msra.mxu0 0.0
    %142 = vmatprep.subr.mxu0 0.0
    %143 = vmatpush1.msra.mxu0 0.0
    %144 = vmatprep.subr.mxu0 0.0
    %145 = vmatpush1.msra.mxu0 0.0
    %146 = vmatprep.subr.mxu0 0.0
    %147 = vmatpush1.msra.mxu0 0.0
    %148 = vmatprep.subr.mxu0 0.0
    %149 = vmatpush1.msra.mxu0 0.0
    %150 = vmatprep.subr.mxu0 0.0
    %151 = vmatpush1.msra.mxu0 0.0
    %152 = vmatprep.subr.mxu0 0.0
    %153 = vmatpush1.msra.mxu0 0.0
    %154 = vmatprep.subr.mxu0 0.0
    %155 = vmatpush1.msra.mxu0 0.0
    %156 = vmatprep.subr.mxu0 0.0
    %157 = vmatpush1.msra.mxu0 0.0
    %158 = vmatprep.subr.mxu0 0.0
    %159 = vmatpush1.msra.mxu0 0.0
    %160 = vmatprep.subr.mxu0 0.0
    %161 = vmatpush1.msra.mxu0 0.0
    %162 = vmatprep.subr.mxu0 0.0
    %163 = vmatpush1.msra.mxu0 0.0
    %164 = vmatprep.subr.mxu0 0.0
    %165 = vmatpush1.msra.mxu0 0.0
    %166 = vmatprep.subr.mxu0 0.0
    %167 = vmatpush1.msra.mxu0 0.0
    %168 = vmatprep.subr.mxu0 0.0
    %169 = vmatpush1.msra.mxu0 0.0
    %170 = vmatprep.subr.mxu0 0.0
    %171 = vmatpush1.msra.mxu0 0.0
    %172 = vmatprep.mubr.f32.mxu0 0.0
    %173 = vmatmul.mubr.f32.gmra.mrb[0].mxu0 %v97
    %v174 = vpop.f32.mrb[0].mxu0
    %v175 = vadd.f32 %v78, %v174
    %v176 = vpop.f32.mrb[0].mxu0
    %v177 = vadd.f32 %v78, %v176
    %178 = vmatprep.mubr.f32.mxu0 0.0
    %179 = vmatmul.mubr.f32.gmra.mrb[0].mxu0 %v100
    %v180 = vpop.f32.mrb[0].mxu0
    %v181 = vadd.f32 %v83, %v180
    %v182 = vpop.f32.mrb[0].mxu0
    %v183 = vadd.f32 %v83, %v182
    %184 = vmatprep.mubr.f32.mxu0 0.0
    %185 = vmatmul.mubr.f32.gmra.mrb[0].mxu0 %v103
    %v186 = vpop.f32.mrb[0].mxu0
    %v187 = vadd.f32 %v88, %v186
    %v188 = vpop.f32.mrb[0].mxu0
    %v189 = vadd.f32 %v88, %v188
    %190 = vmatprep.mubr.f32.mxu0 0.0
    %191 = vmatmul.mubr.f32.gmra.mrb[0].mxu0 %v106
    %v192 = vpop.f32.mrb[0].mxu0
    %v193 = vadd.f32 %v93, %v192
    %v194 = vpop.f32.mrb[0].mxu0
    %v195 = vadd.f32 %v93, %v194
    %196 = vdwg.mxu0
    %197 = vmatprep.subr.mxu0 %v42
    %198 = vmatpush1.msra.mxu0 %v41
    %199 = vmatprep.subr.mxu0 %v50
    %200 = vmatpush1.msra.mxu0 %v49
    %201 = vmatprep.subr.mxu0 %v58
    %202 = vmatpush1.msra.mxu0 %v57
    %203 = vmatprep.subr.mxu0 %v66
    %204 = vmatpush1.msra.mxu0 %v65
    %205 = vmatprep.subr.mxu0 0.0
    %206 = vmatpush1.msra.mxu0 0.0
    %207 = vmatprep.subr.mxu0 0.0
    %208 = vmatpush1.msra.mxu0 0.0
    %209 = vmatprep.subr.mxu0 0.0
    %210 = vmatpush1.msra.mxu0 0.0
    %211 = vmatprep.subr.mxu0 0.0
    %212 = vmatpush1.msra.mxu0 0.0
    %213 = vmatprep.subr.mxu0 0.0
    %214 = vmatpush1.msra.mxu0 0.0
    %215 = vmatprep.subr.mxu0 0.0
    %216 = vmatpush1.msra.mxu0 0.0
    %217 = vmatprep.subr.mxu0 0.0
    %218 = vmatpush1.msra.mxu0 0.0
    %219 = vmatprep.subr.mxu0 0.0
    %220 = vmatpush1.msra.mxu0 0.0
    %221 = vmatprep.subr.mxu0 0.0
    %222 = vmatpush1.msra.mxu0 0.0
    %223 = vmatprep.subr.mxu0 0.0
    %224 = vmatpush1.msra.mxu0 0.0
    %225 = vmatprep.subr.mxu0 0.0
    %226 = vmatpush1.msra.mxu0 0.0
    %227 = vmatprep.subr.mxu0 0.0
    %228 = vmatpush1.msra.mxu0 0.0
    %229 = vmatprep.subr.mxu0 0.0
    %230 = vmatpush1.msra.mxu0 0.0
    %231 = vmatprep.subr.mxu0 0.0
    %232 = vmatpush1.msra.mxu0 0.0
    %233 = vmatprep.subr.mxu0 0.0
    %234 = vmatpush1.msra.mxu0 0.0
    %235 = vmatprep.subr.mxu0 0.0
    %236 = vmatpush1.msra.mxu0 0.0
    %237 = vmatprep.subr.mxu0 0.0
    %238 = vmatpush1.msra.mxu0 0.0
    %239 = vmatprep.subr.mxu0 0.0
    %240 = vmatpush1.msra.mxu0 0.0
    %241 = vmatprep.subr.mxu0 0.0
    %242 = vmatpush1.msra.mxu0 0.0
    %243 = vmatprep.subr.mxu0 0.0
    %244 = vmatpush1.msra.mxu0 0.0
    %245 = vmatprep.subr.mxu0 0.0
    %246 = vmatpush1.msra.mxu0 0.0
    %247 = vmatprep.subr.mxu0 0.0
    %248 = vmatpush1.msra.mxu0 0.0
    %249 = vmatprep.subr.mxu0 0.0
    %250 = vmatpush1.msra.mxu0 0.0
    %251 = vmatprep.subr.mxu0 0.0
    %252 = vmatpush1.msra.mxu0 0.0
    %253 = vmatprep.subr.mxu0 0.0
    %254 = vmatpush1.msra.mxu0 0.0
    %255 = vmatprep.subr.mxu0 0.0
    %256 = vmatpush1.msra.mxu0 0.0
    %257 = vmatprep.subr.mxu0 0.0
    %258 = vmatpush1.msra.mxu0 0.0
    %259 = vmatprep.subr.mxu0 0.0
    %260 = vmatpush1.msra.mxu0 0.0
    %261 = vmatprep.mubr.f32.mxu0 0.0
    %262 = vmatmul.mubr.f32.gmra.mrb[0].mxu0 %v97
    %v263 = vpop.f32.mrb[0].mxu0
    %v264 = vadd.f32 %v78, %v263
    %v265 = vpop.f32.mrb[0].mxu0
    %v266 = vadd.f32 %v78, %v265
    %267 = vmatprep.mubr.f32.mxu0 0.0
    %268 = vmatmul.mubr.f32.gmra.mrb[0].mxu0 %v100
    %v269 = vpop.f32.mrb[0].mxu0
    %v270 = vadd.f32 %v83, %v269
    %v271 = vpop.f32.mrb[0].mxu0
    %v272 = vadd.f32 %v83, %v271
    %273 = vmatprep.mubr.f32.mxu0 0.0
    %274 = vmatmul.mubr.f32.gmra.mrb[0].mxu0 %v103
    %v275 = vpop.f32.mrb[0].mxu0
    %v276 = vadd.f32 %v88, %v275
    %v277 = vpop.f32.mrb[0].mxu0
    %v278 = vadd.f32 %v88, %v277
    %279 = vmatprep.mubr.f32.mxu0 0.0
    %280 = vmatmul.mubr.f32.gmra.mrb[0].mxu0 %v106
    %v281 = vpop.f32.mrb[0].mxu0
    %v282 = vadd.f32 %v93, %v281
    %v283 = vpop.f32.mrb[0].mxu0
    %v284 = vadd.f32 %v93, %v283
    %285 = vdwg.mxu0
    %286 = vmatprep.subr.mxu0 %v44
    %287 = vmatpush1.msra.mxu0 %v43
    %288 = vmatprep.subr.mxu0 %v52
    %289 = vmatpush1.msra.mxu0 %v51
    %290 = vmatprep.subr.mxu0 %v60
    %291 = vmatpush1.msra.mxu0 %v59
    %292 = vmatprep.subr.mxu0 %v68
    %293 = vmatpush1.msra.mxu0 %v67
    %294 = vmatprep.subr.mxu0 0.0
    %295 = vmatpush1.msra.mxu0 0.0
    %296 = vmatprep.subr.mxu0 0.0
    %297 = vmatpush1.msra.mxu0 0.0
    %298 = vmatprep.subr.mxu0 0.0
    %299 = vmatpush1.msra.mxu0 0.0
    %300 = vmatprep.subr.mxu0 0.0
    %301 = vmatpush1.msra.mxu0 0.0
    %302 = vmatprep.subr.mxu0 0.0
    %303 = vmatpush1.msra.mxu0 0.0
    %304 = vmatprep.subr.mxu0 0.0
    %305 = vmatpush1.msra.mxu0 0.0
    %306 = vmatprep.subr.mxu0 0.0
    %307 = vmatpush1.msra.mxu0 0.0
    %308 = vmatprep.subr.mxu0 0.0
    %309 = vmatpush1.msra.mxu0 0.0
    %310 = vmatprep.subr.mxu0 0.0
    %311 = vmatpush1.msra.mxu0 0.0
    %312 = vmatprep.subr.mxu0 0.0
    %313 = vmatpush1.msra.mxu0 0.0
    %314 = vmatprep.subr.mxu0 0.0
    %315 = vmatpush1.msra.mxu0 0.0
    %316 = vmatprep.subr.mxu0 0.0
    %317 = vmatpush1.msra.mxu0 0.0
    %318 = vmatprep.subr.mxu0 0.0
    %319 = vmatpush1.msra.mxu0 0.0
    %320 = vmatprep.subr.mxu0 0.0
    %321 = vmatpush1.msra.mxu0 0.0
    %322 = vmatprep.subr.mxu0 0.0
    %323 = vmatpush1.msra.mxu0 0.0
    %324 = vmatprep.subr.mxu0 0.0
    %325 = vmatpush1.msra.mxu0 0.0
    %326 = vmatprep.subr.mxu0 0.0
    %327 = vmatpush1.msra.mxu0 0.0
    %328 = vmatprep.subr.mxu0 0.0
    %329 = vmatpush1.msra.mxu0 0.0
    %330 = vmatprep.subr.mxu0 0.0
    %331 = vmatpush1.msra.mxu0 0.0
    %332 = vmatprep.subr.mxu0 0.0
    %333 = vmatpush1.msra.mxu0 0.0
    %334 = vmatprep.subr.mxu0 0.0
    %335 = vmatpush1.msra.mxu0 0.0
    %336 = vmatprep.subr.mxu0 0.0
    %337 = vmatpush1.msra.mxu0 0.0
    %338 = vmatprep.subr.mxu0 0.0
    %339 = vmatpush1.msra.mxu0 0.0
    %340 = vmatprep.subr.mxu0 0.0
    %341 = vmatpush1.msra.mxu0 0.0
    %342 = vmatprep.subr.mxu0 0.0
    %343 = vmatpush1.msra.mxu0 0.0
    %344 = vmatprep.subr.mxu0 0.0
    %345 = vmatpush1.msra.mxu0 0.0
    %346 = vmatprep.subr.mxu0 0.0
    %347 = vmatpush1.msra.mxu0 0.0
    %348 = vmatprep.subr.mxu0 0.0
    %349 = vmatpush1.msra.mxu0 0.0
    %350 = vmatprep.mubr.f32.mxu0 0.0
    %351 = vmatmul.mubr.f32.gmra.mrb[0].mxu0 %v97
    %v352 = vpop.f32.mrb[0].mxu0
    %v353 = vadd.f32 %v78, %v352
    %v354 = vpop.f32.mrb[0].mxu0
    %v355 = vadd.f32 %v78, %v354
    %356 = vmatprep.mubr.f32.mxu0 0.0
    %357 = vmatmul.mubr.f32.gmra.mrb[0].mxu0 %v100
    %v358 = vpop.f32.mrb[0].mxu0
    %v359 = vadd.f32 %v83, %v358
    %v360 = vpop.f32.mrb[0].mxu0
    %v361 = vadd.f32 %v83, %v360
    %362 = vmatprep.mubr.f32.mxu0 0.0
    %363 = vmatmul.mubr.f32.gmra.mrb[0].mxu0 %v103
    %v364 = vpop.f32.mrb[0].mxu0
    %v365 = vadd.f32 %v88, %v364
    %v366 = vpop.f32.mrb[0].mxu0
    %v367 = vadd.f32 %v88, %v366
    %368 = vmatprep.mubr.f32.mxu0 0.0
    %369 = vmatmul.mubr.f32.gmra.mrb[0].mxu0 %v106
    %v370 = vpop.f32.mrb[0].mxu0
    %v371 = vadd.f32 %v93, %v370
    %v372 = vpop.f32.mrb[0].mxu0
    %v373 = vadd.f32 %v93, %v372
    %374 = vdwg.mxu0
    %375 = vmatprep.subr.mxu0 %v46
    %376 = vmatpush1.msra.mxu0 %v45
    %377 = vmatprep.subr.mxu0 %v54
    %378 = vmatpush1.msra.mxu0 %v53
    %379 = vmatprep.subr.mxu0 %v62
    %380 = vmatpush1.msra.mxu0 %v61
    %381 = vmatprep.subr.mxu0 %v70
    %382 = vmatpush1.msra.mxu0 %v69
    %383 = vmatprep.subr.mxu0 0.0
    %384 = vmatpush1.msra.mxu0 0.0
    %385 = vmatprep.subr.mxu0 0.0
    %386 = vmatpush1.msra.mxu0 0.0
    %387 = vmatprep.subr.mxu0 0.0
    %388 = vmatpush1.msra.mxu0 0.0
    %389 = vmatprep.subr.mxu0 0.0
    %390 = vmatpush1.msra.mxu0 0.0
    %391 = vmatprep.subr.mxu0 0.0
    %392 = vmatpush1.msra.mxu0 0.0
    %393 = vmatprep.subr.mxu0 0.0
    %394 = vmatpush1.msra.mxu0 0.0
    %395 = vmatprep.subr.mxu0 0.0
    %396 = vmatpush1.msra.mxu0 0.0
    %397 = vmatprep.subr.mxu0 0.0
    %398 = vmatpush1.msra.mxu0 0.0
    %399 = vmatprep.subr.mxu0 0.0
    %400 = vmatpush1.msra.mxu0 0.0
    %401 = vmatprep.subr.mxu0 0.0
    %402 = vmatpush1.msra.mxu0 0.0
    %403 = vmatprep.subr.mxu0 0.0
    %404 = vmatpush1.msra.mxu0 0.0
    %405 = vmatprep.subr.mxu0 0.0
    %406 = vmatpush1.msra.mxu0 0.0
    %407 = vmatprep.subr.mxu0 0.0
    %408 = vmatpush1.msra.mxu0 0.0
    %409 = vmatprep.subr.mxu0 0.0
    %410 = vmatpush1.msra.mxu0 0.0
    %411 = vmatprep.subr.mxu0 0.0
    %412 = vmatpush1.msra.mxu0 0.0
    %413 = vmatprep.subr.mxu0 0.0
    %414 = vmatpush1.msra.mxu0 0.0
    %415 = vmatprep.subr.mxu0 0.0
    %416 = vmatpush1.msra.mxu0 0.0
    %417 = vmatprep.subr.mxu0 0.0
    %418 = vmatpush1.msra.mxu0 0.0
    %419 = vmatprep.subr.mxu0 0.0
    %420 = vmatpush1.msra.mxu0 0.0
    %421 = vmatprep.subr.mxu0 0.0
    %422 = vmatpush1.msra.mxu0 0.0
    %423 = vmatprep.subr.mxu0 0.0
    %424 = vmatpush1.msra.mxu0 0.0
    %425 = vmatprep.subr.mxu0 0.0
    %426 = vmatpush1.msra.mxu0 0.0
    %427 = vmatprep.subr.mxu0 0.0
    %428 = vmatpush1.msra.mxu0 0.0
    %429 = vmatprep.subr.mxu0 0.0
    %430 = vmatpush1.msra.mxu0 0.0
    %431 = vmatprep.subr.mxu0 0.0
    %432 = vmatpush1.msra.mxu0 0.0
    %433 = vmatprep.subr.mxu0 0.0
    %434 = vmatpush1.msra.mxu0 0.0
    %435 = vmatprep.subr.mxu0 0.0
    %436 = vmatpush1.msra.mxu0 0.0
    %437 = vmatprep.subr.mxu0 0.0
    %438 = vmatpush1.msra.mxu0 0.0
    %439 = vmatprep.mubr.f32.mxu0 0.0
    %440 = vmatmul.mubr.f32.gmra.mrb[0].mxu0 %v97
    %v441 = vpop.f32.mrb[0].mxu0
    %v442 = vadd.f32 %v78, %v441
    %v443 = vpop.f32.mrb[0].mxu0
    %v444 = vadd.f32 %v78, %v443
    %445 = vmatprep.mubr.f32.mxu0 0.0
    %446 = vmatmul.mubr.f32.gmra.mrb[0].mxu0 %v100
    %v447 = vpop.f32.mrb[0].mxu0
    %v448 = vadd.f32 %v83, %v447
    %v449 = vpop.f32.mrb[0].mxu0
    %v450 = vadd.f32 %v83, %v449
    %451 = vmatprep.mubr.f32.mxu0 0.0
    %452 = vmatmul.mubr.f32.gmra.mrb[0].mxu0 %v103
    %v453 = vpop.f32.mrb[0].mxu0
    %v454 = vadd.f32 %v88, %v453
    %v455 = vpop.f32.mrb[0].mxu0
    %v456 = vadd.f32 %v88, %v455
    %457 = vmatprep.mubr.f32.mxu0 0.0
    %458 = vmatmul.mubr.f32.gmra.mrb[0].mxu0 %v106
    %v459 = vpop.f32.mrb[0].mxu0
    %v460 = vadd.f32 %v93, %v459
    %v461 = vpop.f32.mrb[0].mxu0
    %v462 = vadd.f32 %v93, %v461
    %463 = vdwg.mxu0
    %v464 = vld [vmem:[%s3] sm:$0xff]
    %vm465 = vcmp.gt.s32.totalorder %v464, 0
    %v466 = vmul.f32 %v187, %v175
    %v467 = vmul.f32 %v193, %v181
    %v468 = vmul.f32 %v189, %v175
    %v469 = vmul.f32 %v195, %v181
    %v470 = vmul.f32 %v276, %v175
    %v471 = vmul.f32 %v282, %v181
    %v472 = vmul.f32 %v278, %v175
    %v473 = vmul.f32 %v284, %v181
    %v474 = vmul.f32 %v365, %v175
    %v475 = vmul.f32 %v371, %v181
    %v476 = vmul.f32 %v367, %v175
    %v477 = vmul.f32 %v373, %v181
    %v478 = vmul.f32 %v454, %v175
    %v479 = vmul.f32 %v460, %v181
    %v480 = vmul.f32 %v456, %v175
    %v481 = vmul.f32 %v462, %v181
    %v482 = vadd.f32 %v466, %v467
    %v483 = vrot.slane %v482, 4
    %v484 = vadd.f32 %v482, %v483
    %v485 = vrot.slane %v484, 2
    %v486 = vadd.f32 %v484, %v485
    %v487 = vrot.slane %v486, 1
    %v488 = vadd.f32 %v486, %v487
    %v489 = vadd.f32 %v468, %v469
    %v490 = vrot.slane %v489, 4
    %v491 = vadd.f32 %v489, %v490
    %v492 = vrot.slane %v491, 2
    %v493 = vadd.f32 %v491, %v492
    %v494 = vrot.slane %v493, 1
    %v495 = vadd.f32 %v493, %v494
    %v496 = vadd.f32 %v470, %v471
    %v497 = vrot.slane %v496, 4
    %v498 = vadd.f32 %v496, %v497
    %v499 = vrot.slane %v498, 2
    %v500 = vadd.f32 %v498, %v499
    %v501 = vrot.slane %v500, 1
    %v502 = vadd.f32 %v500, %v501
    %v503 = vadd.f32 %v472, %v473
    %v504 = vrot.slane %v503, 4
    %v505 = vadd.f32 %v503, %v504
    %v506 = vrot.slane %v505, 2
    %v507 = vadd.f32 %v505, %v506
    %v508 = vrot.slane %v507, 1
    %v509 = vadd.f32 %v507, %v508
    %v510 = vadd.f32 %v474, %v475
    %v511 = vrot.slane %v510, 4
    %v512 = vadd.f32 %v510, %v511
    %v513 = vrot.slane %v512, 2
    %v514 = vadd.f32 %v512, %v513
    %v515 = vrot.slane %v514, 1
    %v516 = vadd.f32 %v514, %v515
    %v517 = vadd.f32 %v476, %v477
    %v518 = vrot.slane %v517, 4
    %v519 = vadd.f32 %v517, %v518
    %v520 = vrot.slane %v519, 2
    %v521 = vadd.f32 %v519, %v520
    %v522 = vrot.slane %v521, 1
    %v523 = vadd.f32 %v521, %v522
    %v524 = vadd.f32 %v478, %v479
    %v525 = vrot.slane %v524, 4
    %v526 = vadd.f32 %v524, %v525
    %v527 = vrot.slane %v526, 2
    %v528 = vadd.f32 %v526, %v527
    %v529 = vrot.slane %v528, 1
    %v530 = vadd.f32 %v528, %v529
    %v531 = vadd.f32 %v480, %v481
    %v532 = vrot.slane %v531, 4
    %v533 = vadd.f32 %v531, %v532
    %v534 = vrot.slane %v533, 2
    %v535 = vadd.f32 %v533, %v534
    %v536 = vrot.slane %v535, 1
    %v537 = vadd.f32 %v535, %v536
    %v538 = vmul.f32 %v488, 0.25
    %v539 = vmul.f32 %v495, 0.25
    %v540 = vmul.f32 %v502, 0.25
    %v541 = vmul.f32 %v509, 0.25
    %v542 = vmul.f32 %v516, 0.25
    %v543 = vmul.f32 %v523, 0.25
    %v544 = vmul.f32 %v530, 0.25
    %v545 = vmul.f32 %v537, 0.25
    %v546 = vsel %vm465, 1, 0
    %vm547 = vcmp.eq.s32.totalorder %v546, 1
    %v548 = vrot.slane %v546, 1
    %v549 = vrot.slane %v546, 2
    %v550 = vrot.slane %v546, 3
    %v551 = vrot.slane %v546, 4
    %v552 = vrot.slane %v546, 5
    %v553 = vrot.slane %v546, 6
    %v554 = vrot.slane %v546, 7
    %vm555 = vcmp.ne.s32.totalorder %v546, 0
    %vm556 = vcmp.ne.s32.totalorder %v548, 0
    %vm557 = vcmp.ne.s32.totalorder %v549, 0
    %vm558 = vcmp.ne.s32.totalorder %v550, 0
    %vm559 = vcmp.ne.s32.totalorder %v551, 0
    %vm560 = vcmp.ne.s32.totalorder %v552, 0
    %vm561 = vcmp.ne.s32.totalorder %v553, 0
    %vm562 = vcmp.ne.s32.totalorder %v554, 0
    %vm563 = vmand %vm547, %vm555
    %vm564 = vmand %vm547, %vm556
    %vm565 = vmand %vm547, %vm557
    %vm566 = vmand %vm547, %vm558
    %vm567 = vmand %vm547, %vm559
    %vm568 = vmand %vm547, %vm560
    %vm569 = vmand %vm547, %vm561
    %vm570 = vmand %vm547, %vm562
    %v571 = vsel %vm563, %v538, -1e+09
    %v572 = vsel %vm564, %v539, -1e+09
    %v573 = vsel %vm565, %v540, -1e+09
    %v574 = vsel %vm566, %v541, -1e+09
    %v575 = vsel %vm567, %v542, -1e+09
    %v576 = vsel %vm568, %v543, -1e+09
    %v577 = vsel %vm569, %v544, -1e+09
    %v578 = vsel %vm570, %v545, -1e+09
    %v579 = vmul.f32 %v187, %v177
    %v580 = vmul.f32 %v193, %v183
    %v581 = vmul.f32 %v189, %v177
    %v582 = vmul.f32 %v195, %v183
    %v583 = vmul.f32 %v276, %v177
    %v584 = vmul.f32 %v282, %v183
    %v585 = vmul.f32 %v278, %v177
    %v586 = vmul.f32 %v284, %v183
    %v587 = vmul.f32 %v365, %v177
    %v588 = vmul.f32 %v371, %v183
    %v589 = vmul.f32 %v367, %v177
    %v590 = vmul.f32 %v373, %v183
    %v591 = vmul.f32 %v454, %v177
    %v592 = vmul.f32 %v460, %v183
    %v593 = vmul.f32 %v456, %v177
    %v594 = vmul.f32 %v462, %v183
    %v595 = vadd.f32 %v579, %v580
    %v596 = vrot.slane %v595, 4
    %v597 = vadd.f32 %v595, %v596
    %v598 = vrot.slane %v597, 2
    %v599 = vadd.f32 %v597, %v598
    %v600 = vrot.slane %v599, 1
    %v601 = vadd.f32 %v599, %v600
    %v602 = vadd.f32 %v581, %v582
    %v603 = vrot.slane %v602, 4
    %v604 = vadd.f32 %v602, %v603
    %v605 = vrot.slane %v604, 2
    %v606 = vadd.f32 %v604, %v605
    %v607 = vrot.slane %v606, 1
    %v608 = vadd.f32 %v606, %v607
    %v609 = vadd.f32 %v583, %v584
    %v610 = vrot.slane %v609, 4
    %v611 = vadd.f32 %v609, %v610
    %v612 = vrot.slane %v611, 2
    %v613 = vadd.f32 %v611, %v612
    %v614 = vrot.slane %v613, 1
    %v615 = vadd.f32 %v613, %v614
    %v616 = vadd.f32 %v585, %v586
    %v617 = vrot.slane %v616, 4
    %v618 = vadd.f32 %v616, %v617
    %v619 = vrot.slane %v618, 2
    %v620 = vadd.f32 %v618, %v619
    %v621 = vrot.slane %v620, 1
    %v622 = vadd.f32 %v620, %v621
    %v623 = vadd.f32 %v587, %v588
    %v624 = vrot.slane %v623, 4
    %v625 = vadd.f32 %v623, %v624
    %v626 = vrot.slane %v625, 2
    %v627 = vadd.f32 %v625, %v626
    %v628 = vrot.slane %v627, 1
    %v629 = vadd.f32 %v627, %v628
    %v630 = vadd.f32 %v589, %v590
    %v631 = vrot.slane %v630, 4
    %v632 = vadd.f32 %v630, %v631
    %v633 = vrot.slane %v632, 2
    %v634 = vadd.f32 %v632, %v633
    %v635 = vrot.slane %v634, 1
    %v636 = vadd.f32 %v634, %v635
    %v637 = vadd.f32 %v591, %v592
    %v638 = vrot.slane %v637, 4
    %v639 = vadd.f32 %v637, %v638
    %v640 = vrot.slane %v639, 2
    %v641 = vadd.f32 %v639, %v640
    %v642 = vrot.slane %v641, 1
    %v643 = vadd.f32 %v641, %v642
    %v644 = vadd.f32 %v593, %v594
    %v645 = vrot.slane %v644, 4
    %v646 = vadd.f32 %v644, %v645
    %v647 = vrot.slane %v646, 2
    %v648 = vadd.f32 %v646, %v647
    %v649 = vrot.slane %v648, 1
    %v650 = vadd.f32 %v648, %v649
    %v651 = vmul.f32 %v601, 0.25
    %v652 = vmul.f32 %v608, 0.25
    %v653 = vmul.f32 %v615, 0.25
    %v654 = vmul.f32 %v622, 0.25
    %v655 = vmul.f32 %v629, 0.25
    %v656 = vmul.f32 %v636, 0.25
    %v657 = vmul.f32 %v643, 0.25
    %v658 = vmul.f32 %v650, 0.25
    %v659 = vsel %vm570, %v651, -1e+09
    %v660 = vsel %vm563, %v652, -1e+09
    %v661 = vsel %vm564, %v653, -1e+09
    %v662 = vsel %vm565, %v654, -1e+09
    %v663 = vsel %vm566, %v655, -1e+09
    %v664 = vsel %vm567, %v656, -1e+09
    %v665 = vsel %vm568, %v657, -1e+09
    %v666 = vsel %vm569, %v658, -1e+09
    %v667 = vmul.f32 %v187, %v264
    %v668 = vmul.f32 %v193, %v270
    %v669 = vmul.f32 %v189, %v264
    %v670 = vmul.f32 %v195, %v270
    %v671 = vmul.f32 %v276, %v264
    %v672 = vmul.f32 %v282, %v270
    %v673 = vmul.f32 %v278, %v264
    %v674 = vmul.f32 %v284, %v270
    %v675 = vmul.f32 %v365, %v264
    %v676 = vmul.f32 %v371, %v270
    %v677 = vmul.f32 %v367, %v264
    %v678 = vmul.f32 %v373, %v270
    %v679 = vmul.f32 %v454, %v264
    %v680 = vmul.f32 %v460, %v270
    %v681 = vmul.f32 %v456, %v264
    %v682 = vmul.f32 %v462, %v270
    %v683 = vadd.f32 %v667, %v668
    %v684 = vrot.slane %v683, 4
    %v685 = vadd.f32 %v683, %v684
    %v686 = vrot.slane %v685, 2
    %v687 = vadd.f32 %v685, %v686
    %v688 = vrot.slane %v687, 1
    %v689 = vadd.f32 %v687, %v688
    %v690 = vadd.f32 %v669, %v670
    %v691 = vrot.slane %v690, 4
    %v692 = vadd.f32 %v690, %v691
    %v693 = vrot.slane %v692, 2
    %v694 = vadd.f32 %v692, %v693
    %v695 = vrot.slane %v694, 1
    %v696 = vadd.f32 %v694, %v695
    %v697 = vadd.f32 %v671, %v672
    %v698 = vrot.slane %v697, 4
    %v699 = vadd.f32 %v697, %v698
    %v700 = vrot.slane %v699, 2
    %v701 = vadd.f32 %v699, %v700
    %v702 = vrot.slane %v701, 1
    %v703 = vadd.f32 %v701, %v702
    %v704 = vadd.f32 %v673, %v674
    %v705 = vrot.slane %v704, 4
    %v706 = vadd.f32 %v704, %v705
    %v707 = vrot.slane %v706, 2
    %v708 = vadd.f32 %v706, %v707
    %v709 = vrot.slane %v708, 1
    %v710 = vadd.f32 %v708, %v709
    %v711 = vadd.f32 %v675, %v676
    %v712 = vrot.slane %v711, 4
    %v713 = vadd.f32 %v711, %v712
    %v714 = vrot.slane %v713, 2
    %v715 = vadd.f32 %v713, %v714
    %v716 = vrot.slane %v715, 1
    %v717 = vadd.f32 %v715, %v716
    %v718 = vadd.f32 %v677, %v678
    %v719 = vrot.slane %v718, 4
    %v720 = vadd.f32 %v718, %v719
    %v721 = vrot.slane %v720, 2
    %v722 = vadd.f32 %v720, %v721
    %v723 = vrot.slane %v722, 1
    %v724 = vadd.f32 %v722, %v723
    %v725 = vadd.f32 %v679, %v680
    %v726 = vrot.slane %v725, 4
    %v727 = vadd.f32 %v725, %v726
    %v728 = vrot.slane %v727, 2
    %v729 = vadd.f32 %v727, %v728
    %v730 = vrot.slane %v729, 1
    %v731 = vadd.f32 %v729, %v730
    %v732 = vadd.f32 %v681, %v682
    %v733 = vrot.slane %v732, 4
    %v734 = vadd.f32 %v732, %v733
    %v735 = vrot.slane %v734, 2
    %v736 = vadd.f32 %v734, %v735
    %v737 = vrot.slane %v736, 1
    %v738 = vadd.f32 %v736, %v737
    %v739 = vmul.f32 %v689, 0.25
    %v740 = vmul.f32 %v696, 0.25
    %v741 = vmul.f32 %v703, 0.25
    %v742 = vmul.f32 %v710, 0.25
    %v743 = vmul.f32 %v717, 0.25
    %v744 = vmul.f32 %v724, 0.25
    %v745 = vmul.f32 %v731, 0.25
    %v746 = vmul.f32 %v738, 0.25
    %v747 = vsel %vm569, %v739, -1e+09
    %v748 = vsel %vm570, %v740, -1e+09
    %v749 = vsel %vm563, %v741, -1e+09
    %v750 = vsel %vm564, %v742, -1e+09
    %v751 = vsel %vm565, %v743, -1e+09
    %v752 = vsel %vm566, %v744, -1e+09
    %v753 = vsel %vm567, %v745, -1e+09
    %v754 = vsel %vm568, %v746, -1e+09
    %v755 = vmul.f32 %v187, %v266
    %v756 = vmul.f32 %v193, %v272
    %v757 = vmul.f32 %v189, %v266
    %v758 = vmul.f32 %v195, %v272
    %v759 = vmul.f32 %v276, %v266
    %v760 = vmul.f32 %v282, %v272
    %v761 = vmul.f32 %v278, %v266
    %v762 = vmul.f32 %v284, %v272
    %v763 = vmul.f32 %v365, %v266
    %v764 = vmul.f32 %v371, %v272
    %v765 = vmul.f32 %v367, %v266
    %v766 = vmul.f32 %v373, %v272
    %v767 = vmul.f32 %v454, %v266
    %v768 = vmul.f32 %v460, %v272
    %v769 = vmul.f32 %v456, %v266
    %v770 = vmul.f32 %v462, %v272
    %v771 = vadd.f32 %v755, %v756
    %v772 = vrot.slane %v771, 4
    %v773 = vadd.f32 %v771, %v772
    %v774 = vrot.slane %v773, 2
    %v775 = vadd.f32 %v773, %v774
    %v776 = vrot.slane %v775, 1
    %v777 = vadd.f32 %v775, %v776
    %v778 = vadd.f32 %v757, %v758
    %v779 = vrot.slane %v778, 4
    %v780 = vadd.f32 %v778, %v779
    %v781 = vrot.slane %v780, 2
    %v782 = vadd.f32 %v780, %v781
    %v783 = vrot.slane %v782, 1
    %v784 = vadd.f32 %v782, %v783
    %v785 = vadd.f32 %v759, %v760
    %v786 = vrot.slane %v785, 4
    %v787 = vadd.f32 %v785, %v786
    %v788 = vrot.slane %v787, 2
    %v789 = vadd.f32 %v787, %v788
    %v790 = vrot.slane %v789, 1
    %v791 = vadd.f32 %v789, %v790
    %v792 = vadd.f32 %v761, %v762
    %v793 = vrot.slane %v792, 4
    %v794 = vadd.f32 %v792, %v793
    %v795 = vrot.slane %v794, 2
    %v796 = vadd.f32 %v794, %v795
    %v797 = vrot.slane %v796, 1
    %v798 = vadd.f32 %v796, %v797
    %v799 = vadd.f32 %v763, %v764
    %v800 = vrot.slane %v799, 4
    %v801 = vadd.f32 %v799, %v800
    %v802 = vrot.slane %v801, 2
    %v803 = vadd.f32 %v801, %v802
    %v804 = vrot.slane %v803, 1
    %v805 = vadd.f32 %v803, %v804
    %v806 = vadd.f32 %v765, %v766
    %v807 = vrot.slane %v806, 4
    %v808 = vadd.f32 %v806, %v807
    %v809 = vrot.slane %v808, 2
    %v810 = vadd.f32 %v808, %v809
    %v811 = vrot.slane %v810, 1
    %v812 = vadd.f32 %v810, %v811
    %v813 = vadd.f32 %v767, %v768
    %v814 = vrot.slane %v813, 4
    %v815 = vadd.f32 %v813, %v814
    %v816 = vrot.slane %v815, 2
    %v817 = vadd.f32 %v815, %v816
    %v818 = vrot.slane %v817, 1
    %v819 = vadd.f32 %v817, %v818
    %v820 = vadd.f32 %v769, %v770
    %v821 = vrot.slane %v820, 4
    %v822 = vadd.f32 %v820, %v821
    %v823 = vrot.slane %v822, 2
    %v824 = vadd.f32 %v822, %v823
    %v825 = vrot.slane %v824, 1
    %v826 = vadd.f32 %v824, %v825
    %v827 = vmul.f32 %v777, 0.25
    %v828 = vmul.f32 %v784, 0.25
    %v829 = vmul.f32 %v791, 0.25
    %v830 = vmul.f32 %v798, 0.25
    %v831 = vmul.f32 %v805, 0.25
    %v832 = vmul.f32 %v812, 0.25
    %v833 = vmul.f32 %v819, 0.25
    %v834 = vmul.f32 %v826, 0.25
    %v835 = vsel %vm568, %v827, -1e+09
    %v836 = vsel %vm569, %v828, -1e+09
    %v837 = vsel %vm570, %v829, -1e+09
    %v838 = vsel %vm563, %v830, -1e+09
    %v839 = vsel %vm564, %v831, -1e+09
    %v840 = vsel %vm565, %v832, -1e+09
    %v841 = vsel %vm566, %v833, -1e+09
    %v842 = vsel %vm567, %v834, -1e+09
    %v843 = vmul.f32 %v187, %v353
    %v844 = vmul.f32 %v193, %v359
    %v845 = vmul.f32 %v189, %v353
    %v846 = vmul.f32 %v195, %v359
    %v847 = vmul.f32 %v276, %v353
    %v848 = vmul.f32 %v282, %v359
    %v849 = vmul.f32 %v278, %v353
    %v850 = vmul.f32 %v284, %v359
    %v851 = vmul.f32 %v365, %v353
    %v852 = vmul.f32 %v371, %v359
    %v853 = vmul.f32 %v367, %v353
    %v854 = vmul.f32 %v373, %v359
    %v855 = vmul.f32 %v454, %v353
    %v856 = vmul.f32 %v460, %v359
    %v857 = vmul.f32 %v456, %v353
    %v858 = vmul.f32 %v462, %v359
    %v859 = vadd.f32 %v843, %v844
    %v860 = vrot.slane %v859, 4
    %v861 = vadd.f32 %v859, %v860
    %v862 = vrot.slane %v861, 2
    %v863 = vadd.f32 %v861, %v862
    %v864 = vrot.slane %v863, 1
    %v865 = vadd.f32 %v863, %v864
    %v866 = vadd.f32 %v845, %v846
    %v867 = vrot.slane %v866, 4
    %v868 = vadd.f32 %v866, %v867
    %v869 = vrot.slane %v868, 2
    %v870 = vadd.f32 %v868, %v869
    %v871 = vrot.slane %v870, 1
    %v872 = vadd.f32 %v870, %v871
    %v873 = vadd.f32 %v847, %v848
    %v874 = vrot.slane %v873, 4
    %v875 = vadd.f32 %v873, %v874
    %v876 = vrot.slane %v875, 2
    %v877 = vadd.f32 %v875, %v876
    %v878 = vrot.slane %v877, 1
    %v879 = vadd.f32 %v877, %v878
    %v880 = vadd.f32 %v849, %v850
    %v881 = vrot.slane %v880, 4
    %v882 = vadd.f32 %v880, %v881
    %v883 = vrot.slane %v882, 2
    %v884 = vadd.f32 %v882, %v883
    %v885 = vrot.slane %v884, 1
    %v886 = vadd.f32 %v884, %v885
    %v887 = vadd.f32 %v851, %v852
    %v888 = vrot.slane %v887, 4
    %v889 = vadd.f32 %v887, %v888
    %v890 = vrot.slane %v889, 2
    %v891 = vadd.f32 %v889, %v890
    %v892 = vrot.slane %v891, 1
    %v893 = vadd.f32 %v891, %v892
    %v894 = vadd.f32 %v853, %v854
    %v895 = vrot.slane %v894, 4
    %v896 = vadd.f32 %v894, %v895
    %v897 = vrot.slane %v896, 2
    %v898 = vadd.f32 %v896, %v897
    %v899 = vrot.slane %v898, 1
    %v900 = vadd.f32 %v898, %v899
    %v901 = vadd.f32 %v855, %v856
    %v902 = vrot.slane %v901, 4
    %v903 = vadd.f32 %v901, %v902
    %v904 = vrot.slane %v903, 2
    %v905 = vadd.f32 %v903, %v904
    %v906 = vrot.slane %v905, 1
    %v907 = vadd.f32 %v905, %v906
    %v908 = vadd.f32 %v857, %v858
    %v909 = vrot.slane %v908, 4
    %v910 = vadd.f32 %v908, %v909
    %v911 = vrot.slane %v910, 2
    %v912 = vadd.f32 %v910, %v911
    %v913 = vrot.slane %v912, 1
    %v914 = vadd.f32 %v912, %v913
    %v915 = vmul.f32 %v865, 0.25
    %v916 = vmul.f32 %v872, 0.25
    %v917 = vmul.f32 %v879, 0.25
    %v918 = vmul.f32 %v886, 0.25
    %v919 = vmul.f32 %v893, 0.25
    %v920 = vmul.f32 %v900, 0.25
    %v921 = vmul.f32 %v907, 0.25
    %v922 = vmul.f32 %v914, 0.25
    %v923 = vsel %vm567, %v915, -1e+09
    %v924 = vsel %vm568, %v916, -1e+09
    %v925 = vsel %vm569, %v917, -1e+09
    %v926 = vsel %vm570, %v918, -1e+09
    %v927 = vsel %vm563, %v919, -1e+09
    %v928 = vsel %vm564, %v920, -1e+09
    %v929 = vsel %vm565, %v921, -1e+09
    %v930 = vsel %vm566, %v922, -1e+09
    %v931 = vmul.f32 %v187, %v355
    %v932 = vmul.f32 %v193, %v361
    %v933 = vmul.f32 %v189, %v355
    %v934 = vmul.f32 %v195, %v361
    %v935 = vmul.f32 %v276, %v355
    %v936 = vmul.f32 %v282, %v361
    %v937 = vmul.f32 %v278, %v355
    %v938 = vmul.f32 %v284, %v361
    %v939 = vmul.f32 %v365, %v355
    %v940 = vmul.f32 %v371, %v361
    %v941 = vmul.f32 %v367, %v355
    %v942 = vmul.f32 %v373, %v361
    %v943 = vmul.f32 %v454, %v355
    %v944 = vmul.f32 %v460, %v361
    %v945 = vmul.f32 %v456, %v355
    %v946 = vmul.f32 %v462, %v361
    %v947 = vadd.f32 %v931, %v932
    %v948 = vrot.slane %v947, 4
    %v949 = vadd.f32 %v947, %v948
    %v950 = vrot.slane %v949, 2
    %v951 = vadd.f32 %v949, %v950
    %v952 = vrot.slane %v951, 1
    %v953 = vadd.f32 %v951, %v952
    %v954 = vadd.f32 %v933, %v934
    %v955 = vrot.slane %v954, 4
    %v956 = vadd.f32 %v954, %v955
    %v957 = vrot.slane %v956, 2
    %v958 = vadd.f32 %v956, %v957
    %v959 = vrot.slane %v958, 1
    %v960 = vadd.f32 %v958, %v959
    %v961 = vadd.f32 %v935, %v936
    %v962 = vrot.slane %v961, 4
    %v963 = vadd.f32 %v961, %v962
    %v964 = vrot.slane %v963, 2
    %v965 = vadd.f32 %v963, %v964
    %v966 = vrot.slane %v965, 1
    %v967 = vadd.f32 %v965, %v966
    %v968 = vadd.f32 %v937, %v938
    %v969 = vrot.slane %v968, 4
    %v970 = vadd.f32 %v968, %v969
    %v971 = vrot.slane %v970, 2
    %v972 = vadd.f32 %v970, %v971
    %v973 = vrot.slane %v972, 1
    %v974 = vadd.f32 %v972, %v973
    %v975 = vadd.f32 %v939, %v940
    %v976 = vrot.slane %v975, 4
    %v977 = vadd.f32 %v975, %v976
    %v978 = vrot.slane %v977, 2
    %v979 = vadd.f32 %v977, %v978
    %v980 = vrot.slane %v979, 1
    %v981 = vadd.f32 %v979, %v980
    %v982 = vadd.f32 %v941, %v942
    %v983 = vrot.slane %v982, 4
    %v984 = vadd.f32 %v982, %v983
    %v985 = vrot.slane %v984, 2
    %v986 = vadd.f32 %v984, %v985
    %v987 = vrot.slane %v986, 1
    %v988 = vadd.f32 %v986, %v987
    %v989 = vadd.f32 %v943, %v944
    %v990 = vrot.slane %v989, 4
    %v991 = vadd.f32 %v989, %v990
    %v992 = vrot.slane %v991, 2
    %v993 = vadd.f32 %v991, %v992
    %v994 = vrot.slane %v993, 1
    %v995 = vadd.f32 %v993, %v994
    %v996 = vadd.f32 %v945, %v946
    %v997 = vrot.slane %v996, 4
    %v998 = vadd.f32 %v996, %v997
    %v999 = vrot.slane %v998, 2
    %v1000 = vadd.f32 %v998, %v999
    %v1001 = vrot.slane %v1000, 1
    %v1002 = vadd.f32 %v1000, %v1001
    %v1003 = vmul.f32 %v953, 0.25
    %v1004 = vmul.f32 %v960, 0.25
    %v1005 = vmul.f32 %v967, 0.25
    %v1006 = vmul.f32 %v974, 0.25
    %v1007 = vmul.f32 %v981, 0.25
    %v1008 = vmul.f32 %v988, 0.25
    %v1009 = vmul.f32 %v995, 0.25
    %v1010 = vmul.f32 %v1002, 0.25
    %v1011 = vsel %vm566, %v1003, -1e+09
    %v1012 = vsel %vm567, %v1004, -1e+09
    %v1013 = vsel %vm568, %v1005, -1e+09
    %v1014 = vsel %vm569, %v1006, -1e+09
    %v1015 = vsel %vm570, %v1007, -1e+09
    %v1016 = vsel %vm563, %v1008, -1e+09
    %v1017 = vsel %vm564, %v1009, -1e+09
    %v1018 = vsel %vm565, %v1010, -1e+09
    %v1019 = vmul.f32 %v187, %v442
    %v1020 = vmul.f32 %v193, %v448
    %v1021 = vmul.f32 %v189, %v442
    %v1022 = vmul.f32 %v195, %v448
    %v1023 = vmul.f32 %v276, %v442
    %v1024 = vmul.f32 %v282, %v448
    %v1025 = vmul.f32 %v278, %v442
    %v1026 = vmul.f32 %v284, %v448
    %v1027 = vmul.f32 %v365, %v442
    %v1028 = vmul.f32 %v371, %v448
    %v1029 = vmul.f32 %v367, %v442
    %v1030 = vmul.f32 %v373, %v448
    %v1031 = vmul.f32 %v454, %v442
    %v1032 = vmul.f32 %v460, %v448
    %v1033 = vmul.f32 %v456, %v442
    %v1034 = vmul.f32 %v462, %v448
    %v1035 = vadd.f32 %v1019, %v1020
    %v1036 = vrot.slane %v1035, 4
    %v1037 = vadd.f32 %v1035, %v1036
    %v1038 = vrot.slane %v1037, 2
    %v1039 = vadd.f32 %v1037, %v1038
    %v1040 = vrot.slane %v1039, 1
    %v1041 = vadd.f32 %v1039, %v1040
    %v1042 = vadd.f32 %v1021, %v1022
    %v1043 = vrot.slane %v1042, 4
    %v1044 = vadd.f32 %v1042, %v1043
    %v1045 = vrot.slane %v1044, 2
    %v1046 = vadd.f32 %v1044, %v1045
    %v1047 = vrot.slane %v1046, 1
    %v1048 = vadd.f32 %v1046, %v1047
    %v1049 = vadd.f32 %v1023, %v1024
    %v1050 = vrot.slane %v1049, 4
    %v1051 = vadd.f32 %v1049, %v1050
    %v1052 = vrot.slane %v1051, 2
    %v1053 = vadd.f32 %v1051, %v1052
    %v1054 = vrot.slane %v1053, 1
    %v1055 = vadd.f32 %v1053, %v1054
    %v1056 = vadd.f32 %v1025, %v1026
    %v1057 = vrot.slane %v1056, 4
    %v1058 = vadd.f32 %v1056, %v1057
    %v1059 = vrot.slane %v1058, 2
    %v1060 = vadd.f32 %v1058, %v1059
    %v1061 = vrot.slane %v1060, 1
    %v1062 = vadd.f32 %v1060, %v1061
    %v1063 = vadd.f32 %v1027, %v1028
    %v1064 = vrot.slane %v1063, 4
    %v1065 = vadd.f32 %v1063, %v1064
    %v1066 = vrot.slane %v1065, 2
    %v1067 = vadd.f32 %v1065, %v1066
    %v1068 = vrot.slane %v1067, 1
    %v1069 = vadd.f32 %v1067, %v1068
    %v1070 = vadd.f32 %v1029, %v1030
    %v1071 = vrot.slane %v1070, 4
    %v1072 = vadd.f32 %v1070, %v1071
    %v1073 = vrot.slane %v1072, 2
    %v1074 = vadd.f32 %v1072, %v1073
    %v1075 = vrot.slane %v1074, 1
    %v1076 = vadd.f32 %v1074, %v1075
    %v1077 = vadd.f32 %v1031, %v1032
    %v1078 = vrot.slane %v1077, 4
    %v1079 = vadd.f32 %v1077, %v1078
    %v1080 = vrot.slane %v1079, 2
    %v1081 = vadd.f32 %v1079, %v1080
    %v1082 = vrot.slane %v1081, 1
    %v1083 = vadd.f32 %v1081, %v1082
    %v1084 = vadd.f32 %v1033, %v1034
    %v1085 = vrot.slane %v1084, 4
    %v1086 = vadd.f32 %v1084, %v1085
    %v1087 = vrot.slane %v1086, 2
    %v1088 = vadd.f32 %v1086, %v1087
    %v1089 = vrot.slane %v1088, 1
    %v1090 = vadd.f32 %v1088, %v1089
    %v1091 = vmul.f32 %v1041, 0.25
    %v1092 = vmul.f32 %v1048, 0.25
    %v1093 = vmul.f32 %v1055, 0.25
    %v1094 = vmul.f32 %v1062, 0.25
    %v1095 = vmul.f32 %v1069, 0.25
    %v1096 = vmul.f32 %v1076, 0.25
    %v1097 = vmul.f32 %v1083, 0.25
    %v1098 = vmul.f32 %v1090, 0.25
    %v1099 = vsel %vm565, %v1091, -1e+09
    %v1100 = vsel %vm566, %v1092, -1e+09
    %v1101 = vsel %vm567, %v1093, -1e+09
    %v1102 = vsel %vm568, %v1094, -1e+09
    %v1103 = vsel %vm569, %v1095, -1e+09
    %v1104 = vsel %vm570, %v1096, -1e+09
    %v1105 = vsel %vm563, %v1097, -1e+09
    %v1106 = vsel %vm564, %v1098, -1e+09
    %v1107 = vmul.f32 %v187, %v444
    %v1108 = vmul.f32 %v193, %v450
    %v1109 = vmul.f32 %v189, %v444
    %v1110 = vmul.f32 %v195, %v450
    %v1111 = vmul.f32 %v276, %v444
    %v1112 = vmul.f32 %v282, %v450
    %v1113 = vmul.f32 %v278, %v444
    %v1114 = vmul.f32 %v284, %v450
    %v1115 = vmul.f32 %v365, %v444
    %v1116 = vmul.f32 %v371, %v450
    %v1117 = vmul.f32 %v367, %v444
    %v1118 = vmul.f32 %v373, %v450
    %v1119 = vmul.f32 %v454, %v444
    %v1120 = vmul.f32 %v460, %v450
    %v1121 = vmul.f32 %v456, %v444
    %v1122 = vmul.f32 %v462, %v450
    %v1123 = vadd.f32 %v1107, %v1108
    %v1124 = vrot.slane %v1123, 4
    %v1125 = vadd.f32 %v1123, %v1124
    %v1126 = vrot.slane %v1125, 2
    %v1127 = vadd.f32 %v1125, %v1126
    %v1128 = vrot.slane %v1127, 1
    %v1129 = vadd.f32 %v1127, %v1128
    %v1130 = vadd.f32 %v1109, %v1110
    %v1131 = vrot.slane %v1130, 4
    %v1132 = vadd.f32 %v1130, %v1131
    %v1133 = vrot.slane %v1132, 2
    %v1134 = vadd.f32 %v1132, %v1133
    %v1135 = vrot.slane %v1134, 1
    %v1136 = vadd.f32 %v1134, %v1135
    %v1137 = vadd.f32 %v1111, %v1112
    %v1138 = vrot.slane %v1137, 4
    %v1139 = vadd.f32 %v1137, %v1138
    %v1140 = vrot.slane %v1139, 2
    %v1141 = vadd.f32 %v1139, %v1140
    %v1142 = vrot.slane %v1141, 1
    %v1143 = vadd.f32 %v1141, %v1142
    %v1144 = vadd.f32 %v1113, %v1114
    %v1145 = vrot.slane %v1144, 4
    %v1146 = vadd.f32 %v1144, %v1145
    %v1147 = vrot.slane %v1146, 2
    %v1148 = vadd.f32 %v1146, %v1147
    %v1149 = vrot.slane %v1148, 1
    %v1150 = vadd.f32 %v1148, %v1149
    %v1151 = vadd.f32 %v1115, %v1116
    %v1152 = vrot.slane %v1151, 4
    %v1153 = vadd.f32 %v1151, %v1152
    %v1154 = vrot.slane %v1153, 2
    %v1155 = vadd.f32 %v1153, %v1154
    %v1156 = vrot.slane %v1155, 1
    %v1157 = vadd.f32 %v1155, %v1156
    %v1158 = vadd.f32 %v1117, %v1118
    %v1159 = vrot.slane %v1158, 4
    %v1160 = vadd.f32 %v1158, %v1159
    %v1161 = vrot.slane %v1160, 2
    %v1162 = vadd.f32 %v1160, %v1161
    %v1163 = vrot.slane %v1162, 1
    %v1164 = vadd.f32 %v1162, %v1163
    %v1165 = vadd.f32 %v1119, %v1120
    %v1166 = vrot.slane %v1165, 4
    %v1167 = vadd.f32 %v1165, %v1166
    %v1168 = vrot.slane %v1167, 2
    %v1169 = vadd.f32 %v1167, %v1168
    %v1170 = vrot.slane %v1169, 1
    %v1171 = vadd.f32 %v1169, %v1170
    %v1172 = vadd.f32 %v1121, %v1122
    %v1173 = vrot.slane %v1172, 4
    %v1174 = vadd.f32 %v1172, %v1173
    %v1175 = vrot.slane %v1174, 2
    %v1176 = vadd.f32 %v1174, %v1175
    %v1177 = vrot.slane %v1176, 1
    %v1178 = vadd.f32 %v1176, %v1177
    %v1179 = vmul.f32 %v1129, 0.25
    %v1180 = vmul.f32 %v1136, 0.25
    %v1181 = vmul.f32 %v1143, 0.25
    %v1182 = vmul.f32 %v1150, 0.25
    %v1183 = vmul.f32 %v1157, 0.25
    %v1184 = vmul.f32 %v1164, 0.25
    %v1185 = vmul.f32 %v1171, 0.25
    %v1186 = vmul.f32 %v1178, 0.25
    %v1187 = vsel %vm564, %v1179, -1e+09
    %v1188 = vsel %vm565, %v1180, -1e+09
    %v1189 = vsel %vm566, %v1181, -1e+09
    %v1190 = vsel %vm567, %v1182, -1e+09
    %v1191 = vsel %vm568, %v1183, -1e+09
    %v1192 = vsel %vm569, %v1184, -1e+09
    %v1193 = vsel %vm570, %v1185, -1e+09
    %v1194 = vsel %vm563, %v1186, -1e+09
    %v1195 = vlaneseq
    %v1196 = vshrl.u32 %v1195, 7
    %v1197 = vadd.s32 %v1196, 8
    %v1198 = vadd.s32 %v1196, 16
    %v1199 = vadd.s32 %v1196, 24
    %v1200 = vadd.s32 %v1196, 32
    %v1201 = vadd.s32 %v1196, 40
    %v1202 = vadd.s32 %v1196, 48
    %v1203 = vadd.s32 %v1196, 56
    %v1212 = vrot.slane %v659, 1
    %v1213 = vrot.slane %v660, 1
    %v1214 = vrot.slane %v661, 1
    %v1215 = vrot.slane %v662, 1
    %v1216 = vrot.slane %v663, 1
    %v1217 = vrot.slane %v664, 1
    %v1218 = vrot.slane %v665, 1
    %v1219 = vrot.slane %v666, 1
    %vm1228 = vcmp.gt.f32.partialorder %v571, %v1212
    %vm1229 = vcmp.gt.f32.partialorder %v572, %v1213
    %vm1230 = vcmp.gt.f32.partialorder %v573, %v1214
    %vm1231 = vcmp.gt.f32.partialorder %v574, %v1215
    %vm1232 = vcmp.gt.f32.partialorder %v575, %v1216
    %vm1233 = vcmp.gt.f32.partialorder %v576, %v1217
    %vm1234 = vcmp.gt.f32.partialorder %v577, %v1218
    %vm1235 = vcmp.gt.f32.partialorder %v578, %v1219
    %vm1236 = vcmp.eq.f32.partialorder %v571, %v1212
    %vm1237 = vcmp.eq.f32.partialorder %v572, %v1213
    %vm1238 = vcmp.eq.f32.partialorder %v573, %v1214
    %vm1239 = vcmp.eq.f32.partialorder %v574, %v1215
    %vm1240 = vcmp.eq.f32.partialorder %v575, %v1216
    %vm1241 = vcmp.eq.f32.partialorder %v576, %v1217
    %vm1242 = vcmp.eq.f32.partialorder %v577, %v1218
    %vm1243 = vcmp.eq.f32.partialorder %v578, %v1219
    %vm1244 = vcmp.lt.s32.totalorder %v1196, %v1197
    %v1245 = vsel %vm1244, 1, 0
    %v1246 = vrot.slane %v1245, 1
    %v1247 = vrot.slane %v1245, 2
    %v1248 = vrot.slane %v1245, 3
    %v1249 = vrot.slane %v1245, 4
    %v1250 = vrot.slane %v1245, 5
    %v1251 = vrot.slane %v1245, 6
    %v1252 = vrot.slane %v1245, 7
    %vm1253 = vcmp.ne.s32.totalorder %v1245, 0
    %vm1254 = vcmp.ne.s32.totalorder %v1246, 0
    %vm1255 = vcmp.ne.s32.totalorder %v1247, 0
    %vm1256 = vcmp.ne.s32.totalorder %v1248, 0
    %vm1257 = vcmp.ne.s32.totalorder %v1249, 0
    %vm1258 = vcmp.ne.s32.totalorder %v1250, 0
    %vm1259 = vcmp.ne.s32.totalorder %v1251, 0
    %vm1260 = vcmp.ne.s32.totalorder %v1252, 0
    %vm1261 = vmand %vm1236, %vm1253
    %vm1262 = vmand %vm1237, %vm1254
    %vm1263 = vmand %vm1238, %vm1255
    %vm1264 = vmand %vm1239, %vm1256
    %vm1265 = vmand %vm1240, %vm1257
    %vm1266 = vmand %vm1241, %vm1258
    %vm1267 = vmand %vm1242, %vm1259
    %vm1268 = vmand %vm1243, %vm1260
    %vm1269 = vmor %vm1228, %vm1261
    %vm1270 = vmor %vm1229, %vm1262
    %vm1271 = vmor %vm1230, %vm1263
    %vm1272 = vmor %vm1231, %vm1264
    %vm1273 = vmor %vm1232, %vm1265
    %vm1274 = vmor %vm1233, %vm1266
    %vm1275 = vmor %vm1234, %vm1267
    %vm1276 = vmor %vm1235, %vm1268
    %v1277 = vsel %vm1269, %v571, %v1212
    %v1278 = vsel %vm1270, %v572, %v1213
    %v1279 = vsel %vm1271, %v573, %v1214
    %v1280 = vsel %vm1272, %v574, %v1215
    %v1281 = vsel %vm1273, %v575, %v1216
    %v1282 = vsel %vm1274, %v576, %v1217
    %v1283 = vsel %vm1275, %v577, %v1218
    %v1284 = vsel %vm1276, %v578, %v1219
    %v1285 = vrot.slane %v1196, 1
    %v1286 = vrot.slane %v1196, 2
    %v1287 = vrot.slane %v1196, 3
    %v1288 = vrot.slane %v1196, 4
    %v1289 = vrot.slane %v1196, 5
    %v1290 = vrot.slane %v1196, 6
    %v1291 = vrot.slane %v1196, 7
    %v1292 = vrot.slane %v1197, 1
    %v1293 = vrot.slane %v1197, 2
    %v1294 = vrot.slane %v1197, 3
    %v1295 = vrot.slane %v1197, 4
    %v1296 = vrot.slane %v1197, 5
    %v1297 = vrot.slane %v1197, 6
    %v1298 = vrot.slane %v1197, 7
    %v1299 = vsel %vm1269, %v1196, %v1197
    %v1300 = vsel %vm1270, %v1285, %v1292
    %v1301 = vsel %vm1271, %v1286, %v1293
    %v1302 = vsel %vm1272, %v1287, %v1294
    %v1303 = vsel %vm1273, %v1288, %v1295
    %v1304 = vsel %vm1274, %v1289, %v1296
    %v1305 = vsel %vm1275, %v1290, %v1297
    %v1306 = vsel %vm1276, %v1291, %v1298
    %v1315 = vrot.slane %v835, 1
    %v1316 = vrot.slane %v836, 1
    %v1317 = vrot.slane %v837, 1
    %v1318 = vrot.slane %v838, 1
    %v1319 = vrot.slane %v839, 1
    %v1320 = vrot.slane %v840, 1
    %v1321 = vrot.slane %v841, 1
    %v1322 = vrot.slane %v842, 1
    %vm1331 = vcmp.gt.f32.partialorder %v747, %v1315
    %vm1332 = vcmp.gt.f32.partialorder %v748, %v1316
    %vm1333 = vcmp.gt.f32.partialorder %v749, %v1317
    %vm1334 = vcmp.gt.f32.partialorder %v750, %v1318
    %vm1335 = vcmp.gt.f32.partialorder %v751, %v1319
    %vm1336 = vcmp.gt.f32.partialorder %v752, %v1320
    %vm1337 = vcmp.gt.f32.partialorder %v753, %v1321
    %vm1338 = vcmp.gt.f32.partialorder %v754, %v1322
    %vm1339 = vcmp.eq.f32.partialorder %v747, %v1315
    %vm1340 = vcmp.eq.f32.partialorder %v748, %v1316
    %vm1341 = vcmp.eq.f32.partialorder %v749, %v1317
    %vm1342 = vcmp.eq.f32.partialorder %v750, %v1318
    %vm1343 = vcmp.eq.f32.partialorder %v751, %v1319
    %vm1344 = vcmp.eq.f32.partialorder %v752, %v1320
    %vm1345 = vcmp.eq.f32.partialorder %v753, %v1321
    %vm1346 = vcmp.eq.f32.partialorder %v754, %v1322
    %vm1347 = vcmp.lt.s32.totalorder %v1198, %v1199
    %v1348 = vsel %vm1347, 1, 0
    %v1349 = vrot.slane %v1348, 6
    %v1350 = vrot.slane %v1348, 7
    %v1351 = vrot.slane %v1348, 1
    %v1352 = vrot.slane %v1348, 2
    %v1353 = vrot.slane %v1348, 3
    %v1354 = vrot.slane %v1348, 4
    %v1355 = vrot.slane %v1348, 5
    %vm1356 = vcmp.ne.s32.totalorder %v1349, 0
    %vm1357 = vcmp.ne.s32.totalorder %v1350, 0
    %vm1358 = vcmp.ne.s32.totalorder %v1348, 0
    %vm1359 = vcmp.ne.s32.totalorder %v1351, 0
    %vm1360 = vcmp.ne.s32.totalorder %v1352, 0
    %vm1361 = vcmp.ne.s32.totalorder %v1353, 0
    %vm1362 = vcmp.ne.s32.totalorder %v1354, 0
    %vm1363 = vcmp.ne.s32.totalorder %v1355, 0
    %vm1364 = vmand %vm1339, %vm1356
    %vm1365 = vmand %vm1340, %vm1357
    %vm1366 = vmand %vm1341, %vm1358
    %vm1367 = vmand %vm1342, %vm1359
    %vm1368 = vmand %vm1343, %vm1360
    %vm1369 = vmand %vm1344, %vm1361
    %vm1370 = vmand %vm1345, %vm1362
    %vm1371 = vmand %vm1346, %vm1363
    %vm1372 = vmor %vm1331, %vm1364
    %vm1373 = vmor %vm1332, %vm1365
    %vm1374 = vmor %vm1333, %vm1366
    %vm1375 = vmor %vm1334, %vm1367
    %vm1376 = vmor %vm1335, %vm1368
    %vm1377 = vmor %vm1336, %vm1369
    %vm1378 = vmor %vm1337, %vm1370
    %vm1379 = vmor %vm1338, %vm1371
    %v1380 = vsel %vm1372, %v747, %v1315
    %v1381 = vsel %vm1373, %v748, %v1316
    %v1382 = vsel %vm1374, %v749, %v1317
    %v1383 = vsel %vm1375, %v750, %v1318
    %v1384 = vsel %vm1376, %v751, %v1319
    %v1385 = vsel %vm1377, %v752, %v1320
    %v1386 = vsel %vm1378, %v753, %v1321
    %v1387 = vsel %vm1379, %v754, %v1322
    %v1388 = vrot.slane %v1198, 6
    %v1389 = vrot.slane %v1198, 7
    %v1390 = vrot.slane %v1198, 1
    %v1391 = vrot.slane %v1198, 2
    %v1392 = vrot.slane %v1198, 3
    %v1393 = vrot.slane %v1198, 4
    %v1394 = vrot.slane %v1198, 5
    %v1395 = vrot.slane %v1199, 6
    %v1396 = vrot.slane %v1199, 7
    %v1397 = vrot.slane %v1199, 1
    %v1398 = vrot.slane %v1199, 2
    %v1399 = vrot.slane %v1199, 3
    %v1400 = vrot.slane %v1199, 4
    %v1401 = vrot.slane %v1199, 5
    %v1402 = vsel %vm1372, %v1388, %v1395
    %v1403 = vsel %vm1373, %v1389, %v1396
    %v1404 = vsel %vm1374, %v1198, %v1199
    %v1405 = vsel %vm1375, %v1390, %v1397
    %v1406 = vsel %vm1376, %v1391, %v1398
    %v1407 = vsel %vm1377, %v1392, %v1399
    %v1408 = vsel %vm1378, %v1393, %v1400
    %v1409 = vsel %vm1379, %v1394, %v1401
    %v1418 = vrot.slane %v1011, 1
    %v1419 = vrot.slane %v1012, 1
    %v1420 = vrot.slane %v1013, 1
    %v1421 = vrot.slane %v1014, 1
    %v1422 = vrot.slane %v1015, 1
    %v1423 = vrot.slane %v1016, 1
    %v1424 = vrot.slane %v1017, 1
    %v1425 = vrot.slane %v1018, 1
    %vm1434 = vcmp.gt.f32.partialorder %v923, %v1418
    %vm1435 = vcmp.gt.f32.partialorder %v924, %v1419
    %vm1436 = vcmp.gt.f32.partialorder %v925, %v1420
    %vm1437 = vcmp.gt.f32.partialorder %v926, %v1421
    %vm1438 = vcmp.gt.f32.partialorder %v927, %v1422
    %vm1439 = vcmp.gt.f32.partialorder %v928, %v1423
    %vm1440 = vcmp.gt.f32.partialorder %v929, %v1424
    %vm1441 = vcmp.gt.f32.partialorder %v930, %v1425
    %vm1442 = vcmp.eq.f32.partialorder %v923, %v1418
    %vm1443 = vcmp.eq.f32.partialorder %v924, %v1419
    %vm1444 = vcmp.eq.f32.partialorder %v925, %v1420
    %vm1445 = vcmp.eq.f32.partialorder %v926, %v1421
    %vm1446 = vcmp.eq.f32.partialorder %v927, %v1422
    %vm1447 = vcmp.eq.f32.partialorder %v928, %v1423
    %vm1448 = vcmp.eq.f32.partialorder %v929, %v1424
    %vm1449 = vcmp.eq.f32.partialorder %v930, %v1425
    %vm1450 = vcmp.lt.s32.totalorder %v1200, %v1201
    %v1451 = vsel %vm1450, 1, 0
    %v1452 = vrot.slane %v1451, 4
    %v1453 = vrot.slane %v1451, 5
    %v1454 = vrot.slane %v1451, 6
    %v1455 = vrot.slane %v1451, 7
    %v1456 = vrot.slane %v1451, 1
    %v1457 = vrot.slane %v1451, 2
    %v1458 = vrot.slane %v1451, 3
    %vm1459 = vcmp.ne.s32.totalorder %v1452, 0
    %vm1460 = vcmp.ne.s32.totalorder %v1453, 0
    %vm1461 = vcmp.ne.s32.totalorder %v1454, 0
    %vm1462 = vcmp.ne.s32.totalorder %v1455, 0
    %vm1463 = vcmp.ne.s32.totalorder %v1451, 0
    %vm1464 = vcmp.ne.s32.totalorder %v1456, 0
    %vm1465 = vcmp.ne.s32.totalorder %v1457, 0
    %vm1466 = vcmp.ne.s32.totalorder %v1458, 0
    %vm1467 = vmand %vm1442, %vm1459
    %vm1468 = vmand %vm1443, %vm1460
    %vm1469 = vmand %vm1444, %vm1461
    %vm1470 = vmand %vm1445, %vm1462
    %vm1471 = vmand %vm1446, %vm1463
    %vm1472 = vmand %vm1447, %vm1464
    %vm1473 = vmand %vm1448, %vm1465
    %vm1474 = vmand %vm1449, %vm1466
    %vm1475 = vmor %vm1434, %vm1467
    %vm1476 = vmor %vm1435, %vm1468
    %vm1477 = vmor %vm1436, %vm1469
    %vm1478 = vmor %vm1437, %vm1470
    %vm1479 = vmor %vm1438, %vm1471
    %vm1480 = vmor %vm1439, %vm1472
    %vm1481 = vmor %vm1440, %vm1473
    %vm1482 = vmor %vm1441, %vm1474
    %v1483 = vsel %vm1475, %v923, %v1418
    %v1484 = vsel %vm1476, %v924, %v1419
    %v1485 = vsel %vm1477, %v925, %v1420
    %v1486 = vsel %vm1478, %v926, %v1421
    %v1487 = vsel %vm1479, %v927, %v1422
    %v1488 = vsel %vm1480, %v928, %v1423
    %v1489 = vsel %vm1481, %v929, %v1424
    %v1490 = vsel %vm1482, %v930, %v1425
    %v1491 = vrot.slane %v1200, 4
    %v1492 = vrot.slane %v1200, 5
    %v1493 = vrot.slane %v1200, 6
    %v1494 = vrot.slane %v1200, 7
    %v1495 = vrot.slane %v1200, 1
    %v1496 = vrot.slane %v1200, 2
    %v1497 = vrot.slane %v1200, 3
    %v1498 = vrot.slane %v1201, 4
    %v1499 = vrot.slane %v1201, 5
    %v1500 = vrot.slane %v1201, 6
    %v1501 = vrot.slane %v1201, 7
    %v1502 = vrot.slane %v1201, 1
    %v1503 = vrot.slane %v1201, 2
    %v1504 = vrot.slane %v1201, 3
    %v1505 = vsel %vm1475, %v1491, %v1498
    %v1506 = vsel %vm1476, %v1492, %v1499
    %v1507 = vsel %vm1477, %v1493, %v1500
    %v1508 = vsel %vm1478, %v1494, %v1501
    %v1509 = vsel %vm1479, %v1200, %v1201
    %v1510 = vsel %vm1480, %v1495, %v1502
    %v1511 = vsel %vm1481, %v1496, %v1503
    %v1512 = vsel %vm1482, %v1497, %v1504
    %v1521 = vrot.slane %v1187, 1
    %v1522 = vrot.slane %v1188, 1
    %v1523 = vrot.slane %v1189, 1
    %v1524 = vrot.slane %v1190, 1
    %v1525 = vrot.slane %v1191, 1
    %v1526 = vrot.slane %v1192, 1
    %v1527 = vrot.slane %v1193, 1
    %v1528 = vrot.slane %v1194, 1
    %vm1537 = vcmp.gt.f32.partialorder %v1099, %v1521
    %vm1538 = vcmp.gt.f32.partialorder %v1100, %v1522
    %vm1539 = vcmp.gt.f32.partialorder %v1101, %v1523
    %vm1540 = vcmp.gt.f32.partialorder %v1102, %v1524
    %vm1541 = vcmp.gt.f32.partialorder %v1103, %v1525
    %vm1542 = vcmp.gt.f32.partialorder %v1104, %v1526
    %vm1543 = vcmp.gt.f32.partialorder %v1105, %v1527
    %vm1544 = vcmp.gt.f32.partialorder %v1106, %v1528
    %vm1545 = vcmp.eq.f32.partialorder %v1099, %v1521
    %vm1546 = vcmp.eq.f32.partialorder %v1100, %v1522
    %vm1547 = vcmp.eq.f32.partialorder %v1101, %v1523
    %vm1548 = vcmp.eq.f32.partialorder %v1102, %v1524
    %vm1549 = vcmp.eq.f32.partialorder %v1103, %v1525
    %vm1550 = vcmp.eq.f32.partialorder %v1104, %v1526
    %vm1551 = vcmp.eq.f32.partialorder %v1105, %v1527
    %vm1552 = vcmp.eq.f32.partialorder %v1106, %v1528
    %vm1553 = vcmp.lt.s32.totalorder %v1202, %v1203
    %v1554 = vsel %vm1553, 1, 0
    %v1555 = vrot.slane %v1554, 2
    %v1556 = vrot.slane %v1554, 3
    %v1557 = vrot.slane %v1554, 4
    %v1558 = vrot.slane %v1554, 5
    %v1559 = vrot.slane %v1554, 6
    %v1560 = vrot.slane %v1554, 7
    %v1561 = vrot.slane %v1554, 1
    %vm1562 = vcmp.ne.s32.totalorder %v1555, 0
    %vm1563 = vcmp.ne.s32.totalorder %v1556, 0
    %vm1564 = vcmp.ne.s32.totalorder %v1557, 0
    %vm1565 = vcmp.ne.s32.totalorder %v1558, 0
    %vm1566 = vcmp.ne.s32.totalorder %v1559, 0
    %vm1567 = vcmp.ne.s32.totalorder %v1560, 0
    %vm1568 = vcmp.ne.s32.totalorder %v1554, 0
    %vm1569 = vcmp.ne.s32.totalorder %v1561, 0
    %vm1570 = vmand %vm1545, %vm1562
    %vm1571 = vmand %vm1546, %vm1563
    %vm1572 = vmand %vm1547, %vm1564
    %vm1573 = vmand %vm1548, %vm1565
    %vm1574 = vmand %vm1549, %vm1566
    %vm1575 = vmand %vm1550, %vm1567
    %vm1576 = vmand %vm1551, %vm1568
    %vm1577 = vmand %vm1552, %vm1569
    %vm1578 = vmor %vm1537, %vm1570
    %vm1579 = vmor %vm1538, %vm1571
    %vm1580 = vmor %vm1539, %vm1572
    %vm1581 = vmor %vm1540, %vm1573
    %vm1582 = vmor %vm1541, %vm1574
    %vm1583 = vmor %vm1542, %vm1575
    %vm1584 = vmor %vm1543, %vm1576
    %vm1585 = vmor %vm1544, %vm1577
    %v1586 = vsel %vm1578, %v1099, %v1521
    %v1587 = vsel %vm1579, %v1100, %v1522
    %v1588 = vsel %vm1580, %v1101, %v1523
    %v1589 = vsel %vm1581, %v1102, %v1524
    %v1590 = vsel %vm1582, %v1103, %v1525
    %v1591 = vsel %vm1583, %v1104, %v1526
    %v1592 = vsel %vm1584, %v1105, %v1527
    %v1593 = vsel %vm1585, %v1106, %v1528
    %v1594 = vrot.slane %v1202, 2
    %v1595 = vrot.slane %v1202, 3
    %v1596 = vrot.slane %v1202, 4
    %v1597 = vrot.slane %v1202, 5
    %v1598 = vrot.slane %v1202, 6
    %v1599 = vrot.slane %v1202, 7
    %v1600 = vrot.slane %v1202, 1
    %v1601 = vrot.slane %v1203, 2
    %v1602 = vrot.slane %v1203, 3
    %v1603 = vrot.slane %v1203, 4
    %v1604 = vrot.slane %v1203, 5
    %v1605 = vrot.slane %v1203, 6
    %v1606 = vrot.slane %v1203, 7
    %v1607 = vrot.slane %v1203, 1
    %v1608 = vsel %vm1578, %v1594, %v1601
    %v1609 = vsel %vm1579, %v1595, %v1602
    %v1610 = vsel %vm1580, %v1596, %v1603
    %v1611 = vsel %vm1581, %v1597, %v1604
    %v1612 = vsel %vm1582, %v1598, %v1605
    %v1613 = vsel %vm1583, %v1599, %v1606
    %v1614 = vsel %vm1584, %v1202, %v1203
    %v1615 = vsel %vm1585, %v1600, %v1607
    %v1624 = vrot.slane %v1380, 2
    %v1625 = vrot.slane %v1381, 2
    %v1626 = vrot.slane %v1382, 2
    %v1627 = vrot.slane %v1383, 2
    %v1628 = vrot.slane %v1384, 2
    %v1629 = vrot.slane %v1385, 2
    %v1630 = vrot.slane %v1386, 2
    %v1631 = vrot.slane %v1387, 2
    %vm1640 = vcmp.gt.f32.partialorder %v1277, %v1624
    %vm1641 = vcmp.gt.f32.partialorder %v1278, %v1625
    %vm1642 = vcmp.gt.f32.partialorder %v1279, %v1626
    %vm1643 = vcmp.gt.f32.partialorder %v1280, %v1627
    %vm1644 = vcmp.gt.f32.partialorder %v1281, %v1628
    %vm1645 = vcmp.gt.f32.partialorder %v1282, %v1629
    %vm1646 = vcmp.gt.f32.partialorder %v1283, %v1630
    %vm1647 = vcmp.gt.f32.partialorder %v1284, %v1631
    %vm1648 = vcmp.eq.f32.partialorder %v1277, %v1624
    %vm1649 = vcmp.eq.f32.partialorder %v1278, %v1625
    %vm1650 = vcmp.eq.f32.partialorder %v1279, %v1626
    %vm1651 = vcmp.eq.f32.partialorder %v1280, %v1627
    %vm1652 = vcmp.eq.f32.partialorder %v1281, %v1628
    %vm1653 = vcmp.eq.f32.partialorder %v1282, %v1629
    %vm1654 = vcmp.eq.f32.partialorder %v1283, %v1630
    %vm1655 = vcmp.eq.f32.partialorder %v1284, %v1631
    %v1656 = vrot.slane %v1402, 2
    %v1657 = vrot.slane %v1403, 2
    %v1658 = vrot.slane %v1404, 2
    %v1659 = vrot.slane %v1405, 2
    %v1660 = vrot.slane %v1406, 2
    %v1661 = vrot.slane %v1407, 2
    %v1662 = vrot.slane %v1408, 2
    %v1663 = vrot.slane %v1409, 2
    %vm1664 = vcmp.lt.s32.totalorder %v1299, %v1656
    %vm1665 = vcmp.lt.s32.totalorder %v1300, %v1657
    %vm1666 = vcmp.lt.s32.totalorder %v1301, %v1658
    %vm1667 = vcmp.lt.s32.totalorder %v1302, %v1659
    %vm1668 = vcmp.lt.s32.totalorder %v1303, %v1660
    %vm1669 = vcmp.lt.s32.totalorder %v1304, %v1661
    %vm1670 = vcmp.lt.s32.totalorder %v1305, %v1662
    %vm1671 = vcmp.lt.s32.totalorder %v1306, %v1663
    %vm1672 = vmand %vm1648, %vm1664
    %vm1673 = vmand %vm1649, %vm1665
    %vm1674 = vmand %vm1650, %vm1666
    %vm1675 = vmand %vm1651, %vm1667
    %vm1676 = vmand %vm1652, %vm1668
    %vm1677 = vmand %vm1653, %vm1669
    %vm1678 = vmand %vm1654, %vm1670
    %vm1679 = vmand %vm1655, %vm1671
    %vm1680 = vmor %vm1640, %vm1672
    %vm1681 = vmor %vm1641, %vm1673
    %vm1682 = vmor %vm1642, %vm1674
    %vm1683 = vmor %vm1643, %vm1675
    %vm1684 = vmor %vm1644, %vm1676
    %vm1685 = vmor %vm1645, %vm1677
    %vm1686 = vmor %vm1646, %vm1678
    %vm1687 = vmor %vm1647, %vm1679
    %v1688 = vsel %vm1680, %v1277, %v1624
    %v1689 = vsel %vm1681, %v1278, %v1625
    %v1690 = vsel %vm1682, %v1279, %v1626
    %v1691 = vsel %vm1683, %v1280, %v1627
    %v1692 = vsel %vm1684, %v1281, %v1628
    %v1693 = vsel %vm1685, %v1282, %v1629
    %v1694 = vsel %vm1686, %v1283, %v1630
    %v1695 = vsel %vm1687, %v1284, %v1631
    %v1696 = vsel %vm1680, %v1299, %v1656
    %v1697 = vsel %vm1681, %v1300, %v1657
    %v1698 = vsel %vm1682, %v1301, %v1658
    %v1699 = vsel %vm1683, %v1302, %v1659
    %v1700 = vsel %vm1684, %v1303, %v1660
    %v1701 = vsel %vm1685, %v1304, %v1661
    %v1702 = vsel %vm1686, %v1305, %v1662
    %v1703 = vsel %vm1687, %v1306, %v1663
    %v1712 = vrot.slane %v1586, 2
    %v1713 = vrot.slane %v1587, 2
    %v1714 = vrot.slane %v1588, 2
    %v1715 = vrot.slane %v1589, 2
    %v1716 = vrot.slane %v1590, 2
    %v1717 = vrot.slane %v1591, 2
    %v1718 = vrot.slane %v1592, 2
    %v1719 = vrot.slane %v1593, 2
    %vm1728 = vcmp.gt.f32.partialorder %v1483, %v1712
    %vm1729 = vcmp.gt.f32.partialorder %v1484, %v1713
    %vm1730 = vcmp.gt.f32.partialorder %v1485, %v1714
    %vm1731 = vcmp.gt.f32.partialorder %v1486, %v1715
    %vm1732 = vcmp.gt.f32.partialorder %v1487, %v1716
    %vm1733 = vcmp.gt.f32.partialorder %v1488, %v1717
    %vm1734 = vcmp.gt.f32.partialorder %v1489, %v1718
    %vm1735 = vcmp.gt.f32.partialorder %v1490, %v1719
    %vm1736 = vcmp.eq.f32.partialorder %v1483, %v1712
    %vm1737 = vcmp.eq.f32.partialorder %v1484, %v1713
    %vm1738 = vcmp.eq.f32.partialorder %v1485, %v1714
    %vm1739 = vcmp.eq.f32.partialorder %v1486, %v1715
    %vm1740 = vcmp.eq.f32.partialorder %v1487, %v1716
    %vm1741 = vcmp.eq.f32.partialorder %v1488, %v1717
    %vm1742 = vcmp.eq.f32.partialorder %v1489, %v1718
    %vm1743 = vcmp.eq.f32.partialorder %v1490, %v1719
    %v1744 = vrot.slane %v1608, 2
    %v1745 = vrot.slane %v1609, 2
    %v1746 = vrot.slane %v1610, 2
    %v1747 = vrot.slane %v1611, 2
    %v1748 = vrot.slane %v1612, 2
    %v1749 = vrot.slane %v1613, 2
    %v1750 = vrot.slane %v1614, 2
    %v1751 = vrot.slane %v1615, 2
    %vm1752 = vcmp.lt.s32.totalorder %v1505, %v1744
    %vm1753 = vcmp.lt.s32.totalorder %v1506, %v1745
    %vm1754 = vcmp.lt.s32.totalorder %v1507, %v1746
    %vm1755 = vcmp.lt.s32.totalorder %v1508, %v1747
    %vm1756 = vcmp.lt.s32.totalorder %v1509, %v1748
    %vm1757 = vcmp.lt.s32.totalorder %v1510, %v1749
    %vm1758 = vcmp.lt.s32.totalorder %v1511, %v1750
    %vm1759 = vcmp.lt.s32.totalorder %v1512, %v1751
    %vm1760 = vmand %vm1736, %vm1752
    %vm1761 = vmand %vm1737, %vm1753
    %vm1762 = vmand %vm1738, %vm1754
    %vm1763 = vmand %vm1739, %vm1755
    %vm1764 = vmand %vm1740, %vm1756
    %vm1765 = vmand %vm1741, %vm1757
    %vm1766 = vmand %vm1742, %vm1758
    %vm1767 = vmand %vm1743, %vm1759
    %vm1768 = vmor %vm1728, %vm1760
    %vm1769 = vmor %vm1729, %vm1761
    %vm1770 = vmor %vm1730, %vm1762
    %vm1771 = vmor %vm1731, %vm1763
    %vm1772 = vmor %vm1732, %vm1764
    %vm1773 = vmor %vm1733, %vm1765
    %vm1774 = vmor %vm1734, %vm1766
    %vm1775 = vmor %vm1735, %vm1767
    %v1776 = vsel %vm1768, %v1483, %v1712
    %v1777 = vsel %vm1769, %v1484, %v1713
    %v1778 = vsel %vm1770, %v1485, %v1714
    %v1779 = vsel %vm1771, %v1486, %v1715
    %v1780 = vsel %vm1772, %v1487, %v1716
    %v1781 = vsel %vm1773, %v1488, %v1717
    %v1782 = vsel %vm1774, %v1489, %v1718
    %v1783 = vsel %vm1775, %v1490, %v1719
    %v1784 = vsel %vm1768, %v1505, %v1744
    %v1785 = vsel %vm1769, %v1506, %v1745
    %v1786 = vsel %vm1770, %v1507, %v1746
    %v1787 = vsel %vm1771, %v1508, %v1747
    %v1788 = vsel %vm1772, %v1509, %v1748
    %v1789 = vsel %vm1773, %v1510, %v1749
    %v1790 = vsel %vm1774, %v1511, %v1750
    %v1791 = vsel %vm1775, %v1512, %v1751
    %v1800 = vrot.slane %v1776, 4
    %v1801 = vrot.slane %v1777, 4
    %v1802 = vrot.slane %v1778, 4
    %v1803 = vrot.slane %v1779, 4
    %v1804 = vrot.slane %v1780, 4
    %v1805 = vrot.slane %v1781, 4
    %v1806 = vrot.slane %v1782, 4
    %v1807 = vrot.slane %v1783, 4
    %vm1816 = vcmp.gt.f32.partialorder %v1688, %v1800
    %vm1817 = vcmp.gt.f32.partialorder %v1689, %v1801
    %vm1818 = vcmp.gt.f32.partialorder %v1690, %v1802
    %vm1819 = vcmp.gt.f32.partialorder %v1691, %v1803
    %vm1820 = vcmp.gt.f32.partialorder %v1692, %v1804
    %vm1821 = vcmp.gt.f32.partialorder %v1693, %v1805
    %vm1822 = vcmp.gt.f32.partialorder %v1694, %v1806
    %vm1823 = vcmp.gt.f32.partialorder %v1695, %v1807
    %vm1824 = vcmp.eq.f32.partialorder %v1688, %v1800
    %vm1825 = vcmp.eq.f32.partialorder %v1689, %v1801
    %vm1826 = vcmp.eq.f32.partialorder %v1690, %v1802
    %vm1827 = vcmp.eq.f32.partialorder %v1691, %v1803
    %vm1828 = vcmp.eq.f32.partialorder %v1692, %v1804
    %vm1829 = vcmp.eq.f32.partialorder %v1693, %v1805
    %vm1830 = vcmp.eq.f32.partialorder %v1694, %v1806
    %vm1831 = vcmp.eq.f32.partialorder %v1695, %v1807
    %v1832 = vrot.slane %v1784, 4
    %v1833 = vrot.slane %v1785, 4
    %v1834 = vrot.slane %v1786, 4
    %v1835 = vrot.slane %v1787, 4
    %v1836 = vrot.slane %v1788, 4
    %v1837 = vrot.slane %v1789, 4
    %v1838 = vrot.slane %v1790, 4
    %v1839 = vrot.slane %v1791, 4
    %vm1840 = vcmp.lt.s32.totalorder %v1696, %v1832
    %vm1841 = vcmp.lt.s32.totalorder %v1697, %v1833
    %vm1842 = vcmp.lt.s32.totalorder %v1698, %v1834
    %vm1843 = vcmp.lt.s32.totalorder %v1699, %v1835
    %vm1844 = vcmp.lt.s32.totalorder %v1700, %v1836
    %vm1845 = vcmp.lt.s32.totalorder %v1701, %v1837
    %vm1846 = vcmp.lt.s32.totalorder %v1702, %v1838
    %vm1847 = vcmp.lt.s32.totalorder %v1703, %v1839
    %vm1848 = vmand %vm1824, %vm1840
    %vm1849 = vmand %vm1825, %vm1841
    %vm1850 = vmand %vm1826, %vm1842
    %vm1851 = vmand %vm1827, %vm1843
    %vm1852 = vmand %vm1828, %vm1844
    %vm1853 = vmand %vm1829, %vm1845
    %vm1854 = vmand %vm1830, %vm1846
    %vm1855 = vmand %vm1831, %vm1847
    %vm1856 = vmor %vm1816, %vm1848
    %vm1857 = vmor %vm1817, %vm1849
    %vm1858 = vmor %vm1818, %vm1850
    %vm1859 = vmor %vm1819, %vm1851
    %vm1860 = vmor %vm1820, %vm1852
    %vm1861 = vmor %vm1821, %vm1853
    %vm1862 = vmor %vm1822, %vm1854
    %vm1863 = vmor %vm1823, %vm1855
    %v1864 = vsel %vm1856, %v1688, %v1800
    %v1865 = vsel %vm1857, %v1689, %v1801
    %v1866 = vsel %vm1858, %v1690, %v1802
    %v1867 = vsel %vm1859, %v1691, %v1803
    %v1868 = vsel %vm1860, %v1692, %v1804
    %v1869 = vsel %vm1861, %v1693, %v1805
    %v1870 = vsel %vm1862, %v1694, %v1806
    %v1871 = vsel %vm1863, %v1695, %v1807
    %v1872 = vsel %vm1856, %v1696, %v1832
    %v1873 = vsel %vm1857, %v1697, %v1833
    %v1874 = vsel %vm1858, %v1698, %v1834
    %v1875 = vsel %vm1859, %v1699, %v1835
    %v1876 = vsel %vm1860, %v1700, %v1836
    %v1877 = vsel %vm1861, %v1701, %v1837
    %v1878 = vsel %vm1862, %v1702, %v1838
    %v1879 = vsel %vm1863, %v1703, %v1839
    %vm1880 = vcmask 1040384
    %v1881 = vsel %vm1880, %v1864, -inf
    %v1882 = vsel %vm1880, %v1865, -inf
    %v1883 = vsel %vm1880, %v1866, -inf
    %v1884 = vsel %vm1880, %v1867, -inf
    %v1885 = vsel %vm1880, %v1868, -inf
    %v1886 = vmax.f32 %v1881, %v1885
    %v1887 = vsel %vm1880, %v1869, -inf
    %v1888 = vmax.f32 %v1882, %v1887
    %v1889 = vsel %vm1880, %v1870, -inf
    %v1890 = vmax.f32 %v1883, %v1889
    %v1891 = vsel %vm1880, %v1871, -inf
    %v1892 = vmax.f32 %v1884, %v1891
    %v1893 = vmax.f32 %v1886, %v1888
    %v1894 = vmax.f32 %v1890, %v1892
    %v1895 = vmax.f32 %v1893, %v1894
    %v1896 = vlaneseq
    %v1897 = vshrl.u32 %v1896, 7
    %v1898 = vsub.s32 0, %v1897
    %v1899 = vrot.slane %v1895, %v1898
    %vm1900 = vcmp.eq.f32.partialorder %v1864, %v1899
    %vm1901 = vcmp.eq.f32.partialorder %v1865, %v1899
    %vm1902 = vcmp.eq.f32.partialorder %v1866, %v1899
    %vm1903 = vcmp.eq.f32.partialorder %v1867, %v1899
    %vm1904 = vcmp.eq.f32.partialorder %v1868, %v1899
    %vm1905 = vcmp.eq.f32.partialorder %v1869, %v1899
    %vm1906 = vcmp.eq.f32.partialorder %v1870, %v1899
    %vm1907 = vcmp.eq.f32.partialorder %v1871, %v1899
    %v1908 = vsel %vm1900, %v1872, 64
    %v1909 = vsel %vm1901, %v1873, 64
    %v1910 = vsel %vm1902, %v1874, 64
    %v1911 = vsel %vm1903, %v1875, 64
    %v1912 = vsel %vm1904, %v1876, 64
    %v1913 = vsel %vm1905, %v1877, 64
    %v1914 = vsel %vm1906, %v1878, 64
    %v1915 = vsel %vm1907, %v1879, 64
    %v1916 = vsel %vm1880, %v1908, 2147483647
    %v1917 = vsel %vm1880, %v1909, 2147483647
    %v1918 = vsel %vm1880, %v1910, 2147483647
    %v1919 = vsel %vm1880, %v1911, 2147483647
    %v1920 = vsel %vm1880, %v1912, 2147483647
    %vm1921 = vcmp.lt.s32.totalorder %v1916, %v1920
    %v1922 = vsel %vm1921, %v1916, %v1920
    %v1923 = vsel %vm1880, %v1913, 2147483647
    %vm1924 = vcmp.lt.s32.totalorder %v1917, %v1923
    %v1925 = vsel %vm1924, %v1917, %v1923
    %v1926 = vsel %vm1880, %v1914, 2147483647
    %vm1927 = vcmp.lt.s32.totalorder %v1918, %v1926
    %v1928 = vsel %vm1927, %v1918, %v1926
    %v1929 = vsel %vm1880, %v1915, 2147483647
    %vm1930 = vcmp.lt.s32.totalorder %v1919, %v1929
    %v1931 = vsel %vm1930, %v1919, %v1929
    %vm1932 = vcmp.lt.s32.totalorder %v1922, %v1925
    %v1933 = vsel %vm1932, %v1922, %v1925
    %vm1934 = vcmp.lt.s32.totalorder %v1928, %v1931
    %v1935 = vsel %vm1934, %v1928, %v1931
    %vm1936 = vcmp.lt.s32.totalorder %v1933, %v1935
    %v1937 = vsel %vm1936, %v1933, %v1935
    %vm1938 = vcmp.eq.s32.totalorder %v1196, 0
    %vm1939 = vcmp.eq.s32.totalorder %v1197, 0
    %v1940 = vsel %vm1938, %v1899, 0.0
    %v1941 = vsel %vm1939, %v1899, 0.0
    %v1942 = vlaneseq
    %v1943 = vshrl.u32 %v1942, 7
    %v1944 = vsub.s32 0, %v1943
    %v1945 = vrot.slane %v1937, %v1944
    %v1946 = vsel %vm1938, %v1945, 0
    %v1947 = vsel %vm1939, %v1945, 0
    %vm1948 = vcmp.eq.s32.totalorder %v1196, %v1945
    %v1957 = vrot.slane %v572, 7
    %vm1958 = vcmask 1041409
    %v1959 = vsel %vm1958, %v1957, %v571
    %v1960 = vrot.slane %v573, 6
    %vm1961 = vcmask 1042434
    %v1962 = vsel %vm1961, %v1960, %v1959
    %v1963 = vrot.slane %v574, 5
    %vm1964 = vcmask 1043459
    %v1965 = vsel %vm1964, %v1963, %v1962
    %v1966 = vrot.slane %v575, 4
    %vm1967 = vcmask 1044484
    %v1968 = vsel %vm1967, %v1966, %v1965
    %v1969 = vrot.slane %v576, 3
    %vm1970 = vcmask 1045509
    %v1971 = vsel %vm1970, %v1969, %v1968
    %v1972 = vrot.slane %v577, 2
    %vm1973 = vcmask 1046534
    %v1974 = vsel %vm1973, %v1972, %v1971
    %v1975 = vrot.slane %v578, 1
    %vm1976 = vcmask 1047559
    %v1977 = vsel %vm1976, %v1975, %v1974
    %v1979 = vsel %vm1948, -inf, %v1977
    %vm1980 = vcmp.eq.s32.totalorder %v1197, %v1945
    %v1981 = vsel %vm1958, %v660, %v1212
    %v1982 = vrot.slane %v661, 7
    %v1983 = vsel %vm1961, %v1982, %v1981
    %v1984 = vrot.slane %v662, 6
    %v1985 = vsel %vm1964, %v1984, %v1983
    %v1986 = vrot.slane %v663, 5
    %v1987 = vsel %vm1967, %v1986, %v1985
    %v1988 = vrot.slane %v664, 4
    %v1989 = vsel %vm1970, %v1988, %v1987
    %v1990 = vrot.slane %v665, 3
    %v1991 = vsel %vm1973, %v1990, %v1989
    %v1992 = vrot.slane %v666, 2
    %v1993 = vsel %vm1976, %v1992, %v1991
    %v1995 = vsel %vm1980, -inf, %v1993
    %vm1996 = vcmp.eq.s32.totalorder %v1198, %v1945
    %v2005 = vrot.slane %v747, 2
    %v2006 = vrot.slane %v748, 1
    %v2007 = vsel %vm1958, %v2006, %v2005
    %v2008 = vsel %vm1961, %v749, %v2007
    %v2009 = vrot.slane %v750, 7
    %v2010 = vsel %vm1964, %v2009, %v2008
    %v2011 = vrot.slane %v751, 6
    %v2012 = vsel %vm1967, %v2011, %v2010
    %v2013 = vrot.slane %v752, 5
    %v2014 = vsel %vm1970, %v2013, %v2012
    %v2015 = vrot.slane %v753, 4
    %v2016 = vsel %vm1973, %v2015, %v2014
    %v2017 = vrot.slane %v754, 3
    %v2018 = vsel %vm1976, %v2017, %v2016
    %v2020 = vsel %vm1996, -inf, %v2018
    %vm2021 = vcmp.eq.s32.totalorder %v1199, %v1945
    %v2022 = vrot.slane %v835, 3
    %v2023 = vrot.slane %v836, 2
    %v2024 = vsel %vm1958, %v2023, %v2022
    %v2025 = vsel %vm1961, %v1317, %v2024
    %v2026 = vsel %vm1964, %v838, %v2025
    %v2027 = vrot.slane %v839, 7
    %v2028 = vsel %vm1967, %v2027, %v2026
    %v2029 = vrot.slane %v840, 6
    %v2030 = vsel %vm1970, %v2029, %v2028
    %v2031 = vrot.slane %v841, 5
    %v2032 = vsel %vm1973, %v2031, %v2030
    %v2033 = vrot.slane %v842, 4
    %v2034 = vsel %vm1976, %v2033, %v2032
    %v2036 = vsel %vm2021, -inf, %v2034
    %vm2037 = vcmp.eq.s32.totalorder %v1200, %v1945
    %v2046 = vrot.slane %v923, 4
    %v2047 = vrot.slane %v924, 3
    %v2048 = vsel %vm1958, %v2047, %v2046
    %v2049 = vrot.slane %v925, 2
    %v2050 = vsel %vm1961, %v2049, %v2048
    %v2051 = vrot.slane %v926, 1
    %v2052 = vsel %vm1964, %v2051, %v2050
    %v2053 = vsel %vm1967, %v927, %v2052
    %v2054 = vrot.slane %v928, 7
    %v2055 = vsel %vm1970, %v2054, %v2053
    %v2056 = vrot.slane %v929, 6
    %v2057 = vsel %vm1973, %v2056, %v2055
    %v2058 = vrot.slane %v930, 5
    %v2059 = vsel %vm1976, %v2058, %v2057
    %v2061 = vsel %vm2037, -inf, %v2059
    %vm2062 = vcmp.eq.s32.totalorder %v1201, %v1945
    %v2063 = vrot.slane %v1011, 5
    %v2064 = vrot.slane %v1012, 4
    %v2065 = vsel %vm1958, %v2064, %v2063
    %v2066 = vrot.slane %v1013, 3
    %v2067 = vsel %vm1961, %v2066, %v2065
    %v2068 = vrot.slane %v1014, 2
    %v2069 = vsel %vm1964, %v2068, %v2067
    %v2070 = vsel %vm1967, %v1422, %v2069
    %v2071 = vsel %vm1970, %v1016, %v2070
    %v2072 = vrot.slane %v1017, 7
    %v2073 = vsel %vm1973, %v2072, %v2071
    %v2074 = vrot.slane %v1018, 6
    %v2075 = vsel %vm1976, %v2074, %v2073
    %v2077 = vsel %vm2062, -inf, %v2075
    %vm2078 = vcmp.eq.s32.totalorder %v1202, %v1945
    %v2087 = vrot.slane %v1099, 6
    %v2088 = vrot.slane %v1100, 5
    %v2089 = vsel %vm1958, %v2088, %v2087
    %v2090 = vrot.slane %v1101, 4
    %v2091 = vsel %vm1961, %v2090, %v2089
    %v2092 = vrot.slane %v1102, 3
    %v2093 = vsel %vm1964, %v2092, %v2091
    %v2094 = vrot.slane %v1103, 2
    %v2095 = vsel %vm1967, %v2094, %v2093
    %v2096 = vrot.slane %v1104, 1
    %v2097 = vsel %vm1970, %v2096, %v2095
    %v2098 = vsel %vm1973, %v1105, %v2097
    %v2099 = vrot.slane %v1106, 7
    %v2100 = vsel %vm1976, %v2099, %v2098
    %v2102 = vsel %vm2078, -inf, %v2100
    %vm2103 = vcmp.eq.s32.totalorder %v1203, %v1945
    %v2104 = vrot.slane %v1187, 7
    %v2105 = vrot.slane %v1188, 6
    %v2106 = vsel %vm1958, %v2105, %v2104
    %v2107 = vrot.slane %v1189, 5
    %v2108 = vsel %vm1961, %v2107, %v2106
    %v2109 = vrot.slane %v1190, 4
    %v2110 = vsel %vm1964, %v2109, %v2108
    %v2111 = vrot.slane %v1191, 3
    %v2112 = vsel %vm1967, %v2111, %v2110
    %v2113 = vrot.slane %v1192, 2
    %v2114 = vsel %vm1970, %v2113, %v2112
    %v2115 = vsel %vm1973, %v1527, %v2114
    %v2116 = vsel %vm1976, %v1194, %v2115
    %v2118 = vsel %vm2103, -inf, %v2116
    %vm2119 = vcmp.gt.f32.partialorder %v1979, %v1995
    %vm2120 = vcmp.eq.f32.partialorder %v1979, %v1995
    %vm2121 = vmand %vm2120, %vm1244
    %vm2122 = vmor %vm2119, %vm2121
    %v2123 = vsel %vm2122, %v1979, %v1995
    %v2124 = vsel %vm2122, %v1196, %v1197
    %vm2125 = vcmp.gt.f32.partialorder %v2020, %v2036
    %vm2126 = vcmp.eq.f32.partialorder %v2020, %v2036
    %vm2127 = vmand %vm2126, %vm1347
    %vm2128 = vmor %vm2125, %vm2127
    %v2129 = vsel %vm2128, %v2020, %v2036
    %v2130 = vsel %vm2128, %v1198, %v1199
    %vm2131 = vcmp.gt.f32.partialorder %v2061, %v2077
    %vm2132 = vcmp.eq.f32.partialorder %v2061, %v2077
    %vm2133 = vmand %vm2132, %vm1450
    %vm2134 = vmor %vm2131, %vm2133
    %v2135 = vsel %vm2134, %v2061, %v2077
    %v2136 = vsel %vm2134, %v1200, %v1201
    %vm2137 = vcmp.gt.f32.partialorder %v2102, %v2118
    %vm2138 = vcmp.eq.f32.partialorder %v2102, %v2118
    %vm2139 = vmand %vm2138, %vm1553
    %vm2140 = vmor %vm2137, %vm2139
    %v2141 = vsel %vm2140, %v2102, %v2118
    %v2142 = vsel %vm2140, %v1202, %v1203
    %vm2143 = vcmp.gt.f32.partialorder %v2123, %v2129
    %vm2144 = vcmp.eq.f32.partialorder %v2123, %v2129
    %vm2145 = vcmp.lt.s32.totalorder %v2124, %v2130
    %vm2146 = vmand %vm2144, %vm2145
    %vm2147 = vmor %vm2143, %vm2146
    %v2148 = vsel %vm2147, %v2123, %v2129
    %v2149 = vsel %vm2147, %v2124, %v2130
    %vm2150 = vcmp.gt.f32.partialorder %v2135, %v2141
    %vm2151 = vcmp.eq.f32.partialorder %v2135, %v2141
    %vm2152 = vcmp.lt.s32.totalorder %v2136, %v2142
    %vm2153 = vmand %vm2151, %vm2152
    %vm2154 = vmor %vm2150, %vm2153
    %v2155 = vsel %vm2154, %v2135, %v2141
    %v2156 = vsel %vm2154, %v2136, %v2142
    %vm2157 = vcmp.gt.f32.partialorder %v2148, %v2155
    %vm2158 = vcmp.eq.f32.partialorder %v2148, %v2155
    %vm2159 = vcmp.lt.s32.totalorder %v2149, %v2156
    %vm2160 = vmand %vm2158, %vm2159
    %vm2161 = vmor %vm2157, %vm2160
    %v2162 = vsel %vm2161, %v2148, %v2155
    %v2163 = vsel %vm2161, %v2149, %v2156
    %v2164 = vrot.slane %v2162, 4
    %v2165 = vmax.f32 %v2162, %v2164
    %v2166 = vrot.slane %v2165, 2
    %v2167 = vmax.f32 %v2165, %v2166
    %v2168 = vrot.slane %v2167, 1
    %v2169 = vmax.f32 %v2167, %v2168
    %vm2170 = vcmp.eq.f32.partialorder %v2162, %v2169
    %v2171 = vsel %vm2170, %v2163, 64
    %v2172 = vrot.slane %v2171, 4
    %vm2173 = vcmp.lt.s32.totalorder %v2171, %v2172
    %v2174 = vsel %vm2173, %v2171, %v2172
    %v2175 = vrot.slane %v2174, 2
    %vm2176 = vcmp.lt.s32.totalorder %v2174, %v2175
    %v2177 = vsel %vm2176, %v2174, %v2175
    %v2178 = vrot.slane %v2177, 1
    %vm2179 = vcmp.lt.s32.totalorder %v2177, %v2178
    %v2180 = vsel %vm2179, %v2177, %v2178
    %vm2181 = vcmp.eq.s32.totalorder %v1196, 1
    %vm2182 = vcmp.eq.s32.totalorder %v1197, 1
    %v2183 = vsel %vm2181, %v2169, %v1940
    %v2184 = vsel %vm2182, %v2169, %v1941
    %v2185 = vsel %vm2181, %v2180, %v1946
    %v2186 = vsel %vm2182, %v2180, %v1947
    %vm2187 = vcmp.eq.s32.totalorder %v1196, %v2180
    %v2188 = vsel %vm2187, -inf, %v1979
    %vm2189 = vcmp.eq.s32.totalorder %v1197, %v2180
    %v2190 = vsel %vm2189, -inf, %v1995
    %vm2191 = vcmp.eq.s32.totalorder %v1198, %v2180
    %v2192 = vsel %vm2191, -inf, %v2020
    %vm2193 = vcmp.eq.s32.totalorder %v1199, %v2180
    %v2194 = vsel %vm2193, -inf, %v2036
    %vm2195 = vcmp.eq.s32.totalorder %v1200, %v2180
    %v2196 = vsel %vm2195, -inf, %v2061
    %vm2197 = vcmp.eq.s32.totalorder %v1201, %v2180
    %v2198 = vsel %vm2197, -inf, %v2077
    %vm2199 = vcmp.eq.s32.totalorder %v1202, %v2180
    %v2200 = vsel %vm2199, -inf, %v2102
    %vm2201 = vcmp.eq.s32.totalorder %v1203, %v2180
    %v2202 = vsel %vm2201, -inf, %v2118
    %vm2203 = vcmp.gt.f32.partialorder %v2188, %v2190
    %vm2204 = vcmp.eq.f32.partialorder %v2188, %v2190
    %vm2205 = vmand %vm2204, %vm1244
    %vm2206 = vmor %vm2203, %vm2205
    %v2207 = vsel %vm2206, %v2188, %v2190
    %v2208 = vsel %vm2206, %v1196, %v1197
    %vm2209 = vcmp.gt.f32.partialorder %v2192, %v2194
    %vm2210 = vcmp.eq.f32.partialorder %v2192, %v2194
    %vm2211 = vmand %vm2210, %vm1347
    %vm2212 = vmor %vm2209, %vm2211
    %v2213 = vsel %vm2212, %v2192, %v2194
    %v2214 = vsel %vm2212, %v1198, %v1199
    %vm2215 = vcmp.gt.f32.partialorder %v2196, %v2198
    %vm2216 = vcmp.eq.f32.partialorder %v2196, %v2198
    %vm2217 = vmand %vm2216, %vm1450
    %vm2218 = vmor %vm2215, %vm2217
    %v2219 = vsel %vm2218, %v2196, %v2198
    %v2220 = vsel %vm2218, %v1200, %v1201
    %vm2221 = vcmp.gt.f32.partialorder %v2200, %v2202
    %vm2222 = vcmp.eq.f32.partialorder %v2200, %v2202
    %vm2223 = vmand %vm2222, %vm1553
    %vm2224 = vmor %vm2221, %vm2223
    %v2225 = vsel %vm2224, %v2200, %v2202
    %v2226 = vsel %vm2224, %v1202, %v1203
    %vm2227 = vcmp.gt.f32.partialorder %v2207, %v2213
    %vm2228 = vcmp.eq.f32.partialorder %v2207, %v2213
    %vm2229 = vcmp.lt.s32.totalorder %v2208, %v2214
    %vm2230 = vmand %vm2228, %vm2229
    %vm2231 = vmor %vm2227, %vm2230
    %v2232 = vsel %vm2231, %v2207, %v2213
    %v2233 = vsel %vm2231, %v2208, %v2214
    %vm2234 = vcmp.gt.f32.partialorder %v2219, %v2225
    %vm2235 = vcmp.eq.f32.partialorder %v2219, %v2225
    %vm2236 = vcmp.lt.s32.totalorder %v2220, %v2226
    %vm2237 = vmand %vm2235, %vm2236
    %vm2238 = vmor %vm2234, %vm2237
    %v2239 = vsel %vm2238, %v2219, %v2225
    %v2240 = vsel %vm2238, %v2220, %v2226
    %vm2241 = vcmp.gt.f32.partialorder %v2232, %v2239
    %vm2242 = vcmp.eq.f32.partialorder %v2232, %v2239
    %vm2243 = vcmp.lt.s32.totalorder %v2233, %v2240
    %vm2244 = vmand %vm2242, %vm2243
    %vm2245 = vmor %vm2241, %vm2244
    %v2246 = vsel %vm2245, %v2232, %v2239
    %v2247 = vsel %vm2245, %v2233, %v2240
    %v2248 = vrot.slane %v2246, 4
    %v2249 = vmax.f32 %v2246, %v2248
    %v2250 = vrot.slane %v2249, 2
    %v2251 = vmax.f32 %v2249, %v2250
    %v2252 = vrot.slane %v2251, 1
    %v2253 = vmax.f32 %v2251, %v2252
    %vm2254 = vcmp.eq.f32.partialorder %v2246, %v2253
    %v2255 = vsel %vm2254, %v2247, 64
    %v2256 = vrot.slane %v2255, 4
    %vm2257 = vcmp.lt.s32.totalorder %v2255, %v2256
    %v2258 = vsel %vm2257, %v2255, %v2256
    %v2259 = vrot.slane %v2258, 2
    %vm2260 = vcmp.lt.s32.totalorder %v2258, %v2259
    %v2261 = vsel %vm2260, %v2258, %v2259
    %v2262 = vrot.slane %v2261, 1
    %vm2263 = vcmp.lt.s32.totalorder %v2261, %v2262
    %v2264 = vsel %vm2263, %v2261, %v2262
    %vm2265 = vcmp.eq.s32.totalorder %v1196, 2
    %vm2266 = vcmp.eq.s32.totalorder %v1197, 2
    %v2267 = vsel %vm2265, %v2253, %v2183
    %v2268 = vsel %vm2266, %v2253, %v2184
    %v2269 = vsel %vm2265, %v2264, %v2185
    %v2270 = vsel %vm2266, %v2264, %v2186
    %vm2271 = vcmp.eq.s32.totalorder %v1196, %v2264
    %v2272 = vsel %vm2271, -inf, %v2188
    %vm2273 = vcmp.eq.s32.totalorder %v1197, %v2264
    %v2274 = vsel %vm2273, -inf, %v2190
    %vm2275 = vcmp.eq.s32.totalorder %v1198, %v2264
    %v2276 = vsel %vm2275, -inf, %v2192
    %vm2277 = vcmp.eq.s32.totalorder %v1199, %v2264
    %v2278 = vsel %vm2277, -inf, %v2194
    %vm2279 = vcmp.eq.s32.totalorder %v1200, %v2264
    %v2280 = vsel %vm2279, -inf, %v2196
    %vm2281 = vcmp.eq.s32.totalorder %v1201, %v2264
    %v2282 = vsel %vm2281, -inf, %v2198
    %vm2283 = vcmp.eq.s32.totalorder %v1202, %v2264
    %v2284 = vsel %vm2283, -inf, %v2200
    %vm2285 = vcmp.eq.s32.totalorder %v1203, %v2264
    %v2286 = vsel %vm2285, -inf, %v2202
    %vm2287 = vcmp.gt.f32.partialorder %v2272, %v2274
    %vm2288 = vcmp.eq.f32.partialorder %v2272, %v2274
    %vm2289 = vmand %vm2288, %vm1244
    %vm2290 = vmor %vm2287, %vm2289
    %v2291 = vsel %vm2290, %v2272, %v2274
    %v2292 = vsel %vm2290, %v1196, %v1197
    %vm2293 = vcmp.gt.f32.partialorder %v2276, %v2278
    %vm2294 = vcmp.eq.f32.partialorder %v2276, %v2278
    %vm2295 = vmand %vm2294, %vm1347
    %vm2296 = vmor %vm2293, %vm2295
    %v2297 = vsel %vm2296, %v2276, %v2278
    %v2298 = vsel %vm2296, %v1198, %v1199
    %vm2299 = vcmp.gt.f32.partialorder %v2280, %v2282
    %vm2300 = vcmp.eq.f32.partialorder %v2280, %v2282
    %vm2301 = vmand %vm2300, %vm1450
    %vm2302 = vmor %vm2299, %vm2301
    %v2303 = vsel %vm2302, %v2280, %v2282
    %v2304 = vsel %vm2302, %v1200, %v1201
    %vm2305 = vcmp.gt.f32.partialorder %v2284, %v2286
    %vm2306 = vcmp.eq.f32.partialorder %v2284, %v2286
    %vm2307 = vmand %vm2306, %vm1553
    %vm2308 = vmor %vm2305, %vm2307
    %v2309 = vsel %vm2308, %v2284, %v2286
    %v2310 = vsel %vm2308, %v1202, %v1203
    %vm2311 = vcmp.gt.f32.partialorder %v2291, %v2297
    %vm2312 = vcmp.eq.f32.partialorder %v2291, %v2297
    %vm2313 = vcmp.lt.s32.totalorder %v2292, %v2298
    %vm2314 = vmand %vm2312, %vm2313
    %vm2315 = vmor %vm2311, %vm2314
    %v2316 = vsel %vm2315, %v2291, %v2297
    %v2317 = vsel %vm2315, %v2292, %v2298
    %vm2318 = vcmp.gt.f32.partialorder %v2303, %v2309
    %vm2319 = vcmp.eq.f32.partialorder %v2303, %v2309
    %vm2320 = vcmp.lt.s32.totalorder %v2304, %v2310
    %vm2321 = vmand %vm2319, %vm2320
    %vm2322 = vmor %vm2318, %vm2321
    %v2323 = vsel %vm2322, %v2303, %v2309
    %v2324 = vsel %vm2322, %v2304, %v2310
    %vm2325 = vcmp.gt.f32.partialorder %v2316, %v2323
    %vm2326 = vcmp.eq.f32.partialorder %v2316, %v2323
    %vm2327 = vcmp.lt.s32.totalorder %v2317, %v2324
    %vm2328 = vmand %vm2326, %vm2327
    %vm2329 = vmor %vm2325, %vm2328
    %v2330 = vsel %vm2329, %v2316, %v2323
    %v2331 = vsel %vm2329, %v2317, %v2324
    %v2332 = vrot.slane %v2330, 4
    %v2333 = vmax.f32 %v2330, %v2332
    %v2334 = vrot.slane %v2333, 2
    %v2335 = vmax.f32 %v2333, %v2334
    %v2336 = vrot.slane %v2335, 1
    %v2337 = vmax.f32 %v2335, %v2336
    %vm2338 = vcmp.eq.f32.partialorder %v2330, %v2337
    %v2339 = vsel %vm2338, %v2331, 64
    %v2340 = vrot.slane %v2339, 4
    %vm2341 = vcmp.lt.s32.totalorder %v2339, %v2340
    %v2342 = vsel %vm2341, %v2339, %v2340
    %v2343 = vrot.slane %v2342, 2
    %vm2344 = vcmp.lt.s32.totalorder %v2342, %v2343
    %v2345 = vsel %vm2344, %v2342, %v2343
    %v2346 = vrot.slane %v2345, 1
    %vm2347 = vcmp.lt.s32.totalorder %v2345, %v2346
    %v2348 = vsel %vm2347, %v2345, %v2346
    %vm2349 = vcmp.eq.s32.totalorder %v1196, 3
    %vm2350 = vcmp.eq.s32.totalorder %v1197, 3
    %v2351 = vsel %vm2349, %v2337, %v2267
    %v2352 = vsel %vm2350, %v2337, %v2268
    %v2353 = vsel %vm2349, %v2348, %v2269
    %v2354 = vsel %vm2350, %v2348, %v2270
    %vm2355 = vcmp.eq.s32.totalorder %v1196, %v2348
    %v2356 = vsel %vm2355, -inf, %v2272
    %vm2357 = vcmp.eq.s32.totalorder %v1197, %v2348
    %v2358 = vsel %vm2357, -inf, %v2274
    %vm2359 = vcmp.eq.s32.totalorder %v1198, %v2348
    %v2360 = vsel %vm2359, -inf, %v2276
    %vm2361 = vcmp.eq.s32.totalorder %v1199, %v2348
    %v2362 = vsel %vm2361, -inf, %v2278
    %vm2363 = vcmp.eq.s32.totalorder %v1200, %v2348
    %v2364 = vsel %vm2363, -inf, %v2280
    %vm2365 = vcmp.eq.s32.totalorder %v1201, %v2348
    %v2366 = vsel %vm2365, -inf, %v2282
    %vm2367 = vcmp.eq.s32.totalorder %v1202, %v2348
    %v2368 = vsel %vm2367, -inf, %v2284
    %vm2369 = vcmp.eq.s32.totalorder %v1203, %v2348
    %v2370 = vsel %vm2369, -inf, %v2286
    %vm2371 = vcmp.gt.f32.partialorder %v2356, %v2358
    %vm2372 = vcmp.eq.f32.partialorder %v2356, %v2358
    %vm2373 = vmand %vm2372, %vm1244
    %vm2374 = vmor %vm2371, %vm2373
    %v2375 = vsel %vm2374, %v2356, %v2358
    %v2376 = vsel %vm2374, %v1196, %v1197
    %vm2377 = vcmp.gt.f32.partialorder %v2360, %v2362
    %vm2378 = vcmp.eq.f32.partialorder %v2360, %v2362
    %vm2379 = vmand %vm2378, %vm1347
    %vm2380 = vmor %vm2377, %vm2379
    %v2381 = vsel %vm2380, %v2360, %v2362
    %v2382 = vsel %vm2380, %v1198, %v1199
    %vm2383 = vcmp.gt.f32.partialorder %v2364, %v2366
    %vm2384 = vcmp.eq.f32.partialorder %v2364, %v2366
    %vm2385 = vmand %vm2384, %vm1450
    %vm2386 = vmor %vm2383, %vm2385
    %v2387 = vsel %vm2386, %v2364, %v2366
    %v2388 = vsel %vm2386, %v1200, %v1201
    %vm2389 = vcmp.gt.f32.partialorder %v2368, %v2370
    %vm2390 = vcmp.eq.f32.partialorder %v2368, %v2370
    %vm2391 = vmand %vm2390, %vm1553
    %vm2392 = vmor %vm2389, %vm2391
    %v2393 = vsel %vm2392, %v2368, %v2370
    %v2394 = vsel %vm2392, %v1202, %v1203
    %vm2395 = vcmp.gt.f32.partialorder %v2375, %v2381
    %vm2396 = vcmp.eq.f32.partialorder %v2375, %v2381
    %vm2397 = vcmp.lt.s32.totalorder %v2376, %v2382
    %vm2398 = vmand %vm2396, %vm2397
    %vm2399 = vmor %vm2395, %vm2398
    %v2400 = vsel %vm2399, %v2375, %v2381
    %v2401 = vsel %vm2399, %v2376, %v2382
    %vm2402 = vcmp.gt.f32.partialorder %v2387, %v2393
    %vm2403 = vcmp.eq.f32.partialorder %v2387, %v2393
    %vm2404 = vcmp.lt.s32.totalorder %v2388, %v2394
    %vm2405 = vmand %vm2403, %vm2404
    %vm2406 = vmor %vm2402, %vm2405
    %v2407 = vsel %vm2406, %v2387, %v2393
    %v2408 = vsel %vm2406, %v2388, %v2394
    %vm2409 = vcmp.gt.f32.partialorder %v2400, %v2407
    %vm2410 = vcmp.eq.f32.partialorder %v2400, %v2407
    %vm2411 = vcmp.lt.s32.totalorder %v2401, %v2408
    %vm2412 = vmand %vm2410, %vm2411
    %vm2413 = vmor %vm2409, %vm2412
    %v2414 = vsel %vm2413, %v2400, %v2407
    %v2415 = vsel %vm2413, %v2401, %v2408
    %v2416 = vrot.slane %v2414, 4
    %v2417 = vmax.f32 %v2414, %v2416
    %v2418 = vrot.slane %v2417, 2
    %v2419 = vmax.f32 %v2417, %v2418
    %v2420 = vrot.slane %v2419, 1
    %v2421 = vmax.f32 %v2419, %v2420
    %vm2422 = vcmp.eq.f32.partialorder %v2414, %v2421
    %v2423 = vsel %vm2422, %v2415, 64
    %v2424 = vrot.slane %v2423, 4
    %vm2425 = vcmp.lt.s32.totalorder %v2423, %v2424
    %v2426 = vsel %vm2425, %v2423, %v2424
    %v2427 = vrot.slane %v2426, 2
    %vm2428 = vcmp.lt.s32.totalorder %v2426, %v2427
    %v2429 = vsel %vm2428, %v2426, %v2427
    %v2430 = vrot.slane %v2429, 1
    %vm2431 = vcmp.lt.s32.totalorder %v2429, %v2430
    %v2432 = vsel %vm2431, %v2429, %v2430
    %vm2433 = vcmp.eq.s32.totalorder %v1196, 4
    %vm2434 = vcmp.eq.s32.totalorder %v1197, 4
    %v2435 = vsel %vm2433, %v2421, %v2351
    %v2436 = vsel %vm2434, %v2421, %v2352
    %v2437 = vsel %vm2433, %v2432, %v2353
    %v2438 = vsel %vm2434, %v2432, %v2354
    %vm2439 = vcmp.eq.s32.totalorder %v1196, %v2432
    %v2440 = vsel %vm2439, -inf, %v2356
    %vm2441 = vcmp.eq.s32.totalorder %v1197, %v2432
    %v2442 = vsel %vm2441, -inf, %v2358
    %vm2443 = vcmp.eq.s32.totalorder %v1198, %v2432
    %v2444 = vsel %vm2443, -inf, %v2360
    %vm2445 = vcmp.eq.s32.totalorder %v1199, %v2432
    %v2446 = vsel %vm2445, -inf, %v2362
    %vm2447 = vcmp.eq.s32.totalorder %v1200, %v2432
    %v2448 = vsel %vm2447, -inf, %v2364
    %vm2449 = vcmp.eq.s32.totalorder %v1201, %v2432
    %v2450 = vsel %vm2449, -inf, %v2366
    %vm2451 = vcmp.eq.s32.totalorder %v1202, %v2432
    %v2452 = vsel %vm2451, -inf, %v2368
    %vm2453 = vcmp.eq.s32.totalorder %v1203, %v2432
    %v2454 = vsel %vm2453, -inf, %v2370
    %vm2455 = vcmp.gt.f32.partialorder %v2440, %v2442
    %vm2456 = vcmp.eq.f32.partialorder %v2440, %v2442
    %vm2457 = vmand %vm2456, %vm1244
    %vm2458 = vmor %vm2455, %vm2457
    %v2459 = vsel %vm2458, %v2440, %v2442
    %v2460 = vsel %vm2458, %v1196, %v1197
    %vm2461 = vcmp.gt.f32.partialorder %v2444, %v2446
    %vm2462 = vcmp.eq.f32.partialorder %v2444, %v2446
    %vm2463 = vmand %vm2462, %vm1347
    %vm2464 = vmor %vm2461, %vm2463
    %v2465 = vsel %vm2464, %v2444, %v2446
    %v2466 = vsel %vm2464, %v1198, %v1199
    %vm2467 = vcmp.gt.f32.partialorder %v2448, %v2450
    %vm2468 = vcmp.eq.f32.partialorder %v2448, %v2450
    %vm2469 = vmand %vm2468, %vm1450
    %vm2470 = vmor %vm2467, %vm2469
    %v2471 = vsel %vm2470, %v2448, %v2450
    %v2472 = vsel %vm2470, %v1200, %v1201
    %vm2473 = vcmp.gt.f32.partialorder %v2452, %v2454
    %vm2474 = vcmp.eq.f32.partialorder %v2452, %v2454
    %vm2475 = vmand %vm2474, %vm1553
    %vm2476 = vmor %vm2473, %vm2475
    %v2477 = vsel %vm2476, %v2452, %v2454
    %v2478 = vsel %vm2476, %v1202, %v1203
    %vm2479 = vcmp.gt.f32.partialorder %v2459, %v2465
    %vm2480 = vcmp.eq.f32.partialorder %v2459, %v2465
    %vm2481 = vcmp.lt.s32.totalorder %v2460, %v2466
    %vm2482 = vmand %vm2480, %vm2481
    %vm2483 = vmor %vm2479, %vm2482
    %v2484 = vsel %vm2483, %v2459, %v2465
    %v2485 = vsel %vm2483, %v2460, %v2466
    %vm2486 = vcmp.gt.f32.partialorder %v2471, %v2477
    %vm2487 = vcmp.eq.f32.partialorder %v2471, %v2477
    %vm2488 = vcmp.lt.s32.totalorder %v2472, %v2478
    %vm2489 = vmand %vm2487, %vm2488
    %vm2490 = vmor %vm2486, %vm2489
    %v2491 = vsel %vm2490, %v2471, %v2477
    %v2492 = vsel %vm2490, %v2472, %v2478
    %vm2493 = vcmp.gt.f32.partialorder %v2484, %v2491
    %vm2494 = vcmp.eq.f32.partialorder %v2484, %v2491
    %vm2495 = vcmp.lt.s32.totalorder %v2485, %v2492
    %vm2496 = vmand %vm2494, %vm2495
    %vm2497 = vmor %vm2493, %vm2496
    %v2498 = vsel %vm2497, %v2484, %v2491
    %v2499 = vsel %vm2497, %v2485, %v2492
    %v2500 = vrot.slane %v2498, 4
    %v2501 = vmax.f32 %v2498, %v2500
    %v2502 = vrot.slane %v2501, 2
    %v2503 = vmax.f32 %v2501, %v2502
    %v2504 = vrot.slane %v2503, 1
    %v2505 = vmax.f32 %v2503, %v2504
    %vm2506 = vcmp.eq.f32.partialorder %v2498, %v2505
    %v2507 = vsel %vm2506, %v2499, 64
    %v2508 = vrot.slane %v2507, 4
    %vm2509 = vcmp.lt.s32.totalorder %v2507, %v2508
    %v2510 = vsel %vm2509, %v2507, %v2508
    %v2511 = vrot.slane %v2510, 2
    %vm2512 = vcmp.lt.s32.totalorder %v2510, %v2511
    %v2513 = vsel %vm2512, %v2510, %v2511
    %v2514 = vrot.slane %v2513, 1
    %vm2515 = vcmp.lt.s32.totalorder %v2513, %v2514
    %v2516 = vsel %vm2515, %v2513, %v2514
    %vm2517 = vcmp.eq.s32.totalorder %v1196, 5
    %vm2518 = vcmp.eq.s32.totalorder %v1197, 5
    %v2519 = vsel %vm2517, %v2505, %v2435
    %v2520 = vsel %vm2518, %v2505, %v2436
    %v2521 = vsel %vm2517, %v2516, %v2437
    %v2522 = vsel %vm2518, %v2516, %v2438
    %vm2523 = vcmp.eq.s32.totalorder %v1196, %v2516
    %v2524 = vsel %vm2523, -inf, %v2440
    %vm2525 = vcmp.eq.s32.totalorder %v1197, %v2516
    %v2526 = vsel %vm2525, -inf, %v2442
    %vm2527 = vcmp.eq.s32.totalorder %v1198, %v2516
    %v2528 = vsel %vm2527, -inf, %v2444
    %vm2529 = vcmp.eq.s32.totalorder %v1199, %v2516
    %v2530 = vsel %vm2529, -inf, %v2446
    %vm2531 = vcmp.eq.s32.totalorder %v1200, %v2516
    %v2532 = vsel %vm2531, -inf, %v2448
    %vm2533 = vcmp.eq.s32.totalorder %v1201, %v2516
    %v2534 = vsel %vm2533, -inf, %v2450
    %vm2535 = vcmp.eq.s32.totalorder %v1202, %v2516
    %v2536 = vsel %vm2535, -inf, %v2452
    %vm2537 = vcmp.eq.s32.totalorder %v1203, %v2516
    %v2538 = vsel %vm2537, -inf, %v2454
    %vm2539 = vcmp.gt.f32.partialorder %v2524, %v2526
    %vm2540 = vcmp.eq.f32.partialorder %v2524, %v2526
    %vm2541 = vmand %vm2540, %vm1244
    %vm2542 = vmor %vm2539, %vm2541
    %v2543 = vsel %vm2542, %v2524, %v2526
    %v2544 = vsel %vm2542, %v1196, %v1197
    %vm2545 = vcmp.gt.f32.partialorder %v2528, %v2530
    %vm2546 = vcmp.eq.f32.partialorder %v2528, %v2530
    %vm2547 = vmand %vm2546, %vm1347
    %vm2548 = vmor %vm2545, %vm2547
    %v2549 = vsel %vm2548, %v2528, %v2530
    %v2550 = vsel %vm2548, %v1198, %v1199
    %vm2551 = vcmp.gt.f32.partialorder %v2532, %v2534
    %vm2552 = vcmp.eq.f32.partialorder %v2532, %v2534
    %vm2553 = vmand %vm2552, %vm1450
    %vm2554 = vmor %vm2551, %vm2553
    %v2555 = vsel %vm2554, %v2532, %v2534
    %v2556 = vsel %vm2554, %v1200, %v1201
    %vm2557 = vcmp.gt.f32.partialorder %v2536, %v2538
    %vm2558 = vcmp.eq.f32.partialorder %v2536, %v2538
    %vm2559 = vmand %vm2558, %vm1553
    %vm2560 = vmor %vm2557, %vm2559
    %v2561 = vsel %vm2560, %v2536, %v2538
    %v2562 = vsel %vm2560, %v1202, %v1203
    %vm2563 = vcmp.gt.f32.partialorder %v2543, %v2549
    %vm2564 = vcmp.eq.f32.partialorder %v2543, %v2549
    %vm2565 = vcmp.lt.s32.totalorder %v2544, %v2550
    %vm2566 = vmand %vm2564, %vm2565
    %vm2567 = vmor %vm2563, %vm2566
    %v2568 = vsel %vm2567, %v2543, %v2549
    %v2569 = vsel %vm2567, %v2544, %v2550
    %vm2570 = vcmp.gt.f32.partialorder %v2555, %v2561
    %vm2571 = vcmp.eq.f32.partialorder %v2555, %v2561
    %vm2572 = vcmp.lt.s32.totalorder %v2556, %v2562
    %vm2573 = vmand %vm2571, %vm2572
    %vm2574 = vmor %vm2570, %vm2573
    %v2575 = vsel %vm2574, %v2555, %v2561
    %v2576 = vsel %vm2574, %v2556, %v2562
    %vm2577 = vcmp.gt.f32.partialorder %v2568, %v2575
    %vm2578 = vcmp.eq.f32.partialorder %v2568, %v2575
    %vm2579 = vcmp.lt.s32.totalorder %v2569, %v2576
    %vm2580 = vmand %vm2578, %vm2579
    %vm2581 = vmor %vm2577, %vm2580
    %v2582 = vsel %vm2581, %v2568, %v2575
    %v2583 = vsel %vm2581, %v2569, %v2576
    %v2584 = vrot.slane %v2582, 4
    %v2585 = vmax.f32 %v2582, %v2584
    %v2586 = vrot.slane %v2585, 2
    %v2587 = vmax.f32 %v2585, %v2586
    %v2588 = vrot.slane %v2587, 1
    %v2589 = vmax.f32 %v2587, %v2588
    %vm2590 = vcmp.eq.f32.partialorder %v2582, %v2589
    %v2591 = vsel %vm2590, %v2583, 64
    %v2592 = vrot.slane %v2591, 4
    %vm2593 = vcmp.lt.s32.totalorder %v2591, %v2592
    %v2594 = vsel %vm2593, %v2591, %v2592
    %v2595 = vrot.slane %v2594, 2
    %vm2596 = vcmp.lt.s32.totalorder %v2594, %v2595
    %v2597 = vsel %vm2596, %v2594, %v2595
    %v2598 = vrot.slane %v2597, 1
    %vm2599 = vcmp.lt.s32.totalorder %v2597, %v2598
    %v2600 = vsel %vm2599, %v2597, %v2598
    %vm2601 = vcmp.eq.s32.totalorder %v1196, 6
    %vm2602 = vcmp.eq.s32.totalorder %v1197, 6
    %v2603 = vsel %vm2601, %v2589, %v2519
    %v2604 = vsel %vm2602, %v2589, %v2520
    %v2605 = vsel %vm2601, %v2600, %v2521
    %v2606 = vsel %vm2602, %v2600, %v2522
    %vm2607 = vcmp.eq.s32.totalorder %v1196, %v2600
    %v2608 = vsel %vm2607, -inf, %v2524
    %vm2609 = vcmp.eq.s32.totalorder %v1197, %v2600
    %v2610 = vsel %vm2609, -inf, %v2526
    %vm2611 = vcmp.eq.s32.totalorder %v1198, %v2600
    %v2612 = vsel %vm2611, -inf, %v2528
    %vm2613 = vcmp.eq.s32.totalorder %v1199, %v2600
    %v2614 = vsel %vm2613, -inf, %v2530
    %vm2615 = vcmp.eq.s32.totalorder %v1200, %v2600
    %v2616 = vsel %vm2615, -inf, %v2532
    %vm2617 = vcmp.eq.s32.totalorder %v1201, %v2600
    %v2618 = vsel %vm2617, -inf, %v2534
    %vm2619 = vcmp.eq.s32.totalorder %v1202, %v2600
    %v2620 = vsel %vm2619, -inf, %v2536
    %vm2621 = vcmp.eq.s32.totalorder %v1203, %v2600
    %v2622 = vsel %vm2621, -inf, %v2538
    %vm2623 = vcmp.gt.f32.partialorder %v2608, %v2610
    %vm2624 = vcmp.eq.f32.partialorder %v2608, %v2610
    %vm2625 = vmand %vm2624, %vm1244
    %vm2626 = vmor %vm2623, %vm2625
    %v2627 = vsel %vm2626, %v2608, %v2610
    %v2628 = vsel %vm2626, %v1196, %v1197
    %vm2629 = vcmp.gt.f32.partialorder %v2612, %v2614
    %vm2630 = vcmp.eq.f32.partialorder %v2612, %v2614
    %vm2631 = vmand %vm2630, %vm1347
    %vm2632 = vmor %vm2629, %vm2631
    %v2633 = vsel %vm2632, %v2612, %v2614
    %v2634 = vsel %vm2632, %v1198, %v1199
    %vm2635 = vcmp.gt.f32.partialorder %v2616, %v2618
    %vm2636 = vcmp.eq.f32.partialorder %v2616, %v2618
    %vm2637 = vmand %vm2636, %vm1450
    %vm2638 = vmor %vm2635, %vm2637
    %v2639 = vsel %vm2638, %v2616, %v2618
    %v2640 = vsel %vm2638, %v1200, %v1201
    %vm2641 = vcmp.gt.f32.partialorder %v2620, %v2622
    %vm2642 = vcmp.eq.f32.partialorder %v2620, %v2622
    %vm2643 = vmand %vm2642, %vm1553
    %vm2644 = vmor %vm2641, %vm2643
    %v2645 = vsel %vm2644, %v2620, %v2622
    %v2646 = vsel %vm2644, %v1202, %v1203
    %vm2647 = vcmp.gt.f32.partialorder %v2627, %v2633
    %vm2648 = vcmp.eq.f32.partialorder %v2627, %v2633
    %vm2649 = vcmp.lt.s32.totalorder %v2628, %v2634
    %vm2650 = vmand %vm2648, %vm2649
    %vm2651 = vmor %vm2647, %vm2650
    %v2652 = vsel %vm2651, %v2627, %v2633
    %v2653 = vsel %vm2651, %v2628, %v2634
    %vm2654 = vcmp.gt.f32.partialorder %v2639, %v2645
    %vm2655 = vcmp.eq.f32.partialorder %v2639, %v2645
    %vm2656 = vcmp.lt.s32.totalorder %v2640, %v2646
    %vm2657 = vmand %vm2655, %vm2656
    %vm2658 = vmor %vm2654, %vm2657
    %v2659 = vsel %vm2658, %v2639, %v2645
    %v2660 = vsel %vm2658, %v2640, %v2646
    %vm2661 = vcmp.gt.f32.partialorder %v2652, %v2659
    %vm2662 = vcmp.eq.f32.partialorder %v2652, %v2659
    %vm2663 = vcmp.lt.s32.totalorder %v2653, %v2660
    %vm2664 = vmand %vm2662, %vm2663
    %vm2665 = vmor %vm2661, %vm2664
    %v2666 = vsel %vm2665, %v2652, %v2659
    %v2667 = vsel %vm2665, %v2653, %v2660
    %v2668 = vrot.slane %v2666, 4
    %v2669 = vmax.f32 %v2666, %v2668
    %v2670 = vrot.slane %v2669, 2
    %v2671 = vmax.f32 %v2669, %v2670
    %v2672 = vrot.slane %v2671, 1
    %v2673 = vmax.f32 %v2671, %v2672
    %vm2674 = vcmp.eq.f32.partialorder %v2666, %v2673
    %v2675 = vsel %vm2674, %v2667, 64
    %v2676 = vrot.slane %v2675, 4
    %vm2677 = vcmp.lt.s32.totalorder %v2675, %v2676
    %v2678 = vsel %vm2677, %v2675, %v2676
    %v2679 = vrot.slane %v2678, 2
    %vm2680 = vcmp.lt.s32.totalorder %v2678, %v2679
    %v2681 = vsel %vm2680, %v2678, %v2679
    %v2682 = vrot.slane %v2681, 1
    %vm2683 = vcmp.lt.s32.totalorder %v2681, %v2682
    %v2684 = vsel %vm2683, %v2681, %v2682
    %vm2685 = vcmp.eq.s32.totalorder %v1196, 7
    %vm2686 = vcmp.eq.s32.totalorder %v1197, 7
    %v2687 = vsel %vm2685, %v2673, %v2603
    %v2688 = vsel %vm2686, %v2673, %v2604
    %v2689 = vsel %vm2685, %v2684, %v2605
    %v2690 = vsel %vm2686, %v2684, %v2606
    %vm2691 = vcmp.eq.s32.totalorder %v1196, %v2684
    %v2692 = vsel %vm2691, -inf, %v2608
    %vm2693 = vcmp.eq.s32.totalorder %v1197, %v2684
    %v2694 = vsel %vm2693, -inf, %v2610
    %vm2695 = vcmp.eq.s32.totalorder %v1198, %v2684
    %v2696 = vsel %vm2695, -inf, %v2612
    %vm2697 = vcmp.eq.s32.totalorder %v1199, %v2684
    %v2698 = vsel %vm2697, -inf, %v2614
    %vm2699 = vcmp.eq.s32.totalorder %v1200, %v2684
    %v2700 = vsel %vm2699, -inf, %v2616
    %vm2701 = vcmp.eq.s32.totalorder %v1201, %v2684
    %v2702 = vsel %vm2701, -inf, %v2618
    %vm2703 = vcmp.eq.s32.totalorder %v1202, %v2684
    %v2704 = vsel %vm2703, -inf, %v2620
    %vm2705 = vcmp.eq.s32.totalorder %v1203, %v2684
    %v2706 = vsel %vm2705, -inf, %v2622
    %vm2707 = vcmp.gt.f32.partialorder %v2692, %v2694
    %vm2708 = vcmp.eq.f32.partialorder %v2692, %v2694
    %vm2709 = vmand %vm2708, %vm1244
    %vm2710 = vmor %vm2707, %vm2709
    %v2711 = vsel %vm2710, %v2692, %v2694
    %v2712 = vsel %vm2710, %v1196, %v1197
    %vm2713 = vcmp.gt.f32.partialorder %v2696, %v2698
    %vm2714 = vcmp.eq.f32.partialorder %v2696, %v2698
    %vm2715 = vmand %vm2714, %vm1347
    %vm2716 = vmor %vm2713, %vm2715
    %v2717 = vsel %vm2716, %v2696, %v2698
    %v2718 = vsel %vm2716, %v1198, %v1199
    %vm2719 = vcmp.gt.f32.partialorder %v2700, %v2702
    %vm2720 = vcmp.eq.f32.partialorder %v2700, %v2702
    %vm2721 = vmand %vm2720, %vm1450
    %vm2722 = vmor %vm2719, %vm2721
    %v2723 = vsel %vm2722, %v2700, %v2702
    %v2724 = vsel %vm2722, %v1200, %v1201
    %vm2725 = vcmp.gt.f32.partialorder %v2704, %v2706
    %vm2726 = vcmp.eq.f32.partialorder %v2704, %v2706
    %vm2727 = vmand %vm2726, %vm1553
    %vm2728 = vmor %vm2725, %vm2727
    %v2729 = vsel %vm2728, %v2704, %v2706
    %v2730 = vsel %vm2728, %v1202, %v1203
    %vm2731 = vcmp.gt.f32.partialorder %v2711, %v2717
    %vm2732 = vcmp.eq.f32.partialorder %v2711, %v2717
    %vm2733 = vcmp.lt.s32.totalorder %v2712, %v2718
    %vm2734 = vmand %vm2732, %vm2733
    %vm2735 = vmor %vm2731, %vm2734
    %v2736 = vsel %vm2735, %v2711, %v2717
    %v2737 = vsel %vm2735, %v2712, %v2718
    %vm2738 = vcmp.gt.f32.partialorder %v2723, %v2729
    %vm2739 = vcmp.eq.f32.partialorder %v2723, %v2729
    %vm2740 = vcmp.lt.s32.totalorder %v2724, %v2730
    %vm2741 = vmand %vm2739, %vm2740
    %vm2742 = vmor %vm2738, %vm2741
    %v2743 = vsel %vm2742, %v2723, %v2729
    %v2744 = vsel %vm2742, %v2724, %v2730
    %vm2745 = vcmp.gt.f32.partialorder %v2736, %v2743
    %vm2746 = vcmp.eq.f32.partialorder %v2736, %v2743
    %vm2747 = vcmp.lt.s32.totalorder %v2737, %v2744
    %vm2748 = vmand %vm2746, %vm2747
    %vm2749 = vmor %vm2745, %vm2748
    %v2750 = vsel %vm2749, %v2736, %v2743
    %v2751 = vsel %vm2749, %v2737, %v2744
    %v2752 = vrot.slane %v2750, 4
    %v2753 = vmax.f32 %v2750, %v2752
    %v2754 = vrot.slane %v2753, 2
    %v2755 = vmax.f32 %v2753, %v2754
    %v2756 = vrot.slane %v2755, 1
    %v2757 = vmax.f32 %v2755, %v2756
    %vm2758 = vcmp.eq.f32.partialorder %v2750, %v2757
    %v2759 = vsel %vm2758, %v2751, 64
    %v2760 = vrot.slane %v2759, 4
    %vm2761 = vcmp.lt.s32.totalorder %v2759, %v2760
    %v2762 = vsel %vm2761, %v2759, %v2760
    %v2763 = vrot.slane %v2762, 2
    %vm2764 = vcmp.lt.s32.totalorder %v2762, %v2763
    %v2765 = vsel %vm2764, %v2762, %v2763
    %v2766 = vrot.slane %v2765, 1
    %vm2767 = vcmp.lt.s32.totalorder %v2765, %v2766
    %v2768 = vsel %vm2767, %v2765, %v2766
    %vm2769 = vcmp.eq.s32.totalorder %v1196, 8
    %vm2770 = vcmp.eq.s32.totalorder %v1197, 8
    %v2771 = vsel %vm2769, %v2757, %v2687
    %v2772 = vsel %vm2770, %v2757, %v2688
    %v2773 = vsel %vm2769, %v2768, %v2689
    %v2774 = vsel %vm2770, %v2768, %v2690
    %vm2775 = vcmp.eq.s32.totalorder %v1196, %v2768
    %v2776 = vsel %vm2775, -inf, %v2692
    %vm2777 = vcmp.eq.s32.totalorder %v1197, %v2768
    %v2778 = vsel %vm2777, -inf, %v2694
    %vm2779 = vcmp.eq.s32.totalorder %v1198, %v2768
    %v2780 = vsel %vm2779, -inf, %v2696
    %vm2781 = vcmp.eq.s32.totalorder %v1199, %v2768
    %v2782 = vsel %vm2781, -inf, %v2698
    %vm2783 = vcmp.eq.s32.totalorder %v1200, %v2768
    %v2784 = vsel %vm2783, -inf, %v2700
    %vm2785 = vcmp.eq.s32.totalorder %v1201, %v2768
    %v2786 = vsel %vm2785, -inf, %v2702
    %vm2787 = vcmp.eq.s32.totalorder %v1202, %v2768
    %v2788 = vsel %vm2787, -inf, %v2704
    %vm2789 = vcmp.eq.s32.totalorder %v1203, %v2768
    %v2790 = vsel %vm2789, -inf, %v2706
    %vm2791 = vcmp.gt.f32.partialorder %v2776, %v2778
    %vm2792 = vcmp.eq.f32.partialorder %v2776, %v2778
    %vm2793 = vmand %vm2792, %vm1244
    %vm2794 = vmor %vm2791, %vm2793
    %v2795 = vsel %vm2794, %v2776, %v2778
    %v2796 = vsel %vm2794, %v1196, %v1197
    %vm2797 = vcmp.gt.f32.partialorder %v2780, %v2782
    %vm2798 = vcmp.eq.f32.partialorder %v2780, %v2782
    %vm2799 = vmand %vm2798, %vm1347
    %vm2800 = vmor %vm2797, %vm2799
    %v2801 = vsel %vm2800, %v2780, %v2782
    %v2802 = vsel %vm2800, %v1198, %v1199
    %vm2803 = vcmp.gt.f32.partialorder %v2784, %v2786
    %vm2804 = vcmp.eq.f32.partialorder %v2784, %v2786
    %vm2805 = vmand %vm2804, %vm1450
    %vm2806 = vmor %vm2803, %vm2805
    %v2807 = vsel %vm2806, %v2784, %v2786
    %v2808 = vsel %vm2806, %v1200, %v1201
    %vm2809 = vcmp.gt.f32.partialorder %v2788, %v2790
    %vm2810 = vcmp.eq.f32.partialorder %v2788, %v2790
    %vm2811 = vmand %vm2810, %vm1553
    %vm2812 = vmor %vm2809, %vm2811
    %v2813 = vsel %vm2812, %v2788, %v2790
    %v2814 = vsel %vm2812, %v1202, %v1203
    %vm2815 = vcmp.gt.f32.partialorder %v2795, %v2801
    %vm2816 = vcmp.eq.f32.partialorder %v2795, %v2801
    %vm2817 = vcmp.lt.s32.totalorder %v2796, %v2802
    %vm2818 = vmand %vm2816, %vm2817
    %vm2819 = vmor %vm2815, %vm2818
    %v2820 = vsel %vm2819, %v2795, %v2801
    %v2821 = vsel %vm2819, %v2796, %v2802
    %vm2822 = vcmp.gt.f32.partialorder %v2807, %v2813
    %vm2823 = vcmp.eq.f32.partialorder %v2807, %v2813
    %vm2824 = vcmp.lt.s32.totalorder %v2808, %v2814
    %vm2825 = vmand %vm2823, %vm2824
    %vm2826 = vmor %vm2822, %vm2825
    %v2827 = vsel %vm2826, %v2807, %v2813
    %v2828 = vsel %vm2826, %v2808, %v2814
    %vm2829 = vcmp.gt.f32.partialorder %v2820, %v2827
    %vm2830 = vcmp.eq.f32.partialorder %v2820, %v2827
    %vm2831 = vcmp.lt.s32.totalorder %v2821, %v2828
    %vm2832 = vmand %vm2830, %vm2831
    %vm2833 = vmor %vm2829, %vm2832
    %v2834 = vsel %vm2833, %v2820, %v2827
    %v2835 = vsel %vm2833, %v2821, %v2828
    %v2836 = vrot.slane %v2834, 4
    %v2837 = vmax.f32 %v2834, %v2836
    %v2838 = vrot.slane %v2837, 2
    %v2839 = vmax.f32 %v2837, %v2838
    %v2840 = vrot.slane %v2839, 1
    %v2841 = vmax.f32 %v2839, %v2840
    %vm2842 = vcmp.eq.f32.partialorder %v2834, %v2841
    %v2843 = vsel %vm2842, %v2835, 64
    %v2844 = vrot.slane %v2843, 4
    %vm2845 = vcmp.lt.s32.totalorder %v2843, %v2844
    %v2846 = vsel %vm2845, %v2843, %v2844
    %v2847 = vrot.slane %v2846, 2
    %vm2848 = vcmp.lt.s32.totalorder %v2846, %v2847
    %v2849 = vsel %vm2848, %v2846, %v2847
    %v2850 = vrot.slane %v2849, 1
    %vm2851 = vcmp.lt.s32.totalorder %v2849, %v2850
    %v2852 = vsel %vm2851, %v2849, %v2850
    %vm2853 = vcmp.eq.s32.totalorder %v1196, 9
    %vm2854 = vcmp.eq.s32.totalorder %v1197, 9
    %v2855 = vsel %vm2853, %v2841, %v2771
    %v2856 = vsel %vm2854, %v2841, %v2772
    %v2857 = vsel %vm2853, %v2852, %v2773
    %v2858 = vsel %vm2854, %v2852, %v2774
    %v2859 = vlaneseq
    %v2860 = vshrl.u32 %v2859, 7
    %v2861 = vsub.s32 0, %v2860
    %v2862 = vrot.slane %v2855, %v2861
    %v2863 = vsub.f32 %v2855, %v2862
    %v2864 = vsub.f32 %v2856, %v2862
    %v2865 = vmul.f32 %v2863, 1.442695
    %v2866 = vpow.pop %v2865
    %v2867 = vmul.f32 %v2864, 1.442695
    %v2868 = vpow.pop %v2867
    %vm2869 = vcmask 1041408
    %v2870 = vsel %vm2869, %v2868, 0.0
    %v2871 = vadd.f32 %v2866, %v2870
    %v2872 = vrot.slane %v2871, 4
    %v2873 = vadd.f32 %v2871, %v2872
    %v2874 = vrot.slane %v2873, 2
    %v2875 = vadd.f32 %v2873, %v2874
    %v2876 = vrot.slane %v2875, 1
    %v2877 = vadd.f32 %v2875, %v2876
    %v2878 = vrcp.pop %v2877
    %v2879 = vmul.f32 %v2866, %v2878
    %v2880 = vmul.f32 %v2868, %v2878
    %2881 = vst [vmem:[#allocation5] sm:$0xff] %v2857
    %2882 = vst [vmem:[#allocation5 + $0x8] sm:$0x3] %v2858
    %2883 = vst [vmem:[#allocation6] sm:$0xff] %v2879
    %2884 = vst [vmem:[#allocation6 + $0x8] sm:$0x3] %v2880
    // Predicated region
    $region22: #{tpu_custom_call.1} parent=1 // pred_check
      _
    $region23: #{tpu_custom_call.1} parent=1 // pred_check_branch
      %2886 = sbr.rel (0) target = $region25
    $region24: #{tpu_custom_call.1} parent=1 // pred_region
      %s2888 = ssub.s32 256, 256
      %2889 = vsyncadd [#allocation4], %s2888
      %s2890 = sshll.u32 [#allocation5], 4
      %s2891 = int_to_ptr.vmem [resolvable:$true] %s2890
      %2896 = dma.vmem_to_hbm [thread:$0]  %s2891, 256, %s4, [#allocation4], 128, 128, 8
    $region25: #{tpu_custom_call.1} parent=1 // pred_fallthru
      _
    // Predicated region
    $region26: #{tpu_custom_call.1} parent=1 // pred_check
      _
    $region27: #{tpu_custom_call.1} parent=1 // pred_check_branch
      %2898 = sbr.rel (0) target = $region29
    $region28: #{tpu_custom_call.1} parent=1 // pred_region
      %s2900 = ssub.s32 256, 256
      %2901 = vsyncadd [#allocation7], %s2900
      %s2902 = sshll.u32 [#allocation6], 4
      %s2903 = int_to_ptr.vmem [resolvable:$true] %s2902
      %2908 = dma.vmem_to_hbm [thread:$0]  %s2903, 256, %s5, [#allocation7], 128, 128, 8
    $region29: #{tpu_custom_call.1} parent=1 // pred_fallthru
      _
    // Predicated region
    $region30: #{tpu_custom_call.1} parent=1 // pred_check
      _
    $region31: #{tpu_custom_call.1} parent=1 // pred_check_branch
      %2910 = sbr.rel (0) target = $region33
    $region32: #{tpu_custom_call.1} parent=1 // pred_region
      %2911 = dma.done [#allocation4], 256
    $region33: #{tpu_custom_call.1} parent=1 // pred_fallthru
      _
    // Predicated region
    $region34: #{tpu_custom_call.1} parent=1 // pred_check
      _
    $region35: #{tpu_custom_call.1} parent=1 // pred_check_branch
      %2913 = sbr.rel (0) target = $region37
    $region36: #{tpu_custom_call.1} parent=1 // pred_region
      %2914 = dma.done [#allocation7], 256
    $region37: #{tpu_custom_call.1} parent=1 // pred_fallthru
      _
    %2915 = vsyncpa [#allocation3], 1
    %2916 = vsyncpa [#allocation4], 1
    %2917 = vsyncpa [#allocation7], 1

</llo_original>
